<compile_context>
chip_gen: v7x
topology: tpu7x:2x2x1
jax: 0.10.0
libtpu: 0.0.40
codegen_flags: <defaults>
</compile_context>

<pallas_src>
import jax
import jax.numpy as jnp
import numpy as np
from jax import lax
from jax.experimental import pallas as pl
from jax.experimental.pallas import tpu as pltpu

BATCH = 16
IN_CH = 1
LENGTH = 128      # must be divisible by 64 (3x MaxPool(2), then AdaptiveAvgPool1d(8))
CLASSES = 4
BN_EPS = 1e-5
B_TILE = 8        # samples processed per grid step (lane-concatenated)


# ---------------------------------------------------------------------------
# Pallas kernel: one B_TILE-sample slab per grid step
# ---------------------------------------------------------------------------
def _cnn_kernel(x_ref, m_l_ref, m_r1_ref, m_r2_ref, m_r4_ref,
                w1_ref, b1_ref, w2_ref, b2_ref, w3_ref, b3_ref,
                sflat_ref, fw1_ref, fb1_ref, fw2_ref, fb2_ref,
                out_ref, pall_ref):
    m_l = m_l_ref[...]                                  # (1, W): 0 at p % L == 0

    def _roll(v, shift):
        # jnp.roll semantics; normalize to a non-negative static shift.
        return pltpu.roll(v, shift % v.shape[1], axis=1)

    def conv_bn_relu(h, stride, w_ref, b_ref, m_r):
        # taps: h[p-stride] (zero at sample start), h[p], h[p+stride] (zero at sample end)
        t_lo = _roll(h, stride) * m_l
        t_hi = _roll(h, -stride) * m_r
        w = w_ref[...]                                  # (3, Cout, Cin), BN scale folded in
        if h.shape[0] == 1:                             # Cin == 1: rank-1 update on the VPU
            acc = w[0] * t_lo + w[1] * h + w[2] * t_hi
        else:
            acc = (jnp.dot(w[0], t_lo, preferred_element_type=jnp.float32)
                   + jnp.dot(w[1], h, preferred_element_type=jnp.float32)
                   + jnp.dot(w[2], t_hi, preferred_element_type=jnp.float32))
        return jnp.maximum(acc + b_ref[...], 0.0)       # conv bias + BN shift folded, ReLU

    x = x_ref[...]                                      # (IN_CH, W),  W = B_TILE * L
    h = conv_bn_relu(x, 1, w1_ref, b1_ref, m_r1_ref[...])   # (16, W)
    h = jnp.maximum(h, _roll(h, -1))                    # MaxPool(2): valid data at stride 2
    # (no lane compaction here -- see layout notes at the top of the file)
    h = conv_bn_relu(h, 2, w2_ref, b2_ref, m_r2_ref[...])   # (16, W)
    h = jnp.maximum(h, _roll(h, -2))                    # valid at stride 4
    h = conv_bn_relu(h, 4, w3_ref, b3_ref, m_r4_ref[...])   # (32, W)
    h = jnp.maximum(h, _roll(h, -4))                    # valid at stride 8

    # AdaptiveAvgPool1d(8) + per-sample flatten: one selection matmul.
    # pall[c, j*bt + b] = mean of bin j of sample b (channel c).  sflat is stored bf16
    # (values {0, 0.5} are exact); upcast so the dot matches the f32 activation path.
    pall_ref[...] = jnp.dot(h, sflat_ref[...].astype(jnp.float32),
                            preferred_element_type=jnp.float32)      # (32, 8*bt)

    bt = out_ref.shape[2]
    # Linear(256, 64): fw1[j][o, c] = W1[o, c*8 + j].  Bin block j of the pooled tile is a
    # static lane slice of the VMEM scratch -- no cmask multiplies, no tsum collapse matmul.
    fw1 = fw1_ref[...].astype(jnp.float32)              # (8, 64, 32), stored bf16
    y1 = jnp.zeros((fw1.shape[1], bt), jnp.float32)
    for j in range(8):
        y1 = y1 + jnp.dot(fw1[j], pall_ref[:, j * bt:(j + 1) * bt],
                          preferred_element_type=jnp.float32)         # (64, bt)
    y1 = jnp.maximum(y1 + fb1_ref[...], 0.0)            # (64, bt)
    # TODO(synk): Dropout(p=0.5) is identity in eval mode; training-mode masking omitted.
    y2 = jnp.dot(fw2_ref[...], y1, preferred_element_type=jnp.float32) + fb2_ref[...]
    out_ref[...] = y2[None, :, :]                       # (1, CLASSES, bt) full-block store


# ---------------------------------------------------------------------------
# host-side constants (boundary masks, pooling/flatten selection matrix)
# ---------------------------------------------------------------------------
def _build_constants(bt, length):
    w_lanes = bt * length
    p = np.arange(w_lanes)
    # Masks zero exactly the tap offsets that wrap across a sample boundary for the
    # stride schedule (1, 2, 4) used below; valid only while L=128 and 3x MaxPool(2).
    m_l = (p % length != 0).astype(np.float32)[None, :]
    m_r1 = (p % length != length - 1).astype(np.float32)[None, :]
    m_r2 = (p % length != length - 2).astype(np.float32)[None, :]
    m_r4 = (p % length != length - 4).astype(np.float32)[None, :]

    stride = 8                       # valid-data stride after the 3 maxpools
    n_valid = length // stride
    per_bin = n_valid // 8           # AdaptiveAvgPool1d(8) bin size (length % 64 == 0)
    ncol = 8 * bt
    sflat = np.zeros((w_lanes, ncol), np.float32)
    for b in range(bt):
        for j in range(8):
            for i in range(per_bin):
                sflat[b * length + stride * (j * per_bin + i), j * bt + b] = 1.0 / per_bin

    return (jnp.asarray(m_l), jnp.asarray(m_r1), jnp.asarray(m_r2), jnp.asarray(m_r4),
            jnp.asarray(sflat, dtype=jnp.bfloat16))     # MXU-only constant -> bf16 DMA


def _prepare_params(p):
    def conv_fold(w, cb, scale, shift):
        w_eff = (w * scale[:, None, None]).transpose(2, 0, 1)   # (3, Cout, Cin)
        b_eff = (scale * cb + shift)[:, None]                   # (Cout, 1)
        return w_eff.astype(jnp.float32), b_eff.astype(jnp.float32)

    w1, b1 = conv_fold(p["w1"], p["cb1"], p["s1"], p["t1"])
    w2, b2 = conv_fold(p["w2"], p["cb2"], p["s2"], p["t2"])
    w3, b3 = conv_fold(p["w3"], p["cb3"], p["s3"], p["t3"])
    # fw1s[j][o, c] = W1[o, c*8 + j]; large & MXU-only -> stored bf16.
    fw1s = p["fw1"].reshape(64, 32, 8).transpose(2, 0, 1).astype(jnp.bfloat16)
    return (w1, b1, w2, b2, w3, b3, fw1s,
            p["fb1"][:, None].astype(jnp.float32),
            p["fw2"].astype(jnp.float32),
            p["fb2"][:, None].astype(jnp.float32))


# ---------------------------------------------------------------------------
# wrapper
# ---------------------------------------------------------------------------
def cnn_forward(x, p, b_tile=B_TILE):
    bsz, cin, length = x.shape
    assert cin == IN_CH
    assert length % 64 == 0, "3x MaxPool(2) + AdaptiveAvgPool1d(8) assumes length % 64 == 0"
    b_tile = min(b_tile, bsz)
    assert bsz % b_tile == 0
    n_steps = bsz // b_tile
    w_lanes = b_tile * length

    # channels on sublanes, samples lane-concatenated
    x_lanes = jnp.transpose(x, (1, 0, 2)).reshape(cin, bsz * length)

    m_l, m_r1, m_r2, m_r4, sflat = _build_constants(b_tile, length)
    (w1, b1, w2, b2, w3, b3, fw1s, fb1, fw2, fb2) = _prepare_params(p)

    consts = [m_l, m_r1, m_r2, m_r4,
              w1, b1, w2, b2, w3, b3,
              sflat, fw1s, fb1, fw2, fb2]

    def const_spec(arr):
        zeros = (0,) * arr.ndim
        return pl.BlockSpec(tuple(arr.shape), lambda i, z=zeros: z)

    in_specs = ([pl.BlockSpec((cin, w_lanes), lambda i: (0, i))]
                + [const_spec(a) for a in consts])

    grid_spec = pltpu.PrefetchScalarGridSpec(
        num_scalar_prefetch=0,
        grid=(n_steps,),
        in_specs=in_specs,
        out_specs=pl.BlockSpec((1, CLASSES, b_tile), lambda i: (i, 0, 0)),
        scratch_shapes=[pltpu.VMEM((32, 8 * b_tile), jnp.float32)],   # pooled-feature tile
    )

    out = pl.pallas_call(
        _cnn_kernel,
        out_shape=jax.ShapeDtypeStruct((n_steps, CLASSES, b_tile), jnp.float32),
        grid_spec=grid_spec,
        compiler_params=pltpu.CompilerParams(
            dimension_semantics=("parallel",)),   # per-step output blocks -> megacore-safe
    )(x_lanes, *consts)
    return out.transpose(0, 2, 1).reshape(bsz, CLASSES)


# ---------------------------------------------------------------------------
# deterministic parameter init (shapes from the PyTorch module __init__)
# ---------------------------------------------------------------------------
def init_params(key):
    ks = jax.random.split(key, 22)

    def conv_w(k, cout, cin):
        return jax.random.normal(k, (cout, cin, 3), jnp.float32) / np.sqrt(cin * 3)

    def bn_fold(k1, k2, k3, k4, c):
        gamma = 1.0 + 0.1 * jax.random.normal(k1, (c,), jnp.float32)
        beta = 0.1 * jax.random.normal(k2, (c,), jnp.float32)
        mean = 0.1 * jax.random.normal(k3, (c,), jnp.float32)
        var = jax.random.uniform(k4, (c,), jnp.float32, 0.5, 1.5)
        scale = gamma / jnp.sqrt(var + BN_EPS)
        shift = beta - mean * scale
        return scale, shift

    p = {}
    p["w1"] = conv_w(ks[0], 16, 1)
    p["cb1"] = 0.1 * jax.random.normal(ks[1], (16,), jnp.float32)
    p["s1"], p["t1"] = bn_fold(ks[2], ks[3], ks[4], ks[5], 16)
    p["w2"] = conv_w(ks[6], 16, 16)
    p["cb2"] = 0.1 * jax.random.normal(ks[7], (16,), jnp.float32)
    p["s2"], p["t2"] = bn_fold(ks[8], ks[9], ks[10], ks[11], 16)
    p["w3"] = conv_w(ks[12], 32, 16)
    p["cb3"] = 0.1 * jax.random.normal(ks[13], (32,), jnp.float32)
    p["s3"], p["t3"] = bn_fold(ks[14], ks[15], ks[16], ks[17], 32)
    p["fw1"] = jax.random.normal(ks[18], (64, 32 * 8), jnp.float32) / np.sqrt(32 * 8)
    p["fb1"] = 0.1 * jax.random.normal(ks[19], (64,), jnp.float32)
    p["fw2"] = jax.random.normal(ks[20], (CLASSES, 64), jnp.float32) / np.sqrt(64)
    p["fb2"] = 0.1 * jax.random.normal(ks[21], (CLASSES,), jnp.float32)
    return p


# ---------------------------------------------------------------------------
# plain-JAX reference (matches PyTorch eval-mode forward), full f32 precision
# ---------------------------------------------------------------------------
def reference_forward(x, p):
    h = x
    for wn, bnm, sn, tn in (("w1", "cb1", "s1", "t1"),
                            ("w2", "cb2", "s2", "t2"),
                            ("w3", "cb3", "s3", "t3")):
        h = lax.conv_general_dilated(h, p[wn], window_strides=(1,), padding=[(1, 1)],
                                     dimension_numbers=("NCH", "OIH", "NCH"),
                                     precision=lax.Precision.HIGHEST)
        h = h + p[bnm][None, :, None]
        h = h * p[sn][None, :, None] + p[tn][None, :, None]
        h = jnp.maximum(h, 0.0)
        b_, c_, l_ = h.shape
        h = h.reshape(b_, c_, l_ // 2, 2).max(axis=-1)
    b_, c_, l_ = h.shape
    h = h.reshape(b_, c_, 8, l_ // 8).mean(axis=-1)
    flat = h.reshape(b_, -1)
    y = jnp.maximum(jnp.dot(flat, p["fw1"].T, precision=lax.Precision.HIGHEST) + p["fb1"], 0.0)
    return jnp.dot(y, p["fw2"].T, precision=lax.Precision.HIGHEST) + p["fb2"]


if __name__ == "__main__":
    key = jax.random.PRNGKey(0)
    kx, kp = jax.random.split(key)
    x = jax.random.normal(kx, (BATCH, IN_CH, LENGTH), jnp.float32)
    params = init_params(kp)

    out = cnn_forward(x, params)
    out = jax.block_until_ready(out)

    ref = reference_forward(x, params)
    assert out.shape == (BATCH, CLASSES)
    # Kernel matmuls run at default TPU MXU precision (bf16 operands, f32 accumulate) and
    # fw1 is stored in bf16; the reference uses HIGHEST, so allow a few e-3 of drift.
    np.testing.assert_allclose(np.asarray(out), np.asarray(ref), rtol=2e-2, atol=2e-2)
    print("KERNEL_OK")
</pallas_src>

<mosaic_0001>
module attributes {stable_mosaic.version = 11 : i64} {
  func.func @_cnn_kernel(%arg0: i32, %arg1: memref<1x1024xf32, #tpu.memory_space<vmem>>, %arg2: memref<1x1024xf32, #tpu.memory_space<vmem>>, %arg3: memref<1x1024xf32, #tpu.memory_space<vmem>>, %arg4: memref<1x1024xf32, #tpu.memory_space<vmem>>, %arg5: memref<1x1024xf32, #tpu.memory_space<vmem>>, %arg6: memref<3x16x1xf32, #tpu.memory_space<vmem>>, %arg7: memref<16x1xf32, #tpu.memory_space<vmem>>, %arg8: memref<3x16x16xf32, #tpu.memory_space<vmem>>, %arg9: memref<16x1xf32, #tpu.memory_space<vmem>>, %arg10: memref<3x32x16xf32, #tpu.memory_space<vmem>>, %arg11: memref<32x1xf32, #tpu.memory_space<vmem>>, %arg12: memref<1024x64xbf16, #tpu.memory_space<vmem>>, %arg13: memref<8x64x32xbf16, #tpu.memory_space<vmem>>, %arg14: memref<64x1xf32, #tpu.memory_space<vmem>>, %arg15: memref<4x64xf32, #tpu.memory_space<vmem>>, %arg16: memref<4x1xf32, #tpu.memory_space<vmem>>, %arg17: memref<1x4x8xf32, #tpu.memory_space<vmem>>, %arg18: memref<32x64xf32, #tpu.memory_space<vmem>>) attributes {dimension_semantics = [#tpu.dimension_semantics<parallel>], iteration_bounds = array<i64: 2>, scalar_prefetch = 0 : i64, scratch_operands = 1 : i64, tpu.core_type = #tpu.core_type<tc>, window_params = [{transform_indices = @transform_0, window_bounds = array<i64: 1, 1024>}, {pipeline_mode = #tpu.pipeline_mode<synchronous>, transform_indices = @transform_1, window_bounds = array<i64: 1, 1024>}, {pipeline_mode = #tpu.pipeline_mode<synchronous>, transform_indices = @transform_2, window_bounds = array<i64: 1, 1024>}, {pipeline_mode = #tpu.pipeline_mode<synchronous>, transform_indices = @transform_3, window_bounds = array<i64: 1, 1024>}, {pipeline_mode = #tpu.pipeline_mode<synchronous>, transform_indices = @transform_4, window_bounds = array<i64: 1, 1024>}, {pipeline_mode = #tpu.pipeline_mode<synchronous>, transform_indices = @transform_5, window_bounds = array<i64: 3, 16, 1>}, {pipeline_mode = #tpu.pipeline_mode<synchronous>, transform_indices = @transform_6, window_bounds = array<i64: 16, 1>}, {pipeline_mode = #tpu.pipeline_mode<synchronous>, transform_indices = @transform_7, window_bounds = array<i64: 3, 16, 16>}, {pipeline_mode = #tpu.pipeline_mode<synchronous>, transform_indices = @transform_8, window_bounds = array<i64: 16, 1>}, {pipeline_mode = #tpu.pipeline_mode<synchronous>, transform_indices = @transform_9, window_bounds = array<i64: 3, 32, 16>}, {pipeline_mode = #tpu.pipeline_mode<synchronous>, transform_indices = @transform_10, window_bounds = array<i64: 32, 1>}, {pipeline_mode = #tpu.pipeline_mode<synchronous>, transform_indices = @transform_11, window_bounds = array<i64: 1024, 64>}, {pipeline_mode = #tpu.pipeline_mode<synchronous>, transform_indices = @transform_12, window_bounds = array<i64: 8, 64, 32>}, {pipeline_mode = #tpu.pipeline_mode<synchronous>, transform_indices = @transform_13, window_bounds = array<i64: 64, 1>}, {pipeline_mode = #tpu.pipeline_mode<synchronous>, transform_indices = @transform_14, window_bounds = array<i64: 4, 64>}, {pipeline_mode = #tpu.pipeline_mode<synchronous>, transform_indices = @transform_15, window_bounds = array<i64: 4, 1>}, {transform_indices = @transform_16, window_bounds = array<i64: 1, 4, 8>}]} {
    %c0 = arith.constant 0 : index
    %c0_0 = arith.constant 0 : index
    %0 = vector.load %arg2[%c0, %c0_0] : memref<1x1024xf32, #tpu.memory_space<vmem>>, vector<1x1024xf32>
    %c0_1 = arith.constant 0 : index
    %c0_2 = arith.constant 0 : index
    %1 = vector.load %arg1[%c0_1, %c0_2] : memref<1x1024xf32, #tpu.memory_space<vmem>>, vector<1x1024xf32>
    %c0_3 = arith.constant 0 : index
    %c0_4 = arith.constant 0 : index
    %2 = vector.load %arg3[%c0_3, %c0_4] : memref<1x1024xf32, #tpu.memory_space<vmem>>, vector<1x1024xf32>
    %c1_i32 = arith.constant 1 : i32
    %3 = tpu.dynamic_rotate %1 by %c1_i32 dim 1 : vector<1x1024xf32>, i32 -> vector<1x1024xf32>
    %4 = arith.mulf %3, %0 : vector<1x1024xf32>
    %c1023_i32 = arith.constant 1023 : i32
    %5 = tpu.dynamic_rotate %1 by %c1023_i32 dim 1 : vector<1x1024xf32>, i32 -> vector<1x1024xf32>
    %6 = arith.mulf %5, %2 : vector<1x1024xf32>
    %c0_5 = arith.constant 0 : index
    %c0_6 = arith.constant 0 : index
    %c0_7 = arith.constant 0 : index
    %7 = vector.load %arg6[%c0_5, %c0_6, %c0_7] : memref<3x16x1xf32, #tpu.memory_space<vmem>>, vector<3x16x1xf32>
    %8 = vector.extract_strided_slice %7 {offsets = [0, 0, 0], sizes = [1, 16, 1], strides = [1, 1, 1]} : vector<3x16x1xf32> to vector<1x16x1xf32>
    %9 = vector.shape_cast %8 : vector<1x16x1xf32> to vector<16x1xf32>
    %10 = vector.broadcast %9 : vector<16x1xf32> to vector<16x1024xf32>
    %11 = vector.broadcast %4 : vector<1x1024xf32> to vector<16x1024xf32>
    %12 = arith.mulf %10, %11 : vector<16x1024xf32>
    %13 = vector.extract_strided_slice %7 {offsets = [1, 0, 0], sizes = [1, 16, 1], strides = [1, 1, 1]} : vector<3x16x1xf32> to vector<1x16x1xf32>
    %14 = vector.shape_cast %13 : vector<1x16x1xf32> to vector<16x1xf32>
    %15 = vector.broadcast %14 : vector<16x1xf32> to vector<16x1024xf32>
    %16 = vector.broadcast %1 : vector<1x1024xf32> to vector<16x1024xf32>
    %17 = arith.mulf %15, %16 : vector<16x1024xf32>
    %18 = arith.addf %12, %17 : vector<16x1024xf32>
    %19 = vector.extract_strided_slice %7 {offsets = [2, 0, 0], sizes = [1, 16, 1], strides = [1, 1, 1]} : vector<3x16x1xf32> to vector<1x16x1xf32>
    %20 = vector.shape_cast %19 : vector<1x16x1xf32> to vector<16x1xf32>
    %21 = vector.broadcast %20 : vector<16x1xf32> to vector<16x1024xf32>
    %22 = vector.broadcast %6 : vector<1x1024xf32> to vector<16x1024xf32>
    %23 = arith.mulf %21, %22 : vector<16x1024xf32>
    %24 = arith.addf %18, %23 : vector<16x1024xf32>
    %c0_8 = arith.constant 0 : index
    %c0_9 = arith.constant 0 : index
    %25 = vector.load %arg7[%c0_8, %c0_9] : memref<16x1xf32, #tpu.memory_space<vmem>>, vector<16x1xf32>
    %26 = vector.broadcast %25 : vector<16x1xf32> to vector<16x1024xf32>
    %27 = arith.addf %24, %26 : vector<16x1024xf32>
    %cst = arith.constant 0.000000e+00 : f32
    %28 = vector.broadcast %cst : f32 to vector<16x1024xf32>
    %29 = arith.maximumf %27, %28 : vector<16x1024xf32>
    %c1023_i32_10 = arith.constant 1023 : i32
    %30 = tpu.dynamic_rotate %29 by %c1023_i32_10 dim 1 : vector<16x1024xf32>, i32 -> vector<16x1024xf32>
    %31 = arith.maximumf %29, %30 : vector<16x1024xf32>
    %c0_11 = arith.constant 0 : index
    %c0_12 = arith.constant 0 : index
    %32 = vector.load %arg4[%c0_11, %c0_12] : memref<1x1024xf32, #tpu.memory_space<vmem>>, vector<1x1024xf32>
    %c2_i32 = arith.constant 2 : i32
    %33 = tpu.dynamic_rotate %31 by %c2_i32 dim 1 : vector<16x1024xf32>, i32 -> vector<16x1024xf32>
    %34 = vector.broadcast %0 : vector<1x1024xf32> to vector<16x1024xf32>
    %35 = arith.mulf %33, %34 : vector<16x1024xf32>
    %c1022_i32 = arith.constant 1022 : i32
    %36 = tpu.dynamic_rotate %31 by %c1022_i32 dim 1 : vector<16x1024xf32>, i32 -> vector<16x1024xf32>
    %37 = vector.broadcast %32 : vector<1x1024xf32> to vector<16x1024xf32>
    %38 = arith.mulf %36, %37 : vector<16x1024xf32>
    %c0_13 = arith.constant 0 : index
    %c0_14 = arith.constant 0 : index
    %c0_15 = arith.constant 0 : index
    %39 = vector.load %arg8[%c0_13, %c0_14, %c0_15] : memref<3x16x16xf32, #tpu.memory_space<vmem>>, vector<3x16x16xf32>
    %40 = vector.extract_strided_slice %39 {offsets = [0, 0, 0], sizes = [1, 16, 16], strides = [1, 1, 1]} : vector<3x16x16xf32> to vector<1x16x16xf32>
    %41 = vector.shape_cast %40 : vector<1x16x16xf32> to vector<16x16xf32>
    %cst_16 = arith.constant dense<0.000000e+00> : vector<16x1024xf32>
    %42 = tpu.matmul %41, %35, %cst_16 {dimension_numbers = #tpu.dot_dimension_numbers<[1], [0], [0], [1], [0, 0, 1, 1], [], []>} : vector<16x16xf32>, vector<16x1024xf32>, vector<16x1024xf32> -> vector<16x1024xf32>
    %43 = vector.extract_strided_slice %39 {offsets = [1, 0, 0], sizes = [1, 16, 16], strides = [1, 1, 1]} : vector<3x16x16xf32> to vector<1x16x16xf32>
    %44 = vector.shape_cast %43 : vector<1x16x16xf32> to vector<16x16xf32>
    %cst_17 = arith.constant dense<0.000000e+00> : vector<16x1024xf32>
    %45 = tpu.matmul %44, %31, %cst_17 {dimension_numbers = #tpu.dot_dimension_numbers<[1], [0], [0], [1], [0, 0, 1, 1], [], []>} : vector<16x16xf32>, vector<16x1024xf32>, vector<16x1024xf32> -> vector<16x1024xf32>
    %46 = arith.addf %42, %45 : vector<16x1024xf32>
    %47 = vector.extract_strided_slice %39 {offsets = [2, 0, 0], sizes = [1, 16, 16], strides = [1, 1, 1]} : vector<3x16x16xf32> to vector<1x16x16xf32>
    %48 = vector.shape_cast %47 : vector<1x16x16xf32> to vector<16x16xf32>
    %cst_18 = arith.constant dense<0.000000e+00> : vector<16x1024xf32>
    %49 = tpu.matmul %48, %38, %cst_18 {dimension_numbers = #tpu.dot_dimension_numbers<[1], [0], [0], [1], [0, 0, 1, 1], [], []>} : vector<16x16xf32>, vector<16x1024xf32>, vector<16x1024xf32> -> vector<16x1024xf32>
    %50 = arith.addf %46, %49 : vector<16x1024xf32>
    %c0_19 = arith.constant 0 : index
    %c0_20 = arith.constant 0 : index
    %51 = vector.load %arg9[%c0_19, %c0_20] : memref<16x1xf32, #tpu.memory_space<vmem>>, vector<16x1xf32>
    %52 = vector.broadcast %51 : vector<16x1xf32> to vector<16x1024xf32>
    %53 = arith.addf %50, %52 : vector<16x1024xf32>
    %cst_21 = arith.constant 0.000000e+00 : f32
    %54 = vector.broadcast %cst_21 : f32 to vector<16x1024xf32>
    %55 = arith.maximumf %53, %54 : vector<16x1024xf32>
    %c1022_i32_22 = arith.constant 1022 : i32
    %56 = tpu.dynamic_rotate %55 by %c1022_i32_22 dim 1 : vector<16x1024xf32>, i32 -> vector<16x1024xf32>
    %57 = arith.maximumf %55, %56 : vector<16x1024xf32>
    %c0_23 = arith.constant 0 : index
    %c0_24 = arith.constant 0 : index
    %58 = vector.load %arg5[%c0_23, %c0_24] : memref<1x1024xf32, #tpu.memory_space<vmem>>, vector<1x1024xf32>
    %c4_i32 = arith.constant 4 : i32
    %59 = tpu.dynamic_rotate %57 by %c4_i32 dim 1 : vector<16x1024xf32>, i32 -> vector<16x1024xf32>
    %60 = vector.broadcast %0 : vector<1x1024xf32> to vector<16x1024xf32>
    %61 = arith.mulf %59, %60 : vector<16x1024xf32>
    %c1020_i32 = arith.constant 1020 : i32
    %62 = tpu.dynamic_rotate %57 by %c1020_i32 dim 1 : vector<16x1024xf32>, i32 -> vector<16x1024xf32>
    %63 = vector.broadcast %58 : vector<1x1024xf32> to vector<16x1024xf32>
    %64 = arith.mulf %62, %63 : vector<16x1024xf32>
    %c0_25 = arith.constant 0 : index
    %c0_26 = arith.constant 0 : index
    %c0_27 = arith.constant 0 : index
    %65 = vector.load %arg10[%c0_25, %c0_26, %c0_27] : memref<3x32x16xf32, #tpu.memory_space<vmem>>, vector<3x32x16xf32>
    %66 = vector.extract_strided_slice %65 {offsets = [0, 0, 0], sizes = [1, 32, 16], strides = [1, 1, 1]} : vector<3x32x16xf32> to vector<1x32x16xf32>
    %67 = vector.shape_cast %66 : vector<1x32x16xf32> to vector<32x16xf32>
    %cst_28 = arith.constant dense<0.000000e+00> : vector<32x1024xf32>
    %68 = tpu.matmul %67, %61, %cst_28 {dimension_numbers = #tpu.dot_dimension_numbers<[1], [0], [0], [1], [0, 0, 1, 1], [], []>} : vector<32x16xf32>, vector<16x1024xf32>, vector<32x1024xf32> -> vector<32x1024xf32>
    %69 = vector.extract_strided_slice %65 {offsets = [1, 0, 0], sizes = [1, 32, 16], strides = [1, 1, 1]} : vector<3x32x16xf32> to vector<1x32x16xf32>
    %70 = vector.shape_cast %69 : vector<1x32x16xf32> to vector<32x16xf32>
    %cst_29 = arith.constant dense<0.000000e+00> : vector<32x1024xf32>
    %71 = tpu.matmul %70, %57, %cst_29 {dimension_numbers = #tpu.dot_dimension_numbers<[1], [0], [0], [1], [0, 0, 1, 1], [], []>} : vector<32x16xf32>, vector<16x1024xf32>, vector<32x1024xf32> -> vector<32x1024xf32>
    %72 = arith.addf %68, %71 : vector<32x1024xf32>
    %73 = vector.extract_strided_slice %65 {offsets = [2, 0, 0], sizes = [1, 32, 16], strides = [1, 1, 1]} : vector<3x32x16xf32> to vector<1x32x16xf32>
    %74 = vector.shape_cast %73 : vector<1x32x16xf32> to vector<32x16xf32>
    %cst_30 = arith.constant dense<0.000000e+00> : vector<32x1024xf32>
    %75 = tpu.matmul %74, %64, %cst_30 {dimension_numbers = #tpu.dot_dimension_numbers<[1], [0], [0], [1], [0, 0, 1, 1], [], []>} : vector<32x16xf32>, vector<16x1024xf32>, vector<32x1024xf32> -> vector<32x1024xf32>
    %76 = arith.addf %72, %75 : vector<32x1024xf32>
    %c0_31 = arith.constant 0 : index
    %c0_32 = arith.constant 0 : index
    %77 = vector.load %arg11[%c0_31, %c0_32] : memref<32x1xf32, #tpu.memory_space<vmem>>, vector<32x1xf32>
    %78 = vector.broadcast %77 : vector<32x1xf32> to vector<32x1024xf32>
    %79 = arith.addf %76, %78 : vector<32x1024xf32>
    %cst_33 = arith.constant 0.000000e+00 : f32
    %80 = vector.broadcast %cst_33 : f32 to vector<32x1024xf32>
    %81 = arith.maximumf %79, %80 : vector<32x1024xf32>
    %c1020_i32_34 = arith.constant 1020 : i32
    %82 = tpu.dynamic_rotate %81 by %c1020_i32_34 dim 1 : vector<32x1024xf32>, i32 -> vector<32x1024xf32>
    %83 = arith.maximumf %81, %82 : vector<32x1024xf32>
    %c0_35 = arith.constant 0 : index
    %c0_36 = arith.constant 0 : index
    %84 = vector.load %arg12[%c0_35, %c0_36] : memref<1024x64xbf16, #tpu.memory_space<vmem>>, vector<1024x64xbf16>
    %85 = arith.extf %84 : vector<1024x64xbf16> to vector<1024x64xf32>
    %cst_37 = arith.constant dense<0.000000e+00> : vector<32x64xf32>
    %86 = tpu.matmul %83, %85, %cst_37 {dimension_numbers = #tpu.dot_dimension_numbers<[1], [0], [0], [1], [0, 0, 1, 1], [], []>} : vector<32x1024xf32>, vector<1024x64xf32>, vector<32x64xf32> -> vector<32x64xf32>
    %c0_38 = arith.constant 0 : index
    %c0_39 = arith.constant 0 : index
    %87 = vector.load %arg18[%c0_38, %c0_39] : memref<32x64xf32, #tpu.memory_space<vmem>>, vector<32x64xf32>
    tpu.vector_store %arg18[%c0_38, %c0_39], %86 {strides = array<i32>} : memref<32x64xf32, #tpu.memory_space<vmem>>, vector<32x64xf32>,
    %c0_40 = arith.constant 0 : index
    %c0_41 = arith.constant 0 : index
    %c0_42 = arith.constant 0 : index
    %88 = vector.load %arg13[%c0_40, %c0_41, %c0_42] : memref<8x64x32xbf16, #tpu.memory_space<vmem>>, vector<8x64x32xbf16>
    %89 = arith.extf %88 : vector<8x64x32xbf16> to vector<8x64x32xf32>
    %cst_43 = arith.constant 0.000000e+00 : f32
    %90 = vector.broadcast %cst_43 : f32 to vector<64x8xf32>
    %91 = vector.extract_strided_slice %89 {offsets = [0, 0, 0], sizes = [1, 64, 32], strides = [1, 1, 1]} : vector<8x64x32xf32> to vector<1x64x32xf32>
    %92 = vector.shape_cast %91 : vector<1x64x32xf32> to vector<64x32xf32>
    %c0_44 = arith.constant 0 : index
    %c0_45 = arith.constant 0 : index
    %93 = vector.load %arg18[%c0_44, %c0_45] : memref<32x64xf32, #tpu.memory_space<vmem>>, vector<32x8xf32>
    %cst_46 = arith.constant dense<0.000000e+00> : vector<64x8xf32>
    %94 = tpu.matmul %92, %93, %cst_46 {dimension_numbers = #tpu.dot_dimension_numbers<[1], [0], [0], [1], [0, 0, 1, 1], [], []>} : vector<64x32xf32>, vector<32x8xf32>, vector<64x8xf32> -> vector<64x8xf32>
    %95 = arith.addf %90, %94 : vector<64x8xf32>
    %96 = vector.extract_strided_slice %89 {offsets = [1, 0, 0], sizes = [1, 64, 32], strides = [1, 1, 1]} : vector<8x64x32xf32> to vector<1x64x32xf32>
    %97 = vector.shape_cast %96 : vector<1x64x32xf32> to vector<64x32xf32>
    %c0_47 = arith.constant 0 : index
    %c8 = arith.constant 8 : index
    %98 = vector.load %arg18[%c0_47, %c8] : memref<32x64xf32, #tpu.memory_space<vmem>>, vector<32x8xf32>
    %cst_48 = arith.constant dense<0.000000e+00> : vector<64x8xf32>
    %99 = tpu.matmul %97, %98, %cst_48 {dimension_numbers = #tpu.dot_dimension_numbers<[1], [0], [0], [1], [0, 0, 1, 1], [], []>} : vector<64x32xf32>, vector<32x8xf32>, vector<64x8xf32> -> vector<64x8xf32>
    %100 = arith.addf %95, %99 : vector<64x8xf32>
    %101 = vector.extract_strided_slice %89 {offsets = [2, 0, 0], sizes = [1, 64, 32], strides = [1, 1, 1]} : vector<8x64x32xf32> to vector<1x64x32xf32>
    %102 = vector.shape_cast %101 : vector<1x64x32xf32> to vector<64x32xf32>
    %c0_49 = arith.constant 0 : index
    %c16 = arith.constant 16 : index
    %103 = vector.load %arg18[%c0_49, %c16] : memref<32x64xf32, #tpu.memory_space<vmem>>, vector<32x8xf32>
    %cst_50 = arith.constant dense<0.000000e+00> : vector<64x8xf32>
    %104 = tpu.matmul %102, %103, %cst_50 {dimension_numbers = #tpu.dot_dimension_numbers<[1], [0], [0], [1], [0, 0, 1, 1], [], []>} : vector<64x32xf32>, vector<32x8xf32>, vector<64x8xf32> -> vector<64x8xf32>
    %105 = arith.addf %100, %104 : vector<64x8xf32>
    %106 = vector.extract_strided_slice %89 {offsets = [3, 0, 0], sizes = [1, 64, 32], strides = [1, 1, 1]} : vector<8x64x32xf32> to vector<1x64x32xf32>
    %107 = vector.shape_cast %106 : vector<1x64x32xf32> to vector<64x32xf32>
    %c0_51 = arith.constant 0 : index
    %c24 = arith.constant 24 : index
    %108 = vector.load %arg18[%c0_51, %c24] : memref<32x64xf32, #tpu.memory_space<vmem>>, vector<32x8xf32>
    %cst_52 = arith.constant dense<0.000000e+00> : vector<64x8xf32>
    %109 = tpu.matmul %107, %108, %cst_52 {dimension_numbers = #tpu.dot_dimension_numbers<[1], [0], [0], [1], [0, 0, 1, 1], [], []>} : vector<64x32xf32>, vector<32x8xf32>, vector<64x8xf32> -> vector<64x8xf32>
    %110 = arith.addf %105, %109 : vector<64x8xf32>
    %111 = vector.extract_strided_slice %89 {offsets = [4, 0, 0], sizes = [1, 64, 32], strides = [1, 1, 1]} : vector<8x64x32xf32> to vector<1x64x32xf32>
    %112 = vector.shape_cast %111 : vector<1x64x32xf32> to vector<64x32xf32>
    %c0_53 = arith.constant 0 : index
    %c32 = arith.constant 32 : index
    %113 = vector.load %arg18[%c0_53, %c32] : memref<32x64xf32, #tpu.memory_space<vmem>>, vector<32x8xf32>
    %cst_54 = arith.constant dense<0.000000e+00> : vector<64x8xf32>
    %114 = tpu.matmul %112, %113, %cst_54 {dimension_numbers = #tpu.dot_dimension_numbers<[1], [0], [0], [1], [0, 0, 1, 1], [], []>} : vector<64x32xf32>, vector<32x8xf32>, vector<64x8xf32> -> vector<64x8xf32>
    %115 = arith.addf %110, %114 : vector<64x8xf32>
    %116 = vector.extract_strided_slice %89 {offsets = [5, 0, 0], sizes = [1, 64, 32], strides = [1, 1, 1]} : vector<8x64x32xf32> to vector<1x64x32xf32>
    %117 = vector.shape_cast %116 : vector<1x64x32xf32> to vector<64x32xf32>
    %c0_55 = arith.constant 0 : index
    %c40 = arith.constant 40 : index
    %118 = vector.load %arg18[%c0_55, %c40] : memref<32x64xf32, #tpu.memory_space<vmem>>, vector<32x8xf32>
    %cst_56 = arith.constant dense<0.000000e+00> : vector<64x8xf32>
    %119 = tpu.matmul %117, %118, %cst_56 {dimension_numbers = #tpu.dot_dimension_numbers<[1], [0], [0], [1], [0, 0, 1, 1], [], []>} : vector<64x32xf32>, vector<32x8xf32>, vector<64x8xf32> -> vector<64x8xf32>
    %120 = arith.addf %115, %119 : vector<64x8xf32>
    %121 = vector.extract_strided_slice %89 {offsets = [6, 0, 0], sizes = [1, 64, 32], strides = [1, 1, 1]} : vector<8x64x32xf32> to vector<1x64x32xf32>
    %122 = vector.shape_cast %121 : vector<1x64x32xf32> to vector<64x32xf32>
    %c0_57 = arith.constant 0 : index
    %c48 = arith.constant 48 : index
    %123 = vector.load %arg18[%c0_57, %c48] : memref<32x64xf32, #tpu.memory_space<vmem>>, vector<32x8xf32>
    %cst_58 = arith.constant dense<0.000000e+00> : vector<64x8xf32>
    %124 = tpu.matmul %122, %123, %cst_58 {dimension_numbers = #tpu.dot_dimension_numbers<[1], [0], [0], [1], [0, 0, 1, 1], [], []>} : vector<64x32xf32>, vector<32x8xf32>, vector<64x8xf32> -> vector<64x8xf32>
    %125 = arith.addf %120, %124 : vector<64x8xf32>
    %126 = vector.extract_strided_slice %89 {offsets = [7, 0, 0], sizes = [1, 64, 32], strides = [1, 1, 1]} : vector<8x64x32xf32> to vector<1x64x32xf32>
    %127 = vector.shape_cast %126 : vector<1x64x32xf32> to vector<64x32xf32>
    %c0_59 = arith.constant 0 : index
    %c56 = arith.constant 56 : index
    %128 = vector.load %arg18[%c0_59, %c56] : memref<32x64xf32, #tpu.memory_space<vmem>>, vector<32x8xf32>
    %cst_60 = arith.constant dense<0.000000e+00> : vector<64x8xf32>
    %129 = tpu.matmul %127, %128, %cst_60 {dimension_numbers = #tpu.dot_dimension_numbers<[1], [0], [0], [1], [0, 0, 1, 1], [], []>} : vector<64x32xf32>, vector<32x8xf32>, vector<64x8xf32> -> vector<64x8xf32>
    %130 = arith.addf %125, %129 : vector<64x8xf32>
    %c0_61 = arith.constant 0 : index
    %c0_62 = arith.constant 0 : index
    %131 = vector.load %arg14[%c0_61, %c0_62] : memref<64x1xf32, #tpu.memory_space<vmem>>, vector<64x1xf32>
    %132 = vector.broadcast %131 : vector<64x1xf32> to vector<64x8xf32>
    %133 = arith.addf %130, %132 : vector<64x8xf32>
    %cst_63 = arith.constant 0.000000e+00 : f32
    %134 = vector.broadcast %cst_63 : f32 to vector<64x8xf32>
    %135 = arith.maximumf %133, %134 : vector<64x8xf32>
    %c0_64 = arith.constant 0 : index
    %c0_65 = arith.constant 0 : index
    %136 = vector.load %arg15[%c0_64, %c0_65] : memref<4x64xf32, #tpu.memory_space<vmem>>, vector<4x64xf32>
    %cst_66 = arith.constant dense<0.000000e+00> : vector<4x8xf32>
    %137 = tpu.matmul %136, %135, %cst_66 {dimension_numbers = #tpu.dot_dimension_numbers<[1], [0], [0], [1], [0, 0, 1, 1], [], []>} : vector<4x64xf32>, vector<64x8xf32>, vector<4x8xf32> -> vector<4x8xf32>
    %c0_67 = arith.constant 0 : index
    %c0_68 = arith.constant 0 : index
    %138 = vector.load %arg16[%c0_67, %c0_68] : memref<4x1xf32, #tpu.memory_space<vmem>>, vector<4x1xf32>
    %139 = vector.broadcast %138 : vector<4x1xf32> to vector<4x8xf32>
    %140 = arith.addf %137, %139 : vector<4x8xf32>
    %141 = vector.shape_cast %140 : vector<4x8xf32> to vector<1x4x8xf32>
    %c0_69 = arith.constant 0 : index
    %c0_70 = arith.constant 0 : index
    %c0_71 = arith.constant 0 : index
    %142 = vector.load %arg17[%c0_69, %c0_70, %c0_71] : memref<1x4x8xf32, #tpu.memory_space<vmem>>, vector<1x4x8xf32>
    tpu.vector_store %arg17[%c0_69, %c0_70, %c0_71], %141 {strides = array<i32>} : memref<1x4x8xf32, #tpu.memory_space<vmem>>, vector<1x4x8xf32>,
    return
  }
  func.func @transform_0(%arg0: i32) -> (i32, i32) {
    %c0_i32 = arith.constant 0 : i32
    %c0_i32_0 = arith.constant 0 : i32
    return %c0_i32, %arg0 : i32, i32
  }
  func.func @transform_1(%arg0: i32) -> (i32, i32) {
    %c0_i32 = arith.constant 0 : i32
    %c0_i32_0 = arith.constant 0 : i32
    %c0_i32_1 = arith.constant 0 : i32
    return %c0_i32, %c0_i32_0 : i32, i32
  }
  func.func @transform_2(%arg0: i32) -> (i32, i32) {
    %c0_i32 = arith.constant 0 : i32
    %c0_i32_0 = arith.constant 0 : i32
    %c0_i32_1 = arith.constant 0 : i32
    return %c0_i32, %c0_i32_0 : i32, i32
  }
  func.func @transform_3(%arg0: i32) -> (i32, i32) {
    %c0_i32 = arith.constant 0 : i32
    %c0_i32_0 = arith.constant 0 : i32
    %c0_i32_1 = arith.constant 0 : i32
    return %c0_i32, %c0_i32_0 : i32, i32
  }
  func.func @transform_4(%arg0: i32) -> (i32, i32) {
    %c0_i32 = arith.constant 0 : i32
    %c0_i32_0 = arith.constant 0 : i32
    %c0_i32_1 = arith.constant 0 : i32
    return %c0_i32, %c0_i32_0 : i32, i32
  }
  func.func @transform_5(%arg0: i32) -> (i32, i32, i32) {
    %c0_i32 = arith.constant 0 : i32
    %c0_i32_0 = arith.constant 0 : i32
    %c0_i32_1 = arith.constant 0 : i32
    %c0_i32_2 = arith.constant 0 : i32
    return %c0_i32, %c0_i32_0, %c0_i32_1 : i32, i32, i32
  }
  func.func @transform_6(%arg0: i32) -> (i32, i32) {
    %c0_i32 = arith.constant 0 : i32
    %c0_i32_0 = arith.constant 0 : i32
    %c0_i32_1 = arith.constant 0 : i32
    return %c0_i32, %c0_i32_0 : i32, i32
  }
  func.func @transform_7(%arg0: i32) -> (i32, i32, i32) {
    %c0_i32 = arith.constant 0 : i32
    %c0_i32_0 = arith.constant 0 : i32
    %c0_i32_1 = arith.constant 0 : i32
    %c0_i32_2 = arith.constant 0 : i32
    return %c0_i32, %c0_i32_0, %c0_i32_1 : i32, i32, i32
  }
  func.func @transform_8(%arg0: i32) -> (i32, i32) {
    %c0_i32 = arith.constant 0 : i32
    %c0_i32_0 = arith.constant 0 : i32
    %c0_i32_1 = arith.constant 0 : i32
    return %c0_i32, %c0_i32_0 : i32, i32
  }
  func.func @transform_9(%arg0: i32) -> (i32, i32, i32) {
    %c0_i32 = arith.constant 0 : i32
    %c0_i32_0 = arith.constant 0 : i32
    %c0_i32_1 = arith.constant 0 : i32
    %c0_i32_2 = arith.constant 0 : i32
    return %c0_i32, %c0_i32_0, %c0_i32_1 : i32, i32, i32
  }
  func.func @transform_10(%arg0: i32) -> (i32, i32) {
    %c0_i32 = arith.constant 0 : i32
    %c0_i32_0 = arith.constant 0 : i32
    %c0_i32_1 = arith.constant 0 : i32
    return %c0_i32, %c0_i32_0 : i32, i32
  }
  func.func @transform_11(%arg0: i32) -> (i32, i32) {
    %c0_i32 = arith.constant 0 : i32
    %c0_i32_0 = arith.constant 0 : i32
    %c0_i32_1 = arith.constant 0 : i32
    return %c0_i32, %c0_i32_0 : i32, i32
  }
  func.func @transform_12(%arg0: i32) -> (i32, i32, i32) {
    %c0_i32 = arith.constant 0 : i32
    %c0_i32_0 = arith.constant 0 : i32
    %c0_i32_1 = arith.constant 0 : i32
    %c0_i32_2 = arith.constant 0 : i32
    return %c0_i32, %c0_i32_0, %c0_i32_1 : i32, i32, i32
  }
  func.func @transform_13(%arg0: i32) -> (i32, i32) {
    %c0_i32 = arith.constant 0 : i32
    %c0_i32_0 = arith.constant 0 : i32
    %c0_i32_1 = arith.constant 0 : i32
    return %c0_i32, %c0_i32_0 : i32, i32
  }
  func.func @transform_14(%arg0: i32) -> (i32, i32) {
    %c0_i32 = arith.constant 0 : i32
    %c0_i32_0 = arith.constant 0 : i32
    %c0_i32_1 = arith.constant 0 : i32
    return %c0_i32, %c0_i32_0 : i32, i32
  }
  func.func @transform_15(%arg0: i32) -> (i32, i32) {
    %c0_i32 = arith.constant 0 : i32
    %c0_i32_0 = arith.constant 0 : i32
    %c0_i32_1 = arith.constant 0 : i32
    return %c0_i32, %c0_i32_0 : i32, i32
  }
  func.func @transform_16(%arg0: i32) -> (i32, i32, i32) {
    %c0_i32 = arith.constant 0 : i32
    %c0_i32_0 = arith.constant 0 : i32
    %c0_i32_1 = arith.constant 0 : i32
    return %arg0, %c0_i32, %c0_i32_0 : i32, i32, i32
  }
}

</mosaic_0001>

<llo_original>
// kernel: tpu_custom_call.1
$region0: #{tpu_custom_call.1}
  #allocation0 [shape = 'u32[]', space=smem, size = 0x4, offset = 0x4, fixed_abs, tag = 'smem constant byte address 0x4 - core index']
  #allocation1 [shape = 'u32[144,128]{1,0:T(1,128)}', space=vmem, size = 0x12000, scoped, tag = 'internal scratch']
  #allocation2 [shape = 'f32[32,64]{1,0:T(8,128)}', space=vmem, size = 0x4000, scoped, tag = 'scratch operand']
  %s0 = inlined_call_operand.vmem [shape: f32[1,2048], index: 0, kind: input, shape index: {}]
  %s1 = inlined_call_operand.vmem [shape: f32[1,1024], index: 1, kind: input, shape index: {}]
  %s2 = inlined_call_operand.vmem [shape: f32[1,1024], index: 2, kind: input, shape index: {}]
  %s3 = inlined_call_operand.vmem [shape: f32[1,1024], index: 3, kind: input, shape index: {}]
  %s4 = inlined_call_operand.vmem [shape: f32[1,1024], index: 4, kind: input, shape index: {}]
  %s5 = inlined_call_operand.vmem [shape: f32[3,16,1], index: 5, kind: input, shape index: {}]
  %s6 = inlined_call_operand.vmem [shape: f32[16,1], index: 6, kind: input, shape index: {}]
  %s7 = inlined_call_operand.vmem [shape: f32[3,16,16], index: 7, kind: input, shape index: {}]
  %s8 = inlined_call_operand.vmem [shape: f32[16,1], index: 8, kind: input, shape index: {}]
  %s9 = inlined_call_operand.vmem [shape: f32[3,32,16], index: 9, kind: input, shape index: {}]
  %s10 = inlined_call_operand.vmem [shape: f32[32,1], index: 10, kind: input, shape index: {}]
  %s11 = inlined_call_operand.vmem [shape: bf16[1024,64], index: 11, kind: input, shape index: {}]
  %s12 = inlined_call_operand.vmem [shape: bf16[8,64,32], index: 12, kind: input, shape index: {}]
  %s13 = inlined_call_operand.vmem [shape: f32[64,1], index: 13, kind: input, shape index: {}]
  %s14 = inlined_call_operand.vmem [shape: f32[4,64], index: 14, kind: input, shape index: {}]
  %s15 = inlined_call_operand.vmem [shape: f32[4,1], index: 15, kind: input, shape index: {}]
  %s16 = inlined_call_operand.hbm [shape: f32[2,4,8], index: 16, kind: output, shape index: {}]
  %s17 = sld [smem:[#allocation0]]
  $region97: #{tpu_custom_call.1} parent=0
    _
  %s19 = ssub.s32 1, %s17
  %s20 = scalar_select 0, %s19, %s17
  $region1: #{tpu_custom_call.1} parent=0
    #allocation3 [shape = 'u8[4096]{0}', space=vmem, size = 0x1000, scoped, tag = 'output window, operand 0']
    #allocation4 [shape = 's32[2]{0}', space=sflag, size = 0x8, scoped, tag = 'scoped memory for tpu_custom_call.1']
    %21 = vsyncpa [#allocation4], 0
    %s22 = scalar_lea.sflag [#allocation4], 1
    %23 = vsyncpa %s22, 0
    loop: start=0, step=1, limit=4
    $region2: #{tpu_custom_call.1} parent=1 // loop_pre_header
      _
    $region3: #{tpu_custom_call.1} parent=1 // loop_header
      %s25 = sphi 0, %s29
      %p26 = scmp.ge.s32.totalorder %s25, 4
      %s35 = sphi 0, %s37
      %s38 = sphi 0, %s35
      %s39 = sphi 0, %s38
      %s55 = sphi 0, %s39
      %s59 = sphi 0, %s59
      %s61 = sphi 0, %s59
      %s62 = sphi 0, %s61
      %s76 = sphi 0, %s62
      %s80 = sphi 0, %s80
      %s82 = sphi 0, %s80
      %s83 = sphi 0, %s82
      %s97 = sphi 0, %s83
      %s101 = sphi 0, %s101
      %s103 = sphi 0, %s101
      %s104 = sphi 0, %s103
      %s118 = sphi 0, %s104
      %s122 = sphi 0, %s122
      %s124 = sphi 0, %s122
      %s125 = sphi 0, %s124
      %s139 = sphi 0, %s125
      %s143 = sphi 0, %s143
      %s145 = sphi 0, %s143
      %s146 = sphi 0, %s145
      %s160 = sphi 0, %s146
      %s164 = sphi 0, %s164
      %s166 = sphi 0, %s164
      %s167 = sphi 0, %s166
      %s181 = sphi 0, %s167
      %s185 = sphi 0, %s185
      %s187 = sphi 0, %s185
      %s188 = sphi 0, %s187
      %s202 = sphi 0, %s188
      %s206 = sphi 0, %s206
      %s208 = sphi 0, %s206
      %s209 = sphi 0, %s208
      %s223 = sphi 0, %s209
      %s227 = sphi 0, %s227
      %s229 = sphi 0, %s227
      %s230 = sphi 0, %s229
      %s244 = sphi 0, %s230
      %s248 = sphi 0, %s248
      %s250 = sphi 0, %s248
      %s251 = sphi 0, %s250
      %s265 = sphi 0, %s251
      %s269 = sphi 0, %s269
      %s271 = sphi 0, %s269
      %s272 = sphi 0, %s271
      %s286 = sphi 0, %s272
      %s290 = sphi 0, %s290
      %s292 = sphi 0, %s290
      %s293 = sphi 0, %s292
      %s307 = sphi 0, %s293
      %s311 = sphi 0, %s311
      %s313 = sphi 0, %s311
      %s314 = sphi 0, %s313
      %s328 = sphi 0, %s314
      %s332 = sphi 0, %s332
      %s334 = sphi 0, %s332
      %s335 = sphi 0, %s334
      %s349 = sphi 0, %s335
      %s353 = sphi 0, %s353
      %s355 = sphi 0, %s353
      %s356 = sphi 0, %s355
      %s370 = sphi 0, %s356
      %s376 = sphi 0, %s378
      %s379 = sphi 0, %s376
      %s380 = sphi 0, %s379
      %s396 = sphi 0, %s380
    $region4: #{tpu_custom_call.1} parent=1 // loop_header_branch
      %28 = sbr.rel (%p26) target = $region8
    $region5: #{tpu_custom_call.1} parent=1 // loop_body
      %s30 = ssub.s32 %s25, 1
      %s31 = ssub.s32 %s25, 2
      %s32 = sadd.s32 %s25, 1
      %s33 = ssub.s32 %s25, %s32
      %p34 = scmp.eq.s32.totalorder %s33, 0
      %s36 = sadd.s32 %s35, 1
      %s37 = scalar_select %p34, %s35, %s36
      %p40 = pneg %p34
      %p41 = scmp.eq.s32.totalorder %s25, 1
      %p42 = por %p40, %p41
      %p43 = scmp.ne.s32.totalorder %s35, %s38
      %p44 = scmp.eq.s32.totalorder %s25, 0
      %p45 = por %p43, %p44
      %p46 = scmp.ne.s32.totalorder %s35, %s38
      %p47 = scmp.eq.s32.totalorder %s30, 1
      %p48 = por %p46, %p47
      %p49 = scmp.ne.s32.totalorder %s38, %s39
      %p50 = scmp.eq.s32.totalorder %s30, 0
      %p51 = por %p49, %p50
      %p52 = scmp.ne.s32.totalorder %s38, %s39
      %p53 = scmp.eq.s32.totalorder %s31, 1
      %p54 = por %p52, %p53
      %p56 = scmp.ne.s32.totalorder %s39, %s55
      %p57 = scmp.eq.s32.totalorder %s31, 0
      %p58 = por %p56, %p57
      %s60 = sadd.s32 %s59, 1
      %p63 = scmp.eq.s32.totalorder %s25, 1
      %p64 = scmp.ne.s32.totalorder %s59, %s61
      %p65 = scmp.eq.s32.totalorder %s25, 0
      %p66 = por %p64, %p65
      %p67 = scmp.ne.s32.totalorder %s59, %s61
      %p68 = scmp.eq.s32.totalorder %s30, 1
      %p69 = por %p67, %p68
      %p70 = scmp.ne.s32.totalorder %s61, %s62
      %p71 = scmp.eq.s32.totalorder %s30, 0
      %p72 = por %p70, %p71
      %p73 = scmp.ne.s32.totalorder %s61, %s62
      %p74 = scmp.eq.s32.totalorder %s31, 1
      %p75 = por %p73, %p74
      %p77 = scmp.ne.s32.totalorder %s62, %s76
      %p78 = scmp.eq.s32.totalorder %s31, 0
      %p79 = por %p77, %p78
      %s81 = sadd.s32 %s80, 1
      %p84 = scmp.eq.s32.totalorder %s25, 1
      %p85 = scmp.ne.s32.totalorder %s80, %s82
      %p86 = scmp.eq.s32.totalorder %s25, 0
      %p87 = por %p85, %p86
      %p88 = scmp.ne.s32.totalorder %s80, %s82
      %p89 = scmp.eq.s32.totalorder %s30, 1
      %p90 = por %p88, %p89
      %p91 = scmp.ne.s32.totalorder %s82, %s83
      %p92 = scmp.eq.s32.totalorder %s30, 0
      %p93 = por %p91, %p92
      %p94 = scmp.ne.s32.totalorder %s82, %s83
      %p95 = scmp.eq.s32.totalorder %s31, 1
      %p96 = por %p94, %p95
      %p98 = scmp.ne.s32.totalorder %s83, %s97
      %p99 = scmp.eq.s32.totalorder %s31, 0
      %p100 = por %p98, %p99
      %s102 = sadd.s32 %s101, 1
      %p105 = scmp.eq.s32.totalorder %s25, 1
      %p106 = scmp.ne.s32.totalorder %s101, %s103
      %p107 = scmp.eq.s32.totalorder %s25, 0
      %p108 = por %p106, %p107
      %p109 = scmp.ne.s32.totalorder %s101, %s103
      %p110 = scmp.eq.s32.totalorder %s30, 1
      %p111 = por %p109, %p110
      %p112 = scmp.ne.s32.totalorder %s103, %s104
      %p113 = scmp.eq.s32.totalorder %s30, 0
      %p114 = por %p112, %p113
      %p115 = scmp.ne.s32.totalorder %s103, %s104
      %p116 = scmp.eq.s32.totalorder %s31, 1
      %p117 = por %p115, %p116
      %p119 = scmp.ne.s32.totalorder %s104, %s118
      %p120 = scmp.eq.s32.totalorder %s31, 0
      %p121 = por %p119, %p120
      %s123 = sadd.s32 %s122, 1
      %p126 = scmp.eq.s32.totalorder %s25, 1
      %p127 = scmp.ne.s32.totalorder %s122, %s124
      %p128 = scmp.eq.s32.totalorder %s25, 0
      %p129 = por %p127, %p128
      %p130 = scmp.ne.s32.totalorder %s122, %s124
      %p131 = scmp.eq.s32.totalorder %s30, 1
      %p132 = por %p130, %p131
      %p133 = scmp.ne.s32.totalorder %s124, %s125
      %p134 = scmp.eq.s32.totalorder %s30, 0
      %p135 = por %p133, %p134
      %p136 = scmp.ne.s32.totalorder %s124, %s125
      %p137 = scmp.eq.s32.totalorder %s31, 1
      %p138 = por %p136, %p137
      %p140 = scmp.ne.s32.totalorder %s125, %s139
      %p141 = scmp.eq.s32.totalorder %s31, 0
      %p142 = por %p140, %p141
      %s144 = sadd.s32 %s143, 1
      %p147 = scmp.eq.s32.totalorder %s25, 1
      %p148 = scmp.ne.s32.totalorder %s143, %s145
      %p149 = scmp.eq.s32.totalorder %s25, 0
      %p150 = por %p148, %p149
      %p151 = scmp.ne.s32.totalorder %s143, %s145
      %p152 = scmp.eq.s32.totalorder %s30, 1
      %p153 = por %p151, %p152
      %p154 = scmp.ne.s32.totalorder %s145, %s146
      %p155 = scmp.eq.s32.totalorder %s30, 0
      %p156 = por %p154, %p155
      %p157 = scmp.ne.s32.totalorder %s145, %s146
      %p158 = scmp.eq.s32.totalorder %s31, 1
      %p159 = por %p157, %p158
      %p161 = scmp.ne.s32.totalorder %s146, %s160
      %p162 = scmp.eq.s32.totalorder %s31, 0
      %p163 = por %p161, %p162
      %s165 = sadd.s32 %s164, 1
      %p168 = scmp.eq.s32.totalorder %s25, 1
      %p169 = scmp.ne.s32.totalorder %s164, %s166
      %p170 = scmp.eq.s32.totalorder %s25, 0
      %p171 = por %p169, %p170
      %p172 = scmp.ne.s32.totalorder %s164, %s166
      %p173 = scmp.eq.s32.totalorder %s30, 1
      %p174 = por %p172, %p173
      %p175 = scmp.ne.s32.totalorder %s166, %s167
      %p176 = scmp.eq.s32.totalorder %s30, 0
      %p177 = por %p175, %p176
      %p178 = scmp.ne.s32.totalorder %s166, %s167
      %p179 = scmp.eq.s32.totalorder %s31, 1
      %p180 = por %p178, %p179
      %p182 = scmp.ne.s32.totalorder %s167, %s181
      %p183 = scmp.eq.s32.totalorder %s31, 0
      %p184 = por %p182, %p183
      %s186 = sadd.s32 %s185, 1
      %p189 = scmp.eq.s32.totalorder %s25, 1
      %p190 = scmp.ne.s32.totalorder %s185, %s187
      %p191 = scmp.eq.s32.totalorder %s25, 0
      %p192 = por %p190, %p191
      %p193 = scmp.ne.s32.totalorder %s185, %s187
      %p194 = scmp.eq.s32.totalorder %s30, 1
      %p195 = por %p193, %p194
      %p196 = scmp.ne.s32.totalorder %s187, %s188
      %p197 = scmp.eq.s32.totalorder %s30, 0
      %p198 = por %p196, %p197
      %p199 = scmp.ne.s32.totalorder %s187, %s188
      %p200 = scmp.eq.s32.totalorder %s31, 1
      %p201 = por %p199, %p200
      %p203 = scmp.ne.s32.totalorder %s188, %s202
      %p204 = scmp.eq.s32.totalorder %s31, 0
      %p205 = por %p203, %p204
      %s207 = sadd.s32 %s206, 1
      %p210 = scmp.eq.s32.totalorder %s25, 1
      %p211 = scmp.ne.s32.totalorder %s206, %s208
      %p212 = scmp.eq.s32.totalorder %s25, 0
      %p213 = por %p211, %p212
      %p214 = scmp.ne.s32.totalorder %s206, %s208
      %p215 = scmp.eq.s32.totalorder %s30, 1
      %p216 = por %p214, %p215
      %p217 = scmp.ne.s32.totalorder %s208, %s209
      %p218 = scmp.eq.s32.totalorder %s30, 0
      %p219 = por %p217, %p218
      %p220 = scmp.ne.s32.totalorder %s208, %s209
      %p221 = scmp.eq.s32.totalorder %s31, 1
      %p222 = por %p220, %p221
      %p224 = scmp.ne.s32.totalorder %s209, %s223
      %p225 = scmp.eq.s32.totalorder %s31, 0
      %p226 = por %p224, %p225
      %s228 = sadd.s32 %s227, 1
      %p231 = scmp.eq.s32.totalorder %s25, 1
      %p232 = scmp.ne.s32.totalorder %s227, %s229
      %p233 = scmp.eq.s32.totalorder %s25, 0
      %p234 = por %p232, %p233
      %p235 = scmp.ne.s32.totalorder %s227, %s229
      %p236 = scmp.eq.s32.totalorder %s30, 1
      %p237 = por %p235, %p236
      %p238 = scmp.ne.s32.totalorder %s229, %s230
      %p239 = scmp.eq.s32.totalorder %s30, 0
      %p240 = por %p238, %p239
      %p241 = scmp.ne.s32.totalorder %s229, %s230
      %p242 = scmp.eq.s32.totalorder %s31, 1
      %p243 = por %p241, %p242
      %p245 = scmp.ne.s32.totalorder %s230, %s244
      %p246 = scmp.eq.s32.totalorder %s31, 0
      %p247 = por %p245, %p246
      %s249 = sadd.s32 %s248, 1
      %p252 = scmp.eq.s32.totalorder %s25, 1
      %p253 = scmp.ne.s32.totalorder %s248, %s250
      %p254 = scmp.eq.s32.totalorder %s25, 0
      %p255 = por %p253, %p254
      %p256 = scmp.ne.s32.totalorder %s248, %s250
      %p257 = scmp.eq.s32.totalorder %s30, 1
      %p258 = por %p256, %p257
      %p259 = scmp.ne.s32.totalorder %s250, %s251
      %p260 = scmp.eq.s32.totalorder %s30, 0
      %p261 = por %p259, %p260
      %p262 = scmp.ne.s32.totalorder %s250, %s251
      %p263 = scmp.eq.s32.totalorder %s31, 1
      %p264 = por %p262, %p263
      %p266 = scmp.ne.s32.totalorder %s251, %s265
      %p267 = scmp.eq.s32.totalorder %s31, 0
      %p268 = por %p266, %p267
      %s270 = sadd.s32 %s269, 1
      %p273 = scmp.eq.s32.totalorder %s25, 1
      %p274 = scmp.ne.s32.totalorder %s269, %s271
      %p275 = scmp.eq.s32.totalorder %s25, 0
      %p276 = por %p274, %p275
      %p277 = scmp.ne.s32.totalorder %s269, %s271
      %p278 = scmp.eq.s32.totalorder %s30, 1
      %p279 = por %p277, %p278
      %p280 = scmp.ne.s32.totalorder %s271, %s272
      %p281 = scmp.eq.s32.totalorder %s30, 0
      %p282 = por %p280, %p281
      %p283 = scmp.ne.s32.totalorder %s271, %s272
      %p284 = scmp.eq.s32.totalorder %s31, 1
      %p285 = por %p283, %p284
      %p287 = scmp.ne.s32.totalorder %s272, %s286
      %p288 = scmp.eq.s32.totalorder %s31, 0
      %p289 = por %p287, %p288
      %s291 = sadd.s32 %s290, 1
      %p294 = scmp.eq.s32.totalorder %s25, 1
      %p295 = scmp.ne.s32.totalorder %s290, %s292
      %p296 = scmp.eq.s32.totalorder %s25, 0
      %p297 = por %p295, %p296
      %p298 = scmp.ne.s32.totalorder %s290, %s292
      %p299 = scmp.eq.s32.totalorder %s30, 1
      %p300 = por %p298, %p299
      %p301 = scmp.ne.s32.totalorder %s292, %s293
      %p302 = scmp.eq.s32.totalorder %s30, 0
      %p303 = por %p301, %p302
      %p304 = scmp.ne.s32.totalorder %s292, %s293
      %p305 = scmp.eq.s32.totalorder %s31, 1
      %p306 = por %p304, %p305
      %p308 = scmp.ne.s32.totalorder %s293, %s307
      %p309 = scmp.eq.s32.totalorder %s31, 0
      %p310 = por %p308, %p309
      %s312 = sadd.s32 %s311, 1
      %p315 = scmp.eq.s32.totalorder %s25, 1
      %p316 = scmp.ne.s32.totalorder %s311, %s313
      %p317 = scmp.eq.s32.totalorder %s25, 0
      %p318 = por %p316, %p317
      %p319 = scmp.ne.s32.totalorder %s311, %s313
      %p320 = scmp.eq.s32.totalorder %s30, 1
      %p321 = por %p319, %p320
      %p322 = scmp.ne.s32.totalorder %s313, %s314
      %p323 = scmp.eq.s32.totalorder %s30, 0
      %p324 = por %p322, %p323
      %p325 = scmp.ne.s32.totalorder %s313, %s314
      %p326 = scmp.eq.s32.totalorder %s31, 1
      %p327 = por %p325, %p326
      %p329 = scmp.ne.s32.totalorder %s314, %s328
      %p330 = scmp.eq.s32.totalorder %s31, 0
      %p331 = por %p329, %p330
      %s333 = sadd.s32 %s332, 1
      %p336 = scmp.eq.s32.totalorder %s25, 1
      %p337 = scmp.ne.s32.totalorder %s332, %s334
      %p338 = scmp.eq.s32.totalorder %s25, 0
      %p339 = por %p337, %p338
      %p340 = scmp.ne.s32.totalorder %s332, %s334
      %p341 = scmp.eq.s32.totalorder %s30, 1
      %p342 = por %p340, %p341
      %p343 = scmp.ne.s32.totalorder %s334, %s335
      %p344 = scmp.eq.s32.totalorder %s30, 0
      %p345 = por %p343, %p344
      %p346 = scmp.ne.s32.totalorder %s334, %s335
      %p347 = scmp.eq.s32.totalorder %s31, 1
      %p348 = por %p346, %p347
      %p350 = scmp.ne.s32.totalorder %s335, %s349
      %p351 = scmp.eq.s32.totalorder %s31, 0
      %p352 = por %p350, %p351
      %s354 = sadd.s32 %s353, 1
      %p357 = scmp.eq.s32.totalorder %s25, 1
      %p358 = scmp.ne.s32.totalorder %s353, %s355
      %p359 = scmp.eq.s32.totalorder %s25, 0
      %p360 = por %p358, %p359
      %p361 = scmp.ne.s32.totalorder %s353, %s355
      %p362 = scmp.eq.s32.totalorder %s30, 1
      %p363 = por %p361, %p362
      %p364 = scmp.ne.s32.totalorder %s355, %s356
      %p365 = scmp.eq.s32.totalorder %s30, 0
      %p366 = por %p364, %p365
      %p367 = scmp.ne.s32.totalorder %s355, %s356
      %p368 = scmp.eq.s32.totalorder %s31, 1
      %p369 = por %p367, %p368
      %p371 = scmp.ne.s32.totalorder %s356, %s370
      %p372 = scmp.eq.s32.totalorder %s31, 0
      %p373 = por %p371, %p372
      %s374 = ssub.s32 %s25, %s32
      %p375 = scmp.eq.s32.totalorder %s374, 0
      %s377 = sadd.s32 %s376, 1
      %s378 = scalar_select %p375, %s376, %s377
      %p381 = pneg %p375
      %p382 = scmp.eq.s32.totalorder %s25, 1
      %p383 = por %p381, %p382
      %p384 = scmp.ne.s32.totalorder %s376, %s379
      %p385 = scmp.eq.s32.totalorder %s25, 0
      %p386 = por %p384, %p385
      %p387 = scmp.ne.s32.totalorder %s376, %s379
      %p388 = scmp.eq.s32.totalorder %s30, 1
      %p389 = por %p387, %p388
      %p390 = scmp.ne.s32.totalorder %s379, %s380
      %p391 = scmp.eq.s32.totalorder %s30, 0
      %p392 = por %p390, %p391
      %p393 = scmp.ne.s32.totalorder %s379, %s380
      %p394 = scmp.eq.s32.totalorder %s31, 1
      %p395 = por %p393, %p394
      %p397 = scmp.ne.s32.totalorder %s380, %s396
      %p398 = scmp.eq.s32.totalorder %s31, 0
      %p399 = por %p397, %p398
      %p400 = scmp.le.s32.totalorder 1, %s25
      %p401 = scmp.lt.s32.totalorder %s25, 3
      %p402 = pnand %p400, %p401
      %p403 = pneg %p402
      // Predicated region
      $region9: #{tpu_custom_call.1} parent=5 // pred_check
        _
      $region10: #{tpu_custom_call.1} parent=5 // pred_check_branch
        %405 = sbr.rel (%p402) target = $region12
      $region11: #{tpu_custom_call.1} parent=5 // pred_region
        %s406 = ssub.s32 %s25, 1
        // Predicated region
        $region13: #{tpu_custom_call.1} parent=11 // pred_check
          %p407 = pneg %p72
        $region14: #{tpu_custom_call.1} parent=11 // pred_check_branch
          %409 = sbr.rel (%p407) target = $region16
        $region15: #{tpu_custom_call.1} parent=11 // pred_region
          _
        $region16: #{tpu_custom_call.1} parent=11 // pred_fallthru
          _
        // Predicated region
        $region17: #{tpu_custom_call.1} parent=11 // pred_check
          %p410 = pneg %p93
        $region18: #{tpu_custom_call.1} parent=11 // pred_check_branch
          %412 = sbr.rel (%p410) target = $region20
        $region19: #{tpu_custom_call.1} parent=11 // pred_region
          _
        $region20: #{tpu_custom_call.1} parent=11 // pred_fallthru
          _
        // Predicated region
        $region21: #{tpu_custom_call.1} parent=11 // pred_check
          %p413 = pneg %p114
        $region22: #{tpu_custom_call.1} parent=11 // pred_check_branch
          %415 = sbr.rel (%p413) target = $region24
        $region23: #{tpu_custom_call.1} parent=11 // pred_region
          _
        $region24: #{tpu_custom_call.1} parent=11 // pred_fallthru
          _
        // Predicated region
        $region25: #{tpu_custom_call.1} parent=11 // pred_check
          %p416 = pneg %p135
        $region26: #{tpu_custom_call.1} parent=11 // pred_check_branch
          %418 = sbr.rel (%p416) target = $region28
        $region27: #{tpu_custom_call.1} parent=11 // pred_region
          _
        $region28: #{tpu_custom_call.1} parent=11 // pred_fallthru
          _
        // Predicated region
        $region29: #{tpu_custom_call.1} parent=11 // pred_check
          %p419 = pneg %p156
        $region30: #{tpu_custom_call.1} parent=11 // pred_check_branch
          %421 = sbr.rel (%p419) target = $region32
        $region31: #{tpu_custom_call.1} parent=11 // pred_region
          _
        $region32: #{tpu_custom_call.1} parent=11 // pred_fallthru
          _
        // Predicated region
        $region33: #{tpu_custom_call.1} parent=11 // pred_check
          %p422 = pneg %p177
        $region34: #{tpu_custom_call.1} parent=11 // pred_check_branch
          %424 = sbr.rel (%p422) target = $region36
        $region35: #{tpu_custom_call.1} parent=11 // pred_region
          _
        $region36: #{tpu_custom_call.1} parent=11 // pred_fallthru
          _
        // Predicated region
        $region37: #{tpu_custom_call.1} parent=11 // pred_check
          %p425 = pneg %p198
        $region38: #{tpu_custom_call.1} parent=11 // pred_check_branch
          %427 = sbr.rel (%p425) target = $region40
        $region39: #{tpu_custom_call.1} parent=11 // pred_region
          _
        $region40: #{tpu_custom_call.1} parent=11 // pred_fallthru
          _
        // Predicated region
        $region41: #{tpu_custom_call.1} parent=11 // pred_check
          %p428 = pneg %p219
        $region42: #{tpu_custom_call.1} parent=11 // pred_check_branch
          %430 = sbr.rel (%p428) target = $region44
        $region43: #{tpu_custom_call.1} parent=11 // pred_region
          _
        $region44: #{tpu_custom_call.1} parent=11 // pred_fallthru
          _
        // Predicated region
        $region45: #{tpu_custom_call.1} parent=11 // pred_check
          %p431 = pneg %p240
        $region46: #{tpu_custom_call.1} parent=11 // pred_check_branch
          %433 = sbr.rel (%p431) target = $region48
        $region47: #{tpu_custom_call.1} parent=11 // pred_region
          _
        $region48: #{tpu_custom_call.1} parent=11 // pred_fallthru
          _
        // Predicated region
        $region49: #{tpu_custom_call.1} parent=11 // pred_check
          %p434 = pneg %p261
        $region50: #{tpu_custom_call.1} parent=11 // pred_check_branch
          %436 = sbr.rel (%p434) target = $region52
        $region51: #{tpu_custom_call.1} parent=11 // pred_region
          _
        $region52: #{tpu_custom_call.1} parent=11 // pred_fallthru
          _
        // Predicated region
        $region53: #{tpu_custom_call.1} parent=11 // pred_check
          %p437 = pneg %p282
        $region54: #{tpu_custom_call.1} parent=11 // pred_check_branch
          %439 = sbr.rel (%p437) target = $region56
        $region55: #{tpu_custom_call.1} parent=11 // pred_region
          _
        $region56: #{tpu_custom_call.1} parent=11 // pred_fallthru
          _
        // Predicated region
        $region57: #{tpu_custom_call.1} parent=11 // pred_check
          %p440 = pneg %p303
        $region58: #{tpu_custom_call.1} parent=11 // pred_check_branch
          %442 = sbr.rel (%p440) target = $region60
        $region59: #{tpu_custom_call.1} parent=11 // pred_region
          _
        $region60: #{tpu_custom_call.1} parent=11 // pred_fallthru
          _
        // Predicated region
        $region61: #{tpu_custom_call.1} parent=11 // pred_check
          %p443 = pneg %p324
        $region62: #{tpu_custom_call.1} parent=11 // pred_check_branch
          %445 = sbr.rel (%p443) target = $region64
        $region63: #{tpu_custom_call.1} parent=11 // pred_region
          _
        $region64: #{tpu_custom_call.1} parent=11 // pred_fallthru
          _
        // Predicated region
        $region65: #{tpu_custom_call.1} parent=11 // pred_check
          %p446 = pneg %p345
        $region66: #{tpu_custom_call.1} parent=11 // pred_check_branch
          %448 = sbr.rel (%p446) target = $region68
        $region67: #{tpu_custom_call.1} parent=11 // pred_region
          _
        $region68: #{tpu_custom_call.1} parent=11 // pred_fallthru
          _
        // Predicated region
        $region69: #{tpu_custom_call.1} parent=11 // pred_check
          %p449 = pneg %p366
        $region70: #{tpu_custom_call.1} parent=11 // pred_check_branch
          %451 = sbr.rel (%p449) target = $region72
        $region71: #{tpu_custom_call.1} parent=11 // pred_region
          _
        $region72: #{tpu_custom_call.1} parent=11 // pred_fallthru
          _
      $region12: #{tpu_custom_call.1} parent=5 // pred_fallthru
        _
      %p452 = scmp.lt.s32.totalorder %s25, 2
      // Predicated region
      $region73: #{tpu_custom_call.1} parent=5 // pred_check
        %p453 = pneg %p452
      $region74: #{tpu_custom_call.1} parent=5 // pred_check_branch
        %455 = sbr.rel (%p453) target = $region76
      $region75: #{tpu_custom_call.1} parent=5 // pred_region
        // Predicated region
        $region77: #{tpu_custom_call.1} parent=75 // pred_check
          %p456 = pneg %p45
        $region78: #{tpu_custom_call.1} parent=75 // pred_check_branch
          %458 = sbr.rel (%p456) target = $region80
        $region79: #{tpu_custom_call.1} parent=75 // pred_region
          %s459 = smul.u32 8, %s25
          %p460 = scmp.lt.s32.totalorder %s459, 15
          %s461 = scalar_select %p460, %s459, 15
          %s462 = scalar_lea.vmem %s0, %s461
          %s463 = smul.u32 8, %s25
        $region80: #{tpu_custom_call.1} parent=75 // pred_fallthru
          _
      $region76: #{tpu_custom_call.1} parent=5 // pred_fallthru
        _
      %p464 = scmp.le.s32.totalorder 1, %s25
      %p465 = scmp.lt.s32.totalorder %s25, 3
      %p466 = pnand %p464, %p465
      %p467 = pneg %p466
      // Predicated region
      $region81: #{tpu_custom_call.1} parent=5 // pred_check
        _
      $region82: #{tpu_custom_call.1} parent=5 // pred_check_branch
        %469 = sbr.rel (%p466) target = $region84
      $region83: #{tpu_custom_call.1} parent=5 // pred_region
        %s470 = ssub.s32 %s25, 1
        %s471 = smul.u32 8, %s30
        %p472 = scmp.lt.s32.totalorder %s471, 15
        %s473 = scalar_select %p472, %s471, 15
        %s474 = scalar_lea.vmem %s0, %s473
        %p475 = pneg %p51
        %p476 = pneg %p48
        %p477 = pneg %p72
        %p478 = pneg %p69
        %p479 = pneg %p93
        %p480 = pneg %p90
        %p481 = pneg %p114
        %p482 = pneg %p111
        %p483 = pneg %p135
        %p484 = pneg %p132
        %p485 = pneg %p156
        %p486 = pneg %p153
        %p487 = pneg %p177
        %p488 = pneg %p174
        %p489 = pneg %p198
        %p490 = pneg %p195
        %p491 = pneg %p219
        %p492 = pneg %p216
        %p493 = pneg %p240
        %p494 = pneg %p237
        %p495 = pneg %p261
        %p496 = pneg %p258
        %p497 = pneg %p282
        %p498 = pneg %p279
        %p499 = pneg %p303
        %p500 = pneg %p300
        %p501 = pneg %p324
        %p502 = pneg %p321
        %p503 = pneg %p345
        %p504 = pneg %p342
        %p505 = pneg %p366
        %p506 = pneg %p363
        %p507 = pneg %p392
        %p508 = pneg %p389
        %s509 = sand.u32 %s379, 1
        %s510 = scalar_lea.sflag [#allocation4], %s509
        %s511 = sand.u32 %s379, 1
        %s512 = smul.addr %s511, 4
        %s513 = scalar_lea.vmem [#allocation3], %s512
        %s514 = smul.u32 8, %s30
        %p515 = scmp.lt.s32.totalorder %s514, 15
        %s516 = scalar_select %p515, %s514, 15
        %s517 = scalar_lea.vmem %s0, %s516
        %s518 = smul.u32 8, %s30
        %v519 = vld [vmem:[%s1] sm:$0xff]
        %v520 = vld [vmem:[%s517] sm:$0xff]
        %v521 = vld [vmem:[%s2] sm:$0xff]
        %v523 = vlaneseq
        %v524 = vshrl.u32 %v523, 7
        %v525 = vsub.s32 0, %v524
        %v526 = vrot.slane %v520, %v525
        %v527 = vlaneseq
        %v528 = vshrl.u32 %v527, 7
        %v529 = vsub.s32 1, %v528
        %v530 = vrot.slane %v520, %v529
        %v531 = vlaneseq
        %v532 = vshrl.u32 %v531, 7
        %v533 = vsub.s32 2, %v532
        %v534 = vrot.slane %v520, %v533
        %v535 = vlaneseq
        %v536 = vshrl.u32 %v535, 7
        %v537 = vsub.s32 3, %v536
        %v538 = vrot.slane %v520, %v537
        %v539 = vlaneseq
        %v540 = vshrl.u32 %v539, 7
        %v541 = vsub.s32 4, %v540
        %v542 = vrot.slane %v520, %v541
        %v543 = vlaneseq
        %v544 = vshrl.u32 %v543, 7
        %v545 = vsub.s32 5, %v544
        %v546 = vrot.slane %v520, %v545
        %v547 = vlaneseq
        %v548 = vshrl.u32 %v547, 7
        %v549 = vsub.s32 6, %v548
        %v550 = vrot.slane %v520, %v549
        %v551 = vlaneseq
        %v552 = vshrl.u32 %v551, 7
        %v553 = vsub.s32 7, %v552
        %v554 = vrot.slane %v520, %v553
        %563 = vrot.lane.b32.xlu0 %v526, 1
        %v564 = vpop.permute.xlu0 %563
        %565 = vrot.lane.b32.xlu0 %v530, 1
        %v566 = vpop.permute.xlu0 %565
        %567 = vrot.lane.b32.xlu0 %v534, 1
        %v568 = vpop.permute.xlu0 %567
        %569 = vrot.lane.b32.xlu0 %v538, 1
        %v570 = vpop.permute.xlu0 %569
        %571 = vrot.lane.b32.xlu0 %v542, 1
        %v572 = vpop.permute.xlu0 %571
        %573 = vrot.lane.b32.xlu0 %v546, 1
        %v574 = vpop.permute.xlu0 %573
        %575 = vrot.lane.b32.xlu0 %v550, 1
        %v576 = vpop.permute.xlu0 %575
        %577 = vrot.lane.b32.xlu0 %v554, 1
        %v578 = vpop.permute.xlu0 %577
        %v579 = vlaneseq
        %v580 = vand.u32 %v579, 127
        %vm581 = vcmp.lt.s32.totalorder %v580, 1
        %v582 = vsel %vm581, %v576, %v578
        %v583 = vsel %vm581, %v574, %v576
        %v584 = vsel %vm581, %v572, %v574
        %v585 = vsel %vm581, %v570, %v572
        %v586 = vsel %vm581, %v568, %v570
        %v587 = vsel %vm581, %v566, %v568
        %v588 = vsel %vm581, %v564, %v566
        %v589 = vsel %vm581, %v578, %v564
        %v591 = vlaneseq
        %v592 = vshrl.u32 %v591, 7
        %v593 = vsub.s32 0, %v592
        %v594 = vrot.slane %v519, %v593
        %v595 = vlaneseq
        %v596 = vshrl.u32 %v595, 7
        %v597 = vsub.s32 1, %v596
        %v598 = vrot.slane %v519, %v597
        %v599 = vlaneseq
        %v600 = vshrl.u32 %v599, 7
        %v601 = vsub.s32 2, %v600
        %v602 = vrot.slane %v519, %v601
        %v603 = vlaneseq
        %v604 = vshrl.u32 %v603, 7
        %v605 = vsub.s32 3, %v604
        %v606 = vrot.slane %v519, %v605
        %v607 = vlaneseq
        %v608 = vshrl.u32 %v607, 7
        %v609 = vsub.s32 4, %v608
        %v610 = vrot.slane %v519, %v609
        %v611 = vlaneseq
        %v612 = vshrl.u32 %v611, 7
        %v613 = vsub.s32 5, %v612
        %v614 = vrot.slane %v519, %v613
        %v615 = vlaneseq
        %v616 = vshrl.u32 %v615, 7
        %v617 = vsub.s32 6, %v616
        %v618 = vrot.slane %v519, %v617
        %v619 = vlaneseq
        %v620 = vshrl.u32 %v619, 7
        %v621 = vsub.s32 7, %v620
        %v622 = vrot.slane %v519, %v621
        %v631 = vmul.f32 %v589, %v594
        %v632 = vmul.f32 %v588, %v598
        %v633 = vmul.f32 %v587, %v602
        %v634 = vmul.f32 %v586, %v606
        %v635 = vmul.f32 %v585, %v610
        %v636 = vmul.f32 %v584, %v614
        %v637 = vmul.f32 %v583, %v618
        %v638 = vmul.f32 %v582, %v622
        %639 = vrot.lane.b32.xlu0 %v526, 127
        %v640 = vpop.permute.xlu0 %639
        %641 = vrot.lane.b32.xlu0 %v530, 127
        %v642 = vpop.permute.xlu0 %641
        %643 = vrot.lane.b32.xlu0 %v534, 127
        %v644 = vpop.permute.xlu0 %643
        %645 = vrot.lane.b32.xlu0 %v538, 127
        %v646 = vpop.permute.xlu0 %645
        %647 = vrot.lane.b32.xlu0 %v542, 127
        %v648 = vpop.permute.xlu0 %647
        %649 = vrot.lane.b32.xlu0 %v546, 127
        %v650 = vpop.permute.xlu0 %649
        %651 = vrot.lane.b32.xlu0 %v550, 127
        %v652 = vpop.permute.xlu0 %651
        %653 = vrot.lane.b32.xlu0 %v554, 127
        %v654 = vpop.permute.xlu0 %653
        %vm655 = vcmp.lt.s32.totalorder %v580, 127
        %v656 = vsel %vm655, %v652, %v654
        %v657 = vsel %vm655, %v650, %v652
        %v658 = vsel %vm655, %v648, %v650
        %v659 = vsel %vm655, %v646, %v648
        %v660 = vsel %vm655, %v644, %v646
        %v661 = vsel %vm655, %v642, %v644
        %v662 = vsel %vm655, %v640, %v642
        %v663 = vsel %vm655, %v654, %v640
        %v665 = vlaneseq
        %v666 = vshrl.u32 %v665, 7
        %v667 = vsub.s32 0, %v666
        %v668 = vrot.slane %v521, %v667
        %v669 = vlaneseq
        %v670 = vshrl.u32 %v669, 7
        %v671 = vsub.s32 1, %v670
        %v672 = vrot.slane %v521, %v671
        %v673 = vlaneseq
        %v674 = vshrl.u32 %v673, 7
        %v675 = vsub.s32 2, %v674
        %v676 = vrot.slane %v521, %v675
        %v677 = vlaneseq
        %v678 = vshrl.u32 %v677, 7
        %v679 = vsub.s32 3, %v678
        %v680 = vrot.slane %v521, %v679
        %v681 = vlaneseq
        %v682 = vshrl.u32 %v681, 7
        %v683 = vsub.s32 4, %v682
        %v684 = vrot.slane %v521, %v683
        %v685 = vlaneseq
        %v686 = vshrl.u32 %v685, 7
        %v687 = vsub.s32 5, %v686
        %v688 = vrot.slane %v521, %v687
        %v689 = vlaneseq
        %v690 = vshrl.u32 %v689, 7
        %v691 = vsub.s32 6, %v690
        %v692 = vrot.slane %v521, %v691
        %v693 = vlaneseq
        %v694 = vshrl.u32 %v693, 7
        %v695 = vsub.s32 7, %v694
        %v696 = vrot.slane %v521, %v695
        %v705 = vmul.f32 %v662, %v668
        %v706 = vmul.f32 %v661, %v672
        %v707 = vmul.f32 %v660, %v676
        %v708 = vmul.f32 %v659, %v680
        %v709 = vmul.f32 %v658, %v684
        %v710 = vmul.f32 %v657, %v688
        %v711 = vmul.f32 %v656, %v692
        %v712 = vmul.f32 %v663, %v696
        %v713 = vld [vmem:[%s5] sm:$0xff]
        %v714 = vld [vmem:[%s5 + $0x8] sm:$0xff]
        %v715 = vld [vmem:[%s5 + $0x10] sm:$0xff]
        %v716 = vld [vmem:[%s5 + $0x18] sm:$0xff]
        %v717 = vld [vmem:[%s5 + $0x20] sm:$0xff]
        %v718 = vld [vmem:[%s5 + $0x28] sm:$0xff]
        %720 = vset.pattern.permute.xlu0 0
        %721 = vperm.xlu0 %720, %v713
        %v722 = vpop.permute.xlu0 %721
        %725 = vset.pattern.permute.xlu0 0
        %726 = vperm.xlu0 %725, %v714
        %v727 = vpop.permute.xlu0 %726
        %v729 = vlaneseq
        %v730 = vshrl.u32 %v729, 7
        %v731 = vsub.s32 0, %v730
        %v732 = vrot.slane %v631, %v731
        %v733 = vlaneseq
        %v734 = vshrl.u32 %v733, 7
        %v735 = vsub.s32 0, %v734
        %v736 = vrot.slane %v632, %v735
        %v737 = vlaneseq
        %v738 = vshrl.u32 %v737, 7
        %v739 = vsub.s32 0, %v738
        %v740 = vrot.slane %v633, %v739
        %v741 = vlaneseq
        %v742 = vshrl.u32 %v741, 7
        %v743 = vsub.s32 0, %v742
        %v744 = vrot.slane %v634, %v743
        %v745 = vlaneseq
        %v746 = vshrl.u32 %v745, 7
        %v747 = vsub.s32 0, %v746
        %v748 = vrot.slane %v635, %v747
        %v749 = vlaneseq
        %v750 = vshrl.u32 %v749, 7
        %v751 = vsub.s32 0, %v750
        %v752 = vrot.slane %v636, %v751
        %v753 = vlaneseq
        %v754 = vshrl.u32 %v753, 7
        %v755 = vsub.s32 0, %v754
        %v756 = vrot.slane %v637, %v755
        %v757 = vlaneseq
        %v758 = vshrl.u32 %v757, 7
        %v759 = vsub.s32 0, %v758
        %v760 = vrot.slane %v638, %v759
        %v761 = vmul.f32 %v722, %v732
        %v762 = vmul.f32 %v722, %v736
        %v763 = vmul.f32 %v722, %v740
        %v764 = vmul.f32 %v722, %v744
        %v765 = vmul.f32 %v722, %v748
        %v766 = vmul.f32 %v722, %v752
        %v767 = vmul.f32 %v722, %v756
        %v768 = vmul.f32 %v722, %v760
        %v769 = vmul.f32 %v727, %v732
        %v770 = vmul.f32 %v727, %v736
        %v771 = vmul.f32 %v727, %v740
        %v772 = vmul.f32 %v727, %v744
        %v773 = vmul.f32 %v727, %v748
        %v774 = vmul.f32 %v727, %v752
        %v775 = vmul.f32 %v727, %v756
        %v776 = vmul.f32 %v727, %v760
        %778 = vset.pattern.permute.xlu0 0
        %779 = vperm.xlu0 %778, %v715
        %v780 = vpop.permute.xlu0 %779
        %783 = vset.pattern.permute.xlu0 0
        %784 = vperm.xlu0 %783, %v716
        %v785 = vpop.permute.xlu0 %784
        %v787 = vmul.f32 %v780, %v526
        %v788 = vmul.f32 %v780, %v530
        %v789 = vmul.f32 %v780, %v534
        %v790 = vmul.f32 %v780, %v538
        %v791 = vmul.f32 %v780, %v542
        %v792 = vmul.f32 %v780, %v546
        %v793 = vmul.f32 %v780, %v550
        %v794 = vmul.f32 %v780, %v554
        %v795 = vmul.f32 %v785, %v526
        %v796 = vmul.f32 %v785, %v530
        %v797 = vmul.f32 %v785, %v534
        %v798 = vmul.f32 %v785, %v538
        %v799 = vmul.f32 %v785, %v542
        %v800 = vmul.f32 %v785, %v546
        %v801 = vmul.f32 %v785, %v550
        %v802 = vmul.f32 %v785, %v554
        %v803 = vadd.f32 %v761, %v787
        %v804 = vadd.f32 %v762, %v788
        %v805 = vadd.f32 %v763, %v789
        %v806 = vadd.f32 %v764, %v790
        %v807 = vadd.f32 %v765, %v791
        %v808 = vadd.f32 %v766, %v792
        %v809 = vadd.f32 %v767, %v793
        %v810 = vadd.f32 %v768, %v794
        %v811 = vadd.f32 %v769, %v795
        %v812 = vadd.f32 %v770, %v796
        %v813 = vadd.f32 %v771, %v797
        %v814 = vadd.f32 %v772, %v798
        %v815 = vadd.f32 %v773, %v799
        %v816 = vadd.f32 %v774, %v800
        %v817 = vadd.f32 %v775, %v801
        %v818 = vadd.f32 %v776, %v802
        %820 = vset.pattern.permute.xlu0 0
        %821 = vperm.xlu0 %820, %v717
        %v822 = vpop.permute.xlu0 %821
        %825 = vset.pattern.permute.xlu0 0
        %826 = vperm.xlu0 %825, %v718
        %v827 = vpop.permute.xlu0 %826
        %v829 = vlaneseq
        %v830 = vshrl.u32 %v829, 7
        %v831 = vsub.s32 0, %v830
        %v832 = vrot.slane %v705, %v831
        %v833 = vlaneseq
        %v834 = vshrl.u32 %v833, 7
        %v835 = vsub.s32 0, %v834
        %v836 = vrot.slane %v706, %v835
        %v837 = vlaneseq
        %v838 = vshrl.u32 %v837, 7
        %v839 = vsub.s32 0, %v838
        %v840 = vrot.slane %v707, %v839
        %v841 = vlaneseq
        %v842 = vshrl.u32 %v841, 7
        %v843 = vsub.s32 0, %v842
        %v844 = vrot.slane %v708, %v843
        %v845 = vlaneseq
        %v846 = vshrl.u32 %v845, 7
        %v847 = vsub.s32 0, %v846
        %v848 = vrot.slane %v709, %v847
        %v849 = vlaneseq
        %v850 = vshrl.u32 %v849, 7
        %v851 = vsub.s32 0, %v850
        %v852 = vrot.slane %v710, %v851
        %v853 = vlaneseq
        %v854 = vshrl.u32 %v853, 7
        %v855 = vsub.s32 0, %v854
        %v856 = vrot.slane %v711, %v855
        %v857 = vlaneseq
        %v858 = vshrl.u32 %v857, 7
        %v859 = vsub.s32 0, %v858
        %v860 = vrot.slane %v712, %v859
        %v861 = vmul.f32 %v822, %v832
        %v862 = vmul.f32 %v822, %v836
        %v863 = vmul.f32 %v822, %v840
        %v864 = vmul.f32 %v822, %v844
        %v865 = vmul.f32 %v822, %v848
        %v866 = vmul.f32 %v822, %v852
        %v867 = vmul.f32 %v822, %v856
        %v868 = vmul.f32 %v822, %v860
        %v869 = vmul.f32 %v827, %v832
        %v870 = vmul.f32 %v827, %v836
        %v871 = vmul.f32 %v827, %v840
        %v872 = vmul.f32 %v827, %v844
        %v873 = vmul.f32 %v827, %v848
        %v874 = vmul.f32 %v827, %v852
        %v875 = vmul.f32 %v827, %v856
        %v876 = vmul.f32 %v827, %v860
        %v877 = vadd.f32 %v803, %v861
        %v878 = vadd.f32 %v804, %v862
        %v879 = vadd.f32 %v805, %v863
        %v880 = vadd.f32 %v806, %v864
        %v881 = vadd.f32 %v807, %v865
        %v882 = vadd.f32 %v808, %v866
        %v883 = vadd.f32 %v809, %v867
        %v884 = vadd.f32 %v810, %v868
        %v885 = vadd.f32 %v811, %v869
        %v886 = vadd.f32 %v812, %v870
        %v887 = vadd.f32 %v813, %v871
        %v888 = vadd.f32 %v814, %v872
        %v889 = vadd.f32 %v815, %v873
        %v890 = vadd.f32 %v816, %v874
        %v891 = vadd.f32 %v817, %v875
        %v892 = vadd.f32 %v818, %v876
        %v893 = vld [vmem:[%s6] sm:$0xff]
        %v894 = vld [vmem:[%s6 + $0x8] sm:$0xff]
        %896 = vset.pattern.permute.xlu0 0
        %897 = vperm.xlu0 %896, %v893
        %v898 = vpop.permute.xlu0 %897
        %901 = vset.pattern.permute.xlu0 0
        %902 = vperm.xlu0 %901, %v894
        %v903 = vpop.permute.xlu0 %902
        %v905 = vadd.f32 %v877, %v898
        %v906 = vadd.f32 %v878, %v898
        %v907 = vadd.f32 %v879, %v898
        %v908 = vadd.f32 %v880, %v898
        %v909 = vadd.f32 %v881, %v898
        %v910 = vadd.f32 %v882, %v898
        %v911 = vadd.f32 %v883, %v898
        %v912 = vadd.f32 %v884, %v898
        %v913 = vadd.f32 %v885, %v903
        %v914 = vadd.f32 %v886, %v903
        %v915 = vadd.f32 %v887, %v903
        %v916 = vadd.f32 %v888, %v903
        %v917 = vadd.f32 %v889, %v903
        %v918 = vadd.f32 %v890, %v903
        %v919 = vadd.f32 %v891, %v903
        %v920 = vadd.f32 %v892, %v903
        %v921 = vmax.f32 %v905, 0.0
        %v922 = vmax.f32 %v906, 0.0
        %v923 = vmax.f32 %v907, 0.0
        %v924 = vmax.f32 %v908, 0.0
        %v925 = vmax.f32 %v909, 0.0
        %v926 = vmax.f32 %v910, 0.0
        %v927 = vmax.f32 %v911, 0.0
        %v928 = vmax.f32 %v912, 0.0
        %v929 = vmax.f32 %v913, 0.0
        %v930 = vmax.f32 %v914, 0.0
        %v931 = vmax.f32 %v915, 0.0
        %v932 = vmax.f32 %v916, 0.0
        %v933 = vmax.f32 %v917, 0.0
        %v934 = vmax.f32 %v918, 0.0
        %v935 = vmax.f32 %v919, 0.0
        %v936 = vmax.f32 %v920, 0.0
        %937 = vrot.lane.b32.xlu0 %v921, 127
        %v938 = vpop.permute.xlu0 %937
        %939 = vrot.lane.b32.xlu0 %v929, 127
        %v940 = vpop.permute.xlu0 %939
        %941 = vrot.lane.b32.xlu0 %v922, 127
        %v942 = vpop.permute.xlu0 %941
        %943 = vrot.lane.b32.xlu0 %v930, 127
        %v944 = vpop.permute.xlu0 %943
        %945 = vrot.lane.b32.xlu0 %v923, 127
        %v946 = vpop.permute.xlu0 %945
        %947 = vrot.lane.b32.xlu0 %v931, 127
        %v948 = vpop.permute.xlu0 %947
        %949 = vrot.lane.b32.xlu0 %v924, 127
        %v950 = vpop.permute.xlu0 %949
        %951 = vrot.lane.b32.xlu0 %v932, 127
        %v952 = vpop.permute.xlu0 %951
        %953 = vrot.lane.b32.xlu0 %v925, 127
        %v954 = vpop.permute.xlu0 %953
        %955 = vrot.lane.b32.xlu0 %v933, 127
        %v956 = vpop.permute.xlu0 %955
        %957 = vrot.lane.b32.xlu0 %v926, 127
        %v958 = vpop.permute.xlu0 %957
        %959 = vrot.lane.b32.xlu0 %v934, 127
        %v960 = vpop.permute.xlu0 %959
        %961 = vrot.lane.b32.xlu0 %v927, 127
        %v962 = vpop.permute.xlu0 %961
        %963 = vrot.lane.b32.xlu0 %v935, 127
        %v964 = vpop.permute.xlu0 %963
        %965 = vrot.lane.b32.xlu0 %v928, 127
        %v966 = vpop.permute.xlu0 %965
        %967 = vrot.lane.b32.xlu0 %v936, 127
        %v968 = vpop.permute.xlu0 %967
        %v969 = vsel %vm655, %v962, %v966
        %v970 = vsel %vm655, %v964, %v968
        %v971 = vsel %vm655, %v958, %v962
        %v972 = vsel %vm655, %v960, %v964
        %v973 = vsel %vm655, %v954, %v958
        %v974 = vsel %vm655, %v956, %v960
        %v975 = vsel %vm655, %v950, %v954
        %v976 = vsel %vm655, %v952, %v956
        %v977 = vsel %vm655, %v946, %v950
        %v978 = vsel %vm655, %v948, %v952
        %v979 = vsel %vm655, %v942, %v946
        %v980 = vsel %vm655, %v944, %v948
        %v981 = vsel %vm655, %v938, %v942
        %v982 = vsel %vm655, %v940, %v944
        %v983 = vsel %vm655, %v966, %v938
        %v984 = vsel %vm655, %v968, %v940
        %v985 = vmax.f32 %v921, %v981
        %v986 = vmax.f32 %v922, %v979
        %v987 = vmax.f32 %v923, %v977
        %v988 = vmax.f32 %v924, %v975
        %v989 = vmax.f32 %v925, %v973
        %v990 = vmax.f32 %v926, %v971
        %v991 = vmax.f32 %v927, %v969
        %v992 = vmax.f32 %v928, %v983
        %v993 = vmax.f32 %v929, %v982
        %v994 = vmax.f32 %v930, %v980
        %v995 = vmax.f32 %v931, %v978
        %v996 = vmax.f32 %v932, %v976
        %v997 = vmax.f32 %v933, %v974
        %v998 = vmax.f32 %v934, %v972
        %v999 = vmax.f32 %v935, %v970
        %v1000 = vmax.f32 %v936, %v984
        %v1001 = vld [vmem:[%s3] sm:$0xff]
        %1002 = vrot.lane.b32.xlu0 %v985, 2
        %v1003 = vpop.permute.xlu0 %1002
        %1004 = vrot.lane.b32.xlu0 %v993, 2
        %v1005 = vpop.permute.xlu0 %1004
        %1006 = vrot.lane.b32.xlu0 %v986, 2
        %v1007 = vpop.permute.xlu0 %1006
        %1008 = vrot.lane.b32.xlu0 %v994, 2
        %v1009 = vpop.permute.xlu0 %1008
        %1010 = vrot.lane.b32.xlu0 %v987, 2
        %v1011 = vpop.permute.xlu0 %1010
        %1012 = vrot.lane.b32.xlu0 %v995, 2
        %v1013 = vpop.permute.xlu0 %1012
        %1014 = vrot.lane.b32.xlu0 %v988, 2
        %v1015 = vpop.permute.xlu0 %1014
        %1016 = vrot.lane.b32.xlu0 %v996, 2
        %v1017 = vpop.permute.xlu0 %1016
        %1018 = vrot.lane.b32.xlu0 %v989, 2
        %v1019 = vpop.permute.xlu0 %1018
        %1020 = vrot.lane.b32.xlu0 %v997, 2
        %v1021 = vpop.permute.xlu0 %1020
        %1022 = vrot.lane.b32.xlu0 %v990, 2
        %v1023 = vpop.permute.xlu0 %1022
        %1024 = vrot.lane.b32.xlu0 %v998, 2
        %v1025 = vpop.permute.xlu0 %1024
        %1026 = vrot.lane.b32.xlu0 %v991, 2
        %v1027 = vpop.permute.xlu0 %1026
        %1028 = vrot.lane.b32.xlu0 %v999, 2
        %v1029 = vpop.permute.xlu0 %1028
        %1030 = vrot.lane.b32.xlu0 %v992, 2
        %v1031 = vpop.permute.xlu0 %1030
        %1032 = vrot.lane.b32.xlu0 %v1000, 2
        %v1033 = vpop.permute.xlu0 %1032
        %vm1034 = vcmp.lt.s32.totalorder %v580, 2
        %v1035 = vsel %vm1034, %v1027, %v1031
        %v1036 = vsel %vm1034, %v1029, %v1033
        %v1037 = vsel %vm1034, %v1023, %v1027
        %v1038 = vsel %vm1034, %v1025, %v1029
        %v1039 = vsel %vm1034, %v1019, %v1023
        %v1040 = vsel %vm1034, %v1021, %v1025
        %v1041 = vsel %vm1034, %v1015, %v1019
        %v1042 = vsel %vm1034, %v1017, %v1021
        %v1043 = vsel %vm1034, %v1011, %v1015
        %v1044 = vsel %vm1034, %v1013, %v1017
        %v1045 = vsel %vm1034, %v1007, %v1011
        %v1046 = vsel %vm1034, %v1009, %v1013
        %v1047 = vsel %vm1034, %v1003, %v1007
        %v1048 = vsel %vm1034, %v1005, %v1009
        %v1049 = vsel %vm1034, %v1031, %v1003
        %v1050 = vsel %vm1034, %v1033, %v1005
        %v1051 = vmul.f32 %v1049, %v594
        %v1052 = vmul.f32 %v1047, %v598
        %v1053 = vmul.f32 %v1045, %v602
        %v1054 = vmul.f32 %v1043, %v606
        %v1055 = vmul.f32 %v1041, %v610
        %v1056 = vmul.f32 %v1039, %v614
        %v1057 = vmul.f32 %v1037, %v618
        %v1058 = vmul.f32 %v1035, %v622
        %v1059 = vmul.f32 %v1050, %v594
        %v1060 = vmul.f32 %v1048, %v598
        %v1061 = vmul.f32 %v1046, %v602
        %v1062 = vmul.f32 %v1044, %v606
        %v1063 = vmul.f32 %v1042, %v610
        %v1064 = vmul.f32 %v1040, %v614
        %v1065 = vmul.f32 %v1038, %v618
        %v1066 = vmul.f32 %v1036, %v622
        %1067 = vrot.lane.b32.xlu0 %v985, 126
        %v1068 = vpop.permute.xlu0 %1067
        %1069 = vrot.lane.b32.xlu0 %v993, 126
        %v1070 = vpop.permute.xlu0 %1069
        %1071 = vrot.lane.b32.xlu0 %v986, 126
        %v1072 = vpop.permute.xlu0 %1071
        %1073 = vrot.lane.b32.xlu0 %v994, 126
        %v1074 = vpop.permute.xlu0 %1073
        %1075 = vrot.lane.b32.xlu0 %v987, 126
        %v1076 = vpop.permute.xlu0 %1075
        %1077 = vrot.lane.b32.xlu0 %v995, 126
        %v1078 = vpop.permute.xlu0 %1077
        %1079 = vrot.lane.b32.xlu0 %v988, 126
        %v1080 = vpop.permute.xlu0 %1079
        %1081 = vrot.lane.b32.xlu0 %v996, 126
        %v1082 = vpop.permute.xlu0 %1081
        %1083 = vrot.lane.b32.xlu0 %v989, 126
        %v1084 = vpop.permute.xlu0 %1083
        %1085 = vrot.lane.b32.xlu0 %v997, 126
        %v1086 = vpop.permute.xlu0 %1085
        %1087 = vrot.lane.b32.xlu0 %v990, 126
        %v1088 = vpop.permute.xlu0 %1087
        %1089 = vrot.lane.b32.xlu0 %v998, 126
        %v1090 = vpop.permute.xlu0 %1089
        %1091 = vrot.lane.b32.xlu0 %v991, 126
        %v1092 = vpop.permute.xlu0 %1091
        %1093 = vrot.lane.b32.xlu0 %v999, 126
        %v1094 = vpop.permute.xlu0 %1093
        %1095 = vrot.lane.b32.xlu0 %v992, 126
        %v1096 = vpop.permute.xlu0 %1095
        %1097 = vrot.lane.b32.xlu0 %v1000, 126
        %v1098 = vpop.permute.xlu0 %1097
        %vm1099 = vcmp.lt.s32.totalorder %v580, 126
        %v1100 = vsel %vm1099, %v1092, %v1096
        %v1101 = vsel %vm1099, %v1094, %v1098
        %v1102 = vsel %vm1099, %v1088, %v1092
        %v1103 = vsel %vm1099, %v1090, %v1094
        %v1104 = vsel %vm1099, %v1084, %v1088
        %v1105 = vsel %vm1099, %v1086, %v1090
        %v1106 = vsel %vm1099, %v1080, %v1084
        %v1107 = vsel %vm1099, %v1082, %v1086
        %v1108 = vsel %vm1099, %v1076, %v1080
        %v1109 = vsel %vm1099, %v1078, %v1082
        %v1110 = vsel %vm1099, %v1072, %v1076
        %v1111 = vsel %vm1099, %v1074, %v1078
        %v1112 = vsel %vm1099, %v1068, %v1072
        %v1113 = vsel %vm1099, %v1070, %v1074
        %v1114 = vsel %vm1099, %v1096, %v1068
        %v1115 = vsel %vm1099, %v1098, %v1070
        %v1117 = vlaneseq
        %v1118 = vshrl.u32 %v1117, 7
        %v1119 = vsub.s32 0, %v1118
        %v1120 = vrot.slane %v1001, %v1119
        %v1121 = vlaneseq
        %v1122 = vshrl.u32 %v1121, 7
        %v1123 = vsub.s32 1, %v1122
        %v1124 = vrot.slane %v1001, %v1123
        %v1125 = vlaneseq
        %v1126 = vshrl.u32 %v1125, 7
        %v1127 = vsub.s32 2, %v1126
        %v1128 = vrot.slane %v1001, %v1127
        %v1129 = vlaneseq
        %v1130 = vshrl.u32 %v1129, 7
        %v1131 = vsub.s32 3, %v1130
        %v1132 = vrot.slane %v1001, %v1131
        %v1133 = vlaneseq
        %v1134 = vshrl.u32 %v1133, 7
        %v1135 = vsub.s32 4, %v1134
        %v1136 = vrot.slane %v1001, %v1135
        %v1137 = vlaneseq
        %v1138 = vshrl.u32 %v1137, 7
        %v1139 = vsub.s32 5, %v1138
        %v1140 = vrot.slane %v1001, %v1139
        %v1141 = vlaneseq
        %v1142 = vshrl.u32 %v1141, 7
        %v1143 = vsub.s32 6, %v1142
        %v1144 = vrot.slane %v1001, %v1143
        %v1145 = vlaneseq
        %v1146 = vshrl.u32 %v1145, 7
        %v1147 = vsub.s32 7, %v1146
        %v1148 = vrot.slane %v1001, %v1147
        %v1157 = vmul.f32 %v1112, %v1120
        %v1158 = vmul.f32 %v1110, %v1124
        %v1159 = vmul.f32 %v1108, %v1128
        %v1160 = vmul.f32 %v1106, %v1132
        %v1161 = vmul.f32 %v1104, %v1136
        %v1162 = vmul.f32 %v1102, %v1140
        %v1163 = vmul.f32 %v1100, %v1144
        %v1164 = vmul.f32 %v1114, %v1148
        %v1165 = vmul.f32 %v1113, %v1120
        %v1166 = vmul.f32 %v1111, %v1124
        %v1167 = vmul.f32 %v1109, %v1128
        %v1168 = vmul.f32 %v1107, %v1132
        %v1169 = vmul.f32 %v1105, %v1136
        %v1170 = vmul.f32 %v1103, %v1140
        %v1171 = vmul.f32 %v1101, %v1144
        %v1172 = vmul.f32 %v1115, %v1148
        %v1173 = vld [vmem:[%s7] sm:$0xff]
        %v1174 = vld [vmem:[%s7 + $0x8] sm:$0xff]
        %v1175 = vld [vmem:[%s7 + $0x10] sm:$0xff]
        %v1176 = vld [vmem:[%s7 + $0x18] sm:$0xff]
        %v1177 = vld [vmem:[%s7 + $0x20] sm:$0xff]
        %v1178 = vld [vmem:[%s7 + $0x28] sm:$0xff]
        %vm1179 = vcmask 130048
        %v1181 = vsel %vm1179, %v1175, 0
        %v1184 = vsel %vm1179, %v1176, 0
        %1186 = vmatprep.subr.mxu0 %v986
        %1187 = vmatpush1.msra.mxu0 %v985
        %1188 = vmatprep.subr.mxu0 %v994
        %1189 = vmatpush1.msra.mxu0 %v993
        %1190 = vmatprep.subr.mxu0 0.0
        %1191 = vmatpush1.msra.mxu0 0.0
        %1192 = vmatprep.subr.mxu0 0.0
        %1193 = vmatpush1.msra.mxu0 0.0
        %1194 = vmatprep.subr.mxu0 0.0
        %1195 = vmatpush1.msra.mxu0 0.0
        %1196 = vmatprep.subr.mxu0 0.0
        %1197 = vmatpush1.msra.mxu0 0.0
        %1198 = vmatprep.subr.mxu0 0.0
        %1199 = vmatpush1.msra.mxu0 0.0
        %1200 = vmatprep.subr.mxu0 0.0
        %1201 = vmatpush1.msra.mxu0 0.0
        %1202 = vmatprep.subr.mxu0 0.0
        %1203 = vmatpush1.msra.mxu0 0.0
        %1204 = vmatprep.subr.mxu0 0.0
        %1205 = vmatpush1.msra.mxu0 0.0
        %1206 = vmatprep.subr.mxu0 0.0
        %1207 = vmatpush1.msra.mxu0 0.0
        %1208 = vmatprep.subr.mxu0 0.0
        %1209 = vmatpush1.msra.mxu0 0.0
        %1210 = vmatprep.subr.mxu0 0.0
        %1211 = vmatpush1.msra.mxu0 0.0
        %1212 = vmatprep.subr.mxu0 0.0
        %1213 = vmatpush1.msra.mxu0 0.0
        %1214 = vmatprep.subr.mxu0 0.0
        %1215 = vmatpush1.msra.mxu0 0.0
        %1216 = vmatprep.subr.mxu0 0.0
        %1217 = vmatpush1.msra.mxu0 0.0
        %1218 = vmatprep.subr.mxu0 0.0
        %1219 = vmatpush1.msra.mxu0 0.0
        %1220 = vmatprep.subr.mxu0 0.0
        %1221 = vmatpush1.msra.mxu0 0.0
        %1222 = vmatprep.subr.mxu0 0.0
        %1223 = vmatpush1.msra.mxu0 0.0
        %1224 = vmatprep.subr.mxu0 0.0
        %1225 = vmatpush1.msra.mxu0 0.0
        %1226 = vmatprep.subr.mxu0 0.0
        %1227 = vmatpush1.msra.mxu0 0.0
        %1228 = vmatprep.subr.mxu0 0.0
        %1229 = vmatpush1.msra.mxu0 0.0
        %1230 = vmatprep.subr.mxu0 0.0
        %1231 = vmatpush1.msra.mxu0 0.0
        %1232 = vmatprep.subr.mxu0 0.0
        %1233 = vmatpush1.msra.mxu0 0.0
        %1234 = vmatprep.subr.mxu0 0.0
        %1235 = vmatpush1.msra.mxu0 0.0
        %1236 = vmatprep.subr.mxu0 0.0
        %1237 = vmatpush1.msra.mxu0 0.0
        %1238 = vmatprep.subr.mxu0 0.0
        %1239 = vmatpush1.msra.mxu0 0.0
        %1240 = vmatprep.subr.mxu0 0.0
        %1241 = vmatpush1.msra.mxu0 0.0
        %1242 = vmatprep.subr.mxu0 0.0
        %1243 = vmatpush1.msra.mxu0 0.0
        %1244 = vmatprep.subr.mxu0 0.0
        %1245 = vmatpush1.msra.mxu0 0.0
        %1246 = vmatprep.subr.mxu0 0.0
        %1247 = vmatpush1.msra.mxu0 0.0
        %1248 = vmatprep.subr.mxu0 0.0
        %1249 = vmatpush1.msra.mxu0 0.0
        %1250 = vmatprep.mubr.f32.mxu0 0.0
        %1251 = vmatmul.mubr.f32.gmra.mrb[0].mxu0 %v1181
        %v1252 = vpop.f32.mrb[0].mxu0
        %v1253 = vadd.f32 0.0, %v1252
        %v1254 = vpop.f32.mrb[0].mxu0
        %v1255 = vadd.f32 0.0, %v1254
        %1256 = vmatprep.mubr.f32.mxu0 0.0
        %1257 = vmatmul.mubr.f32.gmra.mrb[0].mxu0 %v1184
        %v1258 = vpop.f32.mrb[0].mxu0
        %v1259 = vadd.f32 0.0, %v1258
        %v1260 = vpop.f32.mrb[0].mxu0
        %v1261 = vadd.f32 0.0, %v1260
        %1262 = vdwg.mxu0
        %1263 = vmatprep.subr.mxu0 %v988
        %1264 = vmatpush1.msra.mxu0 %v987
        %1265 = vmatprep.subr.mxu0 %v996
        %1266 = vmatpush1.msra.mxu0 %v995
        %1267 = vmatprep.subr.mxu0 0.0
        %1268 = vmatpush1.msra.mxu0 0.0
        %1269 = vmatprep.subr.mxu0 0.0
        %1270 = vmatpush1.msra.mxu0 0.0
        %1271 = vmatprep.subr.mxu0 0.0
        %1272 = vmatpush1.msra.mxu0 0.0
        %1273 = vmatprep.subr.mxu0 0.0
        %1274 = vmatpush1.msra.mxu0 0.0
        %1275 = vmatprep.subr.mxu0 0.0
        %1276 = vmatpush1.msra.mxu0 0.0
        %1277 = vmatprep.subr.mxu0 0.0
        %1278 = vmatpush1.msra.mxu0 0.0
        %1279 = vmatprep.subr.mxu0 0.0
        %1280 = vmatpush1.msra.mxu0 0.0
        %1281 = vmatprep.subr.mxu0 0.0
        %1282 = vmatpush1.msra.mxu0 0.0
        %1283 = vmatprep.subr.mxu0 0.0
        %1284 = vmatpush1.msra.mxu0 0.0
        %1285 = vmatprep.subr.mxu0 0.0
        %1286 = vmatpush1.msra.mxu0 0.0
        %1287 = vmatprep.subr.mxu0 0.0
        %1288 = vmatpush1.msra.mxu0 0.0
        %1289 = vmatprep.subr.mxu0 0.0
        %1290 = vmatpush1.msra.mxu0 0.0
        %1291 = vmatprep.subr.mxu0 0.0
        %1292 = vmatpush1.msra.mxu0 0.0
        %1293 = vmatprep.subr.mxu0 0.0
        %1294 = vmatpush1.msra.mxu0 0.0
        %1295 = vmatprep.subr.mxu0 0.0
        %1296 = vmatpush1.msra.mxu0 0.0
        %1297 = vmatprep.subr.mxu0 0.0
        %1298 = vmatpush1.msra.mxu0 0.0
        %1299 = vmatprep.subr.mxu0 0.0
        %1300 = vmatpush1.msra.mxu0 0.0
        %1301 = vmatprep.subr.mxu0 0.0
        %1302 = vmatpush1.msra.mxu0 0.0
        %1303 = vmatprep.subr.mxu0 0.0
        %1304 = vmatpush1.msra.mxu0 0.0
        %1305 = vmatprep.subr.mxu0 0.0
        %1306 = vmatpush1.msra.mxu0 0.0
        %1307 = vmatprep.subr.mxu0 0.0
        %1308 = vmatpush1.msra.mxu0 0.0
        %1309 = vmatprep.subr.mxu0 0.0
        %1310 = vmatpush1.msra.mxu0 0.0
        %1311 = vmatprep.subr.mxu0 0.0
        %1312 = vmatpush1.msra.mxu0 0.0
        %1313 = vmatprep.subr.mxu0 0.0
        %1314 = vmatpush1.msra.mxu0 0.0
        %1315 = vmatprep.subr.mxu0 0.0
        %1316 = vmatpush1.msra.mxu0 0.0
        %1317 = vmatprep.subr.mxu0 0.0
        %1318 = vmatpush1.msra.mxu0 0.0
        %1319 = vmatprep.subr.mxu0 0.0
        %1320 = vmatpush1.msra.mxu0 0.0
        %1321 = vmatprep.subr.mxu0 0.0
        %1322 = vmatpush1.msra.mxu0 0.0
        %1323 = vmatprep.subr.mxu0 0.0
        %1324 = vmatpush1.msra.mxu0 0.0
        %1325 = vmatprep.subr.mxu0 0.0
        %1326 = vmatpush1.msra.mxu0 0.0
        %1327 = vmatprep.mubr.f32.mxu0 0.0
        %1328 = vmatmul.mubr.f32.gmra.mrb[0].mxu0 %v1181
        %v1329 = vpop.f32.mrb[0].mxu0
        %v1330 = vadd.f32 0.0, %v1329
        %v1331 = vpop.f32.mrb[0].mxu0
        %v1332 = vadd.f32 0.0, %v1331
        %1333 = vmatprep.mubr.f32.mxu0 0.0
        %1334 = vmatmul.mubr.f32.gmra.mrb[0].mxu0 %v1184
        %v1335 = vpop.f32.mrb[0].mxu0
        %v1336 = vadd.f32 0.0, %v1335
        %v1337 = vpop.f32.mrb[0].mxu0
        %v1338 = vadd.f32 0.0, %v1337
        %1339 = vdwg.mxu0
        %1340 = vmatprep.subr.mxu0 %v990
        %1341 = vmatpush1.msra.mxu0 %v989
        %1342 = vmatprep.subr.mxu0 %v998
        %1343 = vmatpush1.msra.mxu0 %v997
        %1344 = vmatprep.subr.mxu0 0.0
        %1345 = vmatpush1.msra.mxu0 0.0
        %1346 = vmatprep.subr.mxu0 0.0
        %1347 = vmatpush1.msra.mxu0 0.0
        %1348 = vmatprep.subr.mxu0 0.0
        %1349 = vmatpush1.msra.mxu0 0.0
        %1350 = vmatprep.subr.mxu0 0.0
        %1351 = vmatpush1.msra.mxu0 0.0
        %1352 = vmatprep.subr.mxu0 0.0
        %1353 = vmatpush1.msra.mxu0 0.0
        %1354 = vmatprep.subr.mxu0 0.0
        %1355 = vmatpush1.msra.mxu0 0.0
        %1356 = vmatprep.subr.mxu0 0.0
        %1357 = vmatpush1.msra.mxu0 0.0
        %1358 = vmatprep.subr.mxu0 0.0
        %1359 = vmatpush1.msra.mxu0 0.0
        %1360 = vmatprep.subr.mxu0 0.0
        %1361 = vmatpush1.msra.mxu0 0.0
        %1362 = vmatprep.subr.mxu0 0.0
        %1363 = vmatpush1.msra.mxu0 0.0
        %1364 = vmatprep.subr.mxu0 0.0
        %1365 = vmatpush1.msra.mxu0 0.0
        %1366 = vmatprep.subr.mxu0 0.0
        %1367 = vmatpush1.msra.mxu0 0.0
        %1368 = vmatprep.subr.mxu0 0.0
        %1369 = vmatpush1.msra.mxu0 0.0
        %1370 = vmatprep.subr.mxu0 0.0
        %1371 = vmatpush1.msra.mxu0 0.0
        %1372 = vmatprep.subr.mxu0 0.0
        %1373 = vmatpush1.msra.mxu0 0.0
        %1374 = vmatprep.subr.mxu0 0.0
        %1375 = vmatpush1.msra.mxu0 0.0
        %1376 = vmatprep.subr.mxu0 0.0
        %1377 = vmatpush1.msra.mxu0 0.0
        %1378 = vmatprep.subr.mxu0 0.0
        %1379 = vmatpush1.msra.mxu0 0.0
        %1380 = vmatprep.subr.mxu0 0.0
        %1381 = vmatpush1.msra.mxu0 0.0
        %1382 = vmatprep.subr.mxu0 0.0
        %1383 = vmatpush1.msra.mxu0 0.0
        %1384 = vmatprep.subr.mxu0 0.0
        %1385 = vmatpush1.msra.mxu0 0.0
        %1386 = vmatprep.subr.mxu0 0.0
        %1387 = vmatpush1.msra.mxu0 0.0
        %1388 = vmatprep.subr.mxu0 0.0
        %1389 = vmatpush1.msra.mxu0 0.0
        %1390 = vmatprep.subr.mxu0 0.0
        %1391 = vmatpush1.msra.mxu0 0.0
        %1392 = vmatprep.subr.mxu0 0.0
        %1393 = vmatpush1.msra.mxu0 0.0
        %1394 = vmatprep.subr.mxu0 0.0
        %1395 = vmatpush1.msra.mxu0 0.0
        %1396 = vmatprep.subr.mxu0 0.0
        %1397 = vmatpush1.msra.mxu0 0.0
        %1398 = vmatprep.subr.mxu0 0.0
        %1399 = vmatpush1.msra.mxu0 0.0
        %1400 = vmatprep.subr.mxu0 0.0
        %1401 = vmatpush1.msra.mxu0 0.0
        %1402 = vmatprep.subr.mxu0 0.0
        %1403 = vmatpush1.msra.mxu0 0.0
        %1404 = vmatprep.mubr.f32.mxu0 0.0
        %1405 = vmatmul.mubr.f32.gmra.mrb[0].mxu0 %v1181
        %v1406 = vpop.f32.mrb[0].mxu0
        %v1407 = vadd.f32 0.0, %v1406
        %v1408 = vpop.f32.mrb[0].mxu0
        %v1409 = vadd.f32 0.0, %v1408
        %1410 = vmatprep.mubr.f32.mxu0 0.0
        %1411 = vmatmul.mubr.f32.gmra.mrb[0].mxu0 %v1184
        %v1412 = vpop.f32.mrb[0].mxu0
        %v1413 = vadd.f32 0.0, %v1412
        %v1414 = vpop.f32.mrb[0].mxu0
        %v1415 = vadd.f32 0.0, %v1414
        %1416 = vdwg.mxu0
        %1417 = vmatprep.subr.mxu0 %v992
        %1418 = vmatpush1.msra.mxu0 %v991
        %1419 = vmatprep.subr.mxu0 %v1000
        %1420 = vmatpush1.msra.mxu0 %v999
        %1421 = vmatprep.subr.mxu0 0.0
        %1422 = vmatpush1.msra.mxu0 0.0
        %1423 = vmatprep.subr.mxu0 0.0
        %1424 = vmatpush1.msra.mxu0 0.0
        %1425 = vmatprep.subr.mxu0 0.0
        %1426 = vmatpush1.msra.mxu0 0.0
        %1427 = vmatprep.subr.mxu0 0.0
        %1428 = vmatpush1.msra.mxu0 0.0
        %1429 = vmatprep.subr.mxu0 0.0
        %1430 = vmatpush1.msra.mxu0 0.0
        %1431 = vmatprep.subr.mxu0 0.0
        %1432 = vmatpush1.msra.mxu0 0.0
        %1433 = vmatprep.subr.mxu0 0.0
        %1434 = vmatpush1.msra.mxu0 0.0
        %1435 = vmatprep.subr.mxu0 0.0
        %1436 = vmatpush1.msra.mxu0 0.0
        %1437 = vmatprep.subr.mxu0 0.0
        %1438 = vmatpush1.msra.mxu0 0.0
        %1439 = vmatprep.subr.mxu0 0.0
        %1440 = vmatpush1.msra.mxu0 0.0
        %1441 = vmatprep.subr.mxu0 0.0
        %1442 = vmatpush1.msra.mxu0 0.0
        %1443 = vmatprep.subr.mxu0 0.0
        %1444 = vmatpush1.msra.mxu0 0.0
        %1445 = vmatprep.subr.mxu0 0.0
        %1446 = vmatpush1.msra.mxu0 0.0
        %1447 = vmatprep.subr.mxu0 0.0
        %1448 = vmatpush1.msra.mxu0 0.0
        %1449 = vmatprep.subr.mxu0 0.0
        %1450 = vmatpush1.msra.mxu0 0.0
        %1451 = vmatprep.subr.mxu0 0.0
        %1452 = vmatpush1.msra.mxu0 0.0
        %1453 = vmatprep.subr.mxu0 0.0
        %1454 = vmatpush1.msra.mxu0 0.0
        %1455 = vmatprep.subr.mxu0 0.0
        %1456 = vmatpush1.msra.mxu0 0.0
        %1457 = vmatprep.subr.mxu0 0.0
        %1458 = vmatpush1.msra.mxu0 0.0
        %1459 = vmatprep.subr.mxu0 0.0
        %1460 = vmatpush1.msra.mxu0 0.0
        %1461 = vmatprep.subr.mxu0 0.0
        %1462 = vmatpush1.msra.mxu0 0.0
        %1463 = vmatprep.subr.mxu0 0.0
        %1464 = vmatpush1.msra.mxu0 0.0
        %1465 = vmatprep.subr.mxu0 0.0
        %1466 = vmatpush1.msra.mxu0 0.0
        %1467 = vmatprep.subr.mxu0 0.0
        %1468 = vmatpush1.msra.mxu0 0.0
        %1469 = vmatprep.subr.mxu0 0.0
        %1470 = vmatpush1.msra.mxu0 0.0
        %1471 = vmatprep.subr.mxu0 0.0
        %1472 = vmatpush1.msra.mxu0 0.0
        %1473 = vmatprep.subr.mxu0 0.0
        %1474 = vmatpush1.msra.mxu0 0.0
        %1475 = vmatprep.subr.mxu0 0.0
        %1476 = vmatpush1.msra.mxu0 0.0
        %1477 = vmatprep.subr.mxu0 0.0
        %1478 = vmatpush1.msra.mxu0 0.0
        %1479 = vmatprep.subr.mxu0 0.0
        %1480 = vmatpush1.msra.mxu0 0.0
        %1481 = vmatprep.mubr.f32.mxu0 0.0
        %1482 = vmatmul.mubr.f32.gmra.mrb[0].mxu0 %v1181
        %v1483 = vpop.f32.mrb[0].mxu0
        %v1484 = vadd.f32 0.0, %v1483
        %v1485 = vpop.f32.mrb[0].mxu0
        %v1486 = vadd.f32 0.0, %v1485
        %1487 = vmatprep.mubr.f32.mxu0 0.0
        %1488 = vmatmul.mubr.f32.gmra.mrb[0].mxu0 %v1184
        %v1489 = vpop.f32.mrb[0].mxu0
        %v1490 = vadd.f32 0.0, %v1489
        %v1491 = vpop.f32.mrb[0].mxu0
        %v1492 = vadd.f32 0.0, %v1491
        %1493 = vdwg.mxu0
        %v1495 = vsel %vm1179, %v1173, 0
        %v1498 = vsel %vm1179, %v1174, 0
        %1500 = vmatprep.subr.mxu0 %v1052
        %1501 = vmatpush1.msra.mxu0 %v1051
        %1502 = vmatprep.subr.mxu0 %v1060
        %1503 = vmatpush1.msra.mxu0 %v1059
        %1504 = vmatprep.subr.mxu0 0.0
        %1505 = vmatpush1.msra.mxu0 0.0
        %1506 = vmatprep.subr.mxu0 0.0
        %1507 = vmatpush1.msra.mxu0 0.0
        %1508 = vmatprep.subr.mxu0 0.0
        %1509 = vmatpush1.msra.mxu0 0.0
        %1510 = vmatprep.subr.mxu0 0.0
        %1511 = vmatpush1.msra.mxu0 0.0
        %1512 = vmatprep.subr.mxu0 0.0
        %1513 = vmatpush1.msra.mxu0 0.0
        %1514 = vmatprep.subr.mxu0 0.0
        %1515 = vmatpush1.msra.mxu0 0.0
        %1516 = vmatprep.subr.mxu0 0.0
        %1517 = vmatpush1.msra.mxu0 0.0
        %1518 = vmatprep.subr.mxu0 0.0
        %1519 = vmatpush1.msra.mxu0 0.0
        %1520 = vmatprep.subr.mxu0 0.0
        %1521 = vmatpush1.msra.mxu0 0.0
        %1522 = vmatprep.subr.mxu0 0.0
        %1523 = vmatpush1.msra.mxu0 0.0
        %1524 = vmatprep.subr.mxu0 0.0
        %1525 = vmatpush1.msra.mxu0 0.0
        %1526 = vmatprep.subr.mxu0 0.0
        %1527 = vmatpush1.msra.mxu0 0.0
        %1528 = vmatprep.subr.mxu0 0.0
        %1529 = vmatpush1.msra.mxu0 0.0
        %1530 = vmatprep.subr.mxu0 0.0
        %1531 = vmatpush1.msra.mxu0 0.0
        %1532 = vmatprep.subr.mxu0 0.0
        %1533 = vmatpush1.msra.mxu0 0.0
        %1534 = vmatprep.subr.mxu0 0.0
        %1535 = vmatpush1.msra.mxu0 0.0
        %1536 = vmatprep.subr.mxu0 0.0
        %1537 = vmatpush1.msra.mxu0 0.0
        %1538 = vmatprep.subr.mxu0 0.0
        %1539 = vmatpush1.msra.mxu0 0.0
        %1540 = vmatprep.subr.mxu0 0.0
        %1541 = vmatpush1.msra.mxu0 0.0
        %1542 = vmatprep.subr.mxu0 0.0
        %1543 = vmatpush1.msra.mxu0 0.0
        %1544 = vmatprep.subr.mxu0 0.0
        %1545 = vmatpush1.msra.mxu0 0.0
        %1546 = vmatprep.subr.mxu0 0.0
        %1547 = vmatpush1.msra.mxu0 0.0
        %1548 = vmatprep.subr.mxu0 0.0
        %1549 = vmatpush1.msra.mxu0 0.0
        %1550 = vmatprep.subr.mxu0 0.0
        %1551 = vmatpush1.msra.mxu0 0.0
        %1552 = vmatprep.subr.mxu0 0.0
        %1553 = vmatpush1.msra.mxu0 0.0
        %1554 = vmatprep.subr.mxu0 0.0
        %1555 = vmatpush1.msra.mxu0 0.0
        %1556 = vmatprep.subr.mxu0 0.0
        %1557 = vmatpush1.msra.mxu0 0.0
        %1558 = vmatprep.subr.mxu0 0.0
        %1559 = vmatpush1.msra.mxu0 0.0
        %1560 = vmatprep.subr.mxu0 0.0
        %1561 = vmatpush1.msra.mxu0 0.0
        %1562 = vmatprep.subr.mxu0 0.0
        %1563 = vmatpush1.msra.mxu0 0.0
        %1564 = vmatprep.mubr.f32.mxu0 0.0
        %1565 = vmatmul.mubr.f32.gmra.mrb[0].mxu0 %v1495
        %v1566 = vpop.f32.mrb[0].mxu0
        %v1567 = vadd.f32 %v1253, %v1566
        %v1568 = vpop.f32.mrb[0].mxu0
        %v1569 = vadd.f32 %v1255, %v1568
        %1570 = vmatprep.mubr.f32.mxu0 0.0
        %1571 = vmatmul.mubr.f32.gmra.mrb[0].mxu0 %v1498
        %v1572 = vpop.f32.mrb[0].mxu0
        %v1573 = vadd.f32 %v1259, %v1572
        %v1574 = vpop.f32.mrb[0].mxu0
        %v1575 = vadd.f32 %v1261, %v1574
        %1576 = vdwg.mxu0
        %1577 = vmatprep.subr.mxu0 %v1054
        %1578 = vmatpush1.msra.mxu0 %v1053
        %1579 = vmatprep.subr.mxu0 %v1062
        %1580 = vmatpush1.msra.mxu0 %v1061
        %1581 = vmatprep.subr.mxu0 0.0
        %1582 = vmatpush1.msra.mxu0 0.0
        %1583 = vmatprep.subr.mxu0 0.0
        %1584 = vmatpush1.msra.mxu0 0.0
        %1585 = vmatprep.subr.mxu0 0.0
        %1586 = vmatpush1.msra.mxu0 0.0
        %1587 = vmatprep.subr.mxu0 0.0
        %1588 = vmatpush1.msra.mxu0 0.0
        %1589 = vmatprep.subr.mxu0 0.0
        %1590 = vmatpush1.msra.mxu0 0.0
        %1591 = vmatprep.subr.mxu0 0.0
        %1592 = vmatpush1.msra.mxu0 0.0
        %1593 = vmatprep.subr.mxu0 0.0
        %1594 = vmatpush1.msra.mxu0 0.0
        %1595 = vmatprep.subr.mxu0 0.0
        %1596 = vmatpush1.msra.mxu0 0.0
        %1597 = vmatprep.subr.mxu0 0.0
        %1598 = vmatpush1.msra.mxu0 0.0
        %1599 = vmatprep.subr.mxu0 0.0
        %1600 = vmatpush1.msra.mxu0 0.0
        %1601 = vmatprep.subr.mxu0 0.0
        %1602 = vmatpush1.msra.mxu0 0.0
        %1603 = vmatprep.subr.mxu0 0.0
        %1604 = vmatpush1.msra.mxu0 0.0
        %1605 = vmatprep.subr.mxu0 0.0
        %1606 = vmatpush1.msra.mxu0 0.0
        %1607 = vmatprep.subr.mxu0 0.0
        %1608 = vmatpush1.msra.mxu0 0.0
        %1609 = vmatprep.subr.mxu0 0.0
        %1610 = vmatpush1.msra.mxu0 0.0
        %1611 = vmatprep.subr.mxu0 0.0
        %1612 = vmatpush1.msra.mxu0 0.0
        %1613 = vmatprep.subr.mxu0 0.0
        %1614 = vmatpush1.msra.mxu0 0.0
        %1615 = vmatprep.subr.mxu0 0.0
        %1616 = vmatpush1.msra.mxu0 0.0
        %1617 = vmatprep.subr.mxu0 0.0
        %1618 = vmatpush1.msra.mxu0 0.0
        %1619 = vmatprep.subr.mxu0 0.0
        %1620 = vmatpush1.msra.mxu0 0.0
        %1621 = vmatprep.subr.mxu0 0.0
        %1622 = vmatpush1.msra.mxu0 0.0
        %1623 = vmatprep.subr.mxu0 0.0
        %1624 = vmatpush1.msra.mxu0 0.0
        %1625 = vmatprep.subr.mxu0 0.0
        %1626 = vmatpush1.msra.mxu0 0.0
        %1627 = vmatprep.subr.mxu0 0.0
        %1628 = vmatpush1.msra.mxu0 0.0
        %1629 = vmatprep.subr.mxu0 0.0
        %1630 = vmatpush1.msra.mxu0 0.0
        %1631 = vmatprep.subr.mxu0 0.0
        %1632 = vmatpush1.msra.mxu0 0.0
        %1633 = vmatprep.subr.mxu0 0.0
        %1634 = vmatpush1.msra.mxu0 0.0
        %1635 = vmatprep.subr.mxu0 0.0
        %1636 = vmatpush1.msra.mxu0 0.0
        %1637 = vmatprep.subr.mxu0 0.0
        %1638 = vmatpush1.msra.mxu0 0.0
        %1639 = vmatprep.subr.mxu0 0.0
        %1640 = vmatpush1.msra.mxu0 0.0
        %1641 = vmatprep.mubr.f32.mxu0 0.0
        %1642 = vmatmul.mubr.f32.gmra.mrb[0].mxu0 %v1495
        %v1643 = vpop.f32.mrb[0].mxu0
        %v1644 = vadd.f32 %v1330, %v1643
        %v1645 = vpop.f32.mrb[0].mxu0
        %v1646 = vadd.f32 %v1332, %v1645
        %1647 = vmatprep.mubr.f32.mxu0 0.0
        %1648 = vmatmul.mubr.f32.gmra.mrb[0].mxu0 %v1498
        %v1649 = vpop.f32.mrb[0].mxu0
        %v1650 = vadd.f32 %v1336, %v1649
        %v1651 = vpop.f32.mrb[0].mxu0
        %v1652 = vadd.f32 %v1338, %v1651
        %1653 = vdwg.mxu0
        %1654 = vmatprep.subr.mxu0 %v1056
        %1655 = vmatpush1.msra.mxu0 %v1055
        %1656 = vmatprep.subr.mxu0 %v1064
        %1657 = vmatpush1.msra.mxu0 %v1063
        %1658 = vmatprep.subr.mxu0 0.0
        %1659 = vmatpush1.msra.mxu0 0.0
        %1660 = vmatprep.subr.mxu0 0.0
        %1661 = vmatpush1.msra.mxu0 0.0
        %1662 = vmatprep.subr.mxu0 0.0
        %1663 = vmatpush1.msra.mxu0 0.0
        %1664 = vmatprep.subr.mxu0 0.0
        %1665 = vmatpush1.msra.mxu0 0.0
        %1666 = vmatprep.subr.mxu0 0.0
        %1667 = vmatpush1.msra.mxu0 0.0
        %1668 = vmatprep.subr.mxu0 0.0
        %1669 = vmatpush1.msra.mxu0 0.0
        %1670 = vmatprep.subr.mxu0 0.0
        %1671 = vmatpush1.msra.mxu0 0.0
        %1672 = vmatprep.subr.mxu0 0.0
        %1673 = vmatpush1.msra.mxu0 0.0
        %1674 = vmatprep.subr.mxu0 0.0
        %1675 = vmatpush1.msra.mxu0 0.0
        %1676 = vmatprep.subr.mxu0 0.0
        %1677 = vmatpush1.msra.mxu0 0.0
        %1678 = vmatprep.subr.mxu0 0.0
        %1679 = vmatpush1.msra.mxu0 0.0
        %1680 = vmatprep.subr.mxu0 0.0
        %1681 = vmatpush1.msra.mxu0 0.0
        %1682 = vmatprep.subr.mxu0 0.0
        %1683 = vmatpush1.msra.mxu0 0.0
        %1684 = vmatprep.subr.mxu0 0.0
        %1685 = vmatpush1.msra.mxu0 0.0
        %1686 = vmatprep.subr.mxu0 0.0
        %1687 = vmatpush1.msra.mxu0 0.0
        %1688 = vmatprep.subr.mxu0 0.0
        %1689 = vmatpush1.msra.mxu0 0.0
        %1690 = vmatprep.subr.mxu0 0.0
        %1691 = vmatpush1.msra.mxu0 0.0
        %1692 = vmatprep.subr.mxu0 0.0
        %1693 = vmatpush1.msra.mxu0 0.0
        %1694 = vmatprep.subr.mxu0 0.0
        %1695 = vmatpush1.msra.mxu0 0.0
        %1696 = vmatprep.subr.mxu0 0.0
        %1697 = vmatpush1.msra.mxu0 0.0
        %1698 = vmatprep.subr.mxu0 0.0
        %1699 = vmatpush1.msra.mxu0 0.0
        %1700 = vmatprep.subr.mxu0 0.0
        %1701 = vmatpush1.msra.mxu0 0.0
        %1702 = vmatprep.subr.mxu0 0.0
        %1703 = vmatpush1.msra.mxu0 0.0
        %1704 = vmatprep.subr.mxu0 0.0
        %1705 = vmatpush1.msra.mxu0 0.0
        %1706 = vmatprep.subr.mxu0 0.0
        %1707 = vmatpush1.msra.mxu0 0.0
        %1708 = vmatprep.subr.mxu0 0.0
        %1709 = vmatpush1.msra.mxu0 0.0
        %1710 = vmatprep.subr.mxu0 0.0
        %1711 = vmatpush1.msra.mxu0 0.0
        %1712 = vmatprep.subr.mxu0 0.0
        %1713 = vmatpush1.msra.mxu0 0.0
        %1714 = vmatprep.subr.mxu0 0.0
        %1715 = vmatpush1.msra.mxu0 0.0
        %1716 = vmatprep.subr.mxu0 0.0
        %1717 = vmatpush1.msra.mxu0 0.0
        %1718 = vmatprep.mubr.f32.mxu0 0.0
        %1719 = vmatmul.mubr.f32.gmra.mrb[0].mxu0 %v1495
        %v1720 = vpop.f32.mrb[0].mxu0
        %v1721 = vadd.f32 %v1407, %v1720
        %v1722 = vpop.f32.mrb[0].mxu0
        %v1723 = vadd.f32 %v1409, %v1722
        %1724 = vmatprep.mubr.f32.mxu0 0.0
        %1725 = vmatmul.mubr.f32.gmra.mrb[0].mxu0 %v1498
        %v1726 = vpop.f32.mrb[0].mxu0
        %v1727 = vadd.f32 %v1413, %v1726
        %v1728 = vpop.f32.mrb[0].mxu0
        %v1729 = vadd.f32 %v1415, %v1728
        %1730 = vdwg.mxu0
        %1731 = vmatprep.subr.mxu0 %v1058
        %1732 = vmatpush1.msra.mxu0 %v1057
        %1733 = vmatprep.subr.mxu0 %v1066
        %1734 = vmatpush1.msra.mxu0 %v1065
        %1735 = vmatprep.subr.mxu0 0.0
        %1736 = vmatpush1.msra.mxu0 0.0
        %1737 = vmatprep.subr.mxu0 0.0
        %1738 = vmatpush1.msra.mxu0 0.0
        %1739 = vmatprep.subr.mxu0 0.0
        %1740 = vmatpush1.msra.mxu0 0.0
        %1741 = vmatprep.subr.mxu0 0.0
        %1742 = vmatpush1.msra.mxu0 0.0
        %1743 = vmatprep.subr.mxu0 0.0
        %1744 = vmatpush1.msra.mxu0 0.0
        %1745 = vmatprep.subr.mxu0 0.0
        %1746 = vmatpush1.msra.mxu0 0.0
        %1747 = vmatprep.subr.mxu0 0.0
        %1748 = vmatpush1.msra.mxu0 0.0
        %1749 = vmatprep.subr.mxu0 0.0
        %1750 = vmatpush1.msra.mxu0 0.0
        %1751 = vmatprep.subr.mxu0 0.0
        %1752 = vmatpush1.msra.mxu0 0.0
        %1753 = vmatprep.subr.mxu0 0.0
        %1754 = vmatpush1.msra.mxu0 0.0
        %1755 = vmatprep.subr.mxu0 0.0
        %1756 = vmatpush1.msra.mxu0 0.0
        %1757 = vmatprep.subr.mxu0 0.0
        %1758 = vmatpush1.msra.mxu0 0.0
        %1759 = vmatprep.subr.mxu0 0.0
        %1760 = vmatpush1.msra.mxu0 0.0
        %1761 = vmatprep.subr.mxu0 0.0
        %1762 = vmatpush1.msra.mxu0 0.0
        %1763 = vmatprep.subr.mxu0 0.0
        %1764 = vmatpush1.msra.mxu0 0.0
        %1765 = vmatprep.subr.mxu0 0.0
        %1766 = vmatpush1.msra.mxu0 0.0
        %1767 = vmatprep.subr.mxu0 0.0
        %1768 = vmatpush1.msra.mxu0 0.0
        %1769 = vmatprep.subr.mxu0 0.0
        %1770 = vmatpush1.msra.mxu0 0.0
        %1771 = vmatprep.subr.mxu0 0.0
        %1772 = vmatpush1.msra.mxu0 0.0
        %1773 = vmatprep.subr.mxu0 0.0
        %1774 = vmatpush1.msra.mxu0 0.0
        %1775 = vmatprep.subr.mxu0 0.0
        %1776 = vmatpush1.msra.mxu0 0.0
        %1777 = vmatprep.subr.mxu0 0.0
        %1778 = vmatpush1.msra.mxu0 0.0
        %1779 = vmatprep.subr.mxu0 0.0
        %1780 = vmatpush1.msra.mxu0 0.0
        %1781 = vmatprep.subr.mxu0 0.0
        %1782 = vmatpush1.msra.mxu0 0.0
        %1783 = vmatprep.subr.mxu0 0.0
        %1784 = vmatpush1.msra.mxu0 0.0
        %1785 = vmatprep.subr.mxu0 0.0
        %1786 = vmatpush1.msra.mxu0 0.0
        %1787 = vmatprep.subr.mxu0 0.0
        %1788 = vmatpush1.msra.mxu0 0.0
        %1789 = vmatprep.subr.mxu0 0.0
        %1790 = vmatpush1.msra.mxu0 0.0
        %1791 = vmatprep.subr.mxu0 0.0
        %1792 = vmatpush1.msra.mxu0 0.0
        %1793 = vmatprep.subr.mxu0 0.0
        %1794 = vmatpush1.msra.mxu0 0.0
        %1795 = vmatprep.mubr.f32.mxu0 0.0
        %1796 = vmatmul.mubr.f32.gmra.mrb[0].mxu0 %v1495
        %v1797 = vpop.f32.mrb[0].mxu0
        %v1798 = vadd.f32 %v1484, %v1797
        %v1799 = vpop.f32.mrb[0].mxu0
        %v1800 = vadd.f32 %v1486, %v1799
        %1801 = vmatprep.mubr.f32.mxu0 0.0
        %1802 = vmatmul.mubr.f32.gmra.mrb[0].mxu0 %v1498
        %v1803 = vpop.f32.mrb[0].mxu0
        %v1804 = vadd.f32 %v1490, %v1803
        %v1805 = vpop.f32.mrb[0].mxu0
        %v1806 = vadd.f32 %v1492, %v1805
        %1807 = vdwg.mxu0
        %v1809 = vsel %vm1179, %v1177, 0
        %v1812 = vsel %vm1179, %v1178, 0
        %1814 = vmatprep.subr.mxu0 %v1158
        %1815 = vmatpush1.msra.mxu0 %v1157
        %1816 = vmatprep.subr.mxu0 %v1166
        %1817 = vmatpush1.msra.mxu0 %v1165
        %1818 = vmatprep.subr.mxu0 0.0
        %1819 = vmatpush1.msra.mxu0 0.0
        %1820 = vmatprep.subr.mxu0 0.0
        %1821 = vmatpush1.msra.mxu0 0.0
        %1822 = vmatprep.subr.mxu0 0.0
        %1823 = vmatpush1.msra.mxu0 0.0
        %1824 = vmatprep.subr.mxu0 0.0
        %1825 = vmatpush1.msra.mxu0 0.0
        %1826 = vmatprep.subr.mxu0 0.0
        %1827 = vmatpush1.msra.mxu0 0.0
        %1828 = vmatprep.subr.mxu0 0.0
        %1829 = vmatpush1.msra.mxu0 0.0
        %1830 = vmatprep.subr.mxu0 0.0
        %1831 = vmatpush1.msra.mxu0 0.0
        %1832 = vmatprep.subr.mxu0 0.0
        %1833 = vmatpush1.msra.mxu0 0.0
        %1834 = vmatprep.subr.mxu0 0.0
        %1835 = vmatpush1.msra.mxu0 0.0
        %1836 = vmatprep.subr.mxu0 0.0
        %1837 = vmatpush1.msra.mxu0 0.0
        %1838 = vmatprep.subr.mxu0 0.0
        %1839 = vmatpush1.msra.mxu0 0.0
        %1840 = vmatprep.subr.mxu0 0.0
        %1841 = vmatpush1.msra.mxu0 0.0
        %1842 = vmatprep.subr.mxu0 0.0
        %1843 = vmatpush1.msra.mxu0 0.0
        %1844 = vmatprep.subr.mxu0 0.0
        %1845 = vmatpush1.msra.mxu0 0.0
        %1846 = vmatprep.subr.mxu0 0.0
        %1847 = vmatpush1.msra.mxu0 0.0
        %1848 = vmatprep.subr.mxu0 0.0
        %1849 = vmatpush1.msra.mxu0 0.0
        %1850 = vmatprep.subr.mxu0 0.0
        %1851 = vmatpush1.msra.mxu0 0.0
        %1852 = vmatprep.subr.mxu0 0.0
        %1853 = vmatpush1.msra.mxu0 0.0
        %1854 = vmatprep.subr.mxu0 0.0
        %1855 = vmatpush1.msra.mxu0 0.0
        %1856 = vmatprep.subr.mxu0 0.0
        %1857 = vmatpush1.msra.mxu0 0.0
        %1858 = vmatprep.subr.mxu0 0.0
        %1859 = vmatpush1.msra.mxu0 0.0
        %1860 = vmatprep.subr.mxu0 0.0
        %1861 = vmatpush1.msra.mxu0 0.0
        %1862 = vmatprep.subr.mxu0 0.0
        %1863 = vmatpush1.msra.mxu0 0.0
        %1864 = vmatprep.subr.mxu0 0.0
        %1865 = vmatpush1.msra.mxu0 0.0
        %1866 = vmatprep.subr.mxu0 0.0
        %1867 = vmatpush1.msra.mxu0 0.0
        %1868 = vmatprep.subr.mxu0 0.0
        %1869 = vmatpush1.msra.mxu0 0.0
        %1870 = vmatprep.subr.mxu0 0.0
        %1871 = vmatpush1.msra.mxu0 0.0
        %1872 = vmatprep.subr.mxu0 0.0
        %1873 = vmatpush1.msra.mxu0 0.0
        %1874 = vmatprep.subr.mxu0 0.0
        %1875 = vmatpush1.msra.mxu0 0.0
        %1876 = vmatprep.subr.mxu0 0.0
        %1877 = vmatpush1.msra.mxu0 0.0
        %1878 = vmatprep.mubr.f32.mxu0 0.0
        %1879 = vmatmul.mubr.f32.gmra.mrb[0].mxu0 %v1809
        %v1880 = vpop.f32.mrb[0].mxu0
        %v1881 = vadd.f32 0.0, %v1880
        %v1882 = vpop.f32.mrb[0].mxu0
        %v1883 = vadd.f32 0.0, %v1882
        %1884 = vmatprep.mubr.f32.mxu0 0.0
        %1885 = vmatmul.mubr.f32.gmra.mrb[0].mxu0 %v1812
        %v1886 = vpop.f32.mrb[0].mxu0
        %v1887 = vadd.f32 0.0, %v1886
        %v1888 = vpop.f32.mrb[0].mxu0
        %v1889 = vadd.f32 0.0, %v1888
        %1890 = vdwg.mxu0
        %1891 = vmatprep.subr.mxu0 %v1160
        %1892 = vmatpush1.msra.mxu0 %v1159
        %1893 = vmatprep.subr.mxu0 %v1168
        %1894 = vmatpush1.msra.mxu0 %v1167
        %1895 = vmatprep.subr.mxu0 0.0
        %1896 = vmatpush1.msra.mxu0 0.0
        %1897 = vmatprep.subr.mxu0 0.0
        %1898 = vmatpush1.msra.mxu0 0.0
        %1899 = vmatprep.subr.mxu0 0.0
        %1900 = vmatpush1.msra.mxu0 0.0
        %1901 = vmatprep.subr.mxu0 0.0
        %1902 = vmatpush1.msra.mxu0 0.0
        %1903 = vmatprep.subr.mxu0 0.0
        %1904 = vmatpush1.msra.mxu0 0.0
        %1905 = vmatprep.subr.mxu0 0.0
        %1906 = vmatpush1.msra.mxu0 0.0
        %1907 = vmatprep.subr.mxu0 0.0
        %1908 = vmatpush1.msra.mxu0 0.0
        %1909 = vmatprep.subr.mxu0 0.0
        %1910 = vmatpush1.msra.mxu0 0.0
        %1911 = vmatprep.subr.mxu0 0.0
        %1912 = vmatpush1.msra.mxu0 0.0
        %1913 = vmatprep.subr.mxu0 0.0
        %1914 = vmatpush1.msra.mxu0 0.0
        %1915 = vmatprep.subr.mxu0 0.0
        %1916 = vmatpush1.msra.mxu0 0.0
        %1917 = vmatprep.subr.mxu0 0.0
        %1918 = vmatpush1.msra.mxu0 0.0
        %1919 = vmatprep.subr.mxu0 0.0
        %1920 = vmatpush1.msra.mxu0 0.0
        %1921 = vmatprep.subr.mxu0 0.0
        %1922 = vmatpush1.msra.mxu0 0.0
        %1923 = vmatprep.subr.mxu0 0.0
        %1924 = vmatpush1.msra.mxu0 0.0
        %1925 = vmatprep.subr.mxu0 0.0
        %1926 = vmatpush1.msra.mxu0 0.0
        %1927 = vmatprep.subr.mxu0 0.0
        %1928 = vmatpush1.msra.mxu0 0.0
        %1929 = vmatprep.subr.mxu0 0.0
        %1930 = vmatpush1.msra.mxu0 0.0
        %1931 = vmatprep.subr.mxu0 0.0
        %1932 = vmatpush1.msra.mxu0 0.0
        %1933 = vmatprep.subr.mxu0 0.0
        %1934 = vmatpush1.msra.mxu0 0.0
        %1935 = vmatprep.subr.mxu0 0.0
        %1936 = vmatpush1.msra.mxu0 0.0
        %1937 = vmatprep.subr.mxu0 0.0
        %1938 = vmatpush1.msra.mxu0 0.0
        %1939 = vmatprep.subr.mxu0 0.0
        %1940 = vmatpush1.msra.mxu0 0.0
        %1941 = vmatprep.subr.mxu0 0.0
        %1942 = vmatpush1.msra.mxu0 0.0
        %1943 = vmatprep.subr.mxu0 0.0
        %1944 = vmatpush1.msra.mxu0 0.0
        %1945 = vmatprep.subr.mxu0 0.0
        %1946 = vmatpush1.msra.mxu0 0.0
        %1947 = vmatprep.subr.mxu0 0.0
        %1948 = vmatpush1.msra.mxu0 0.0
        %1949 = vmatprep.subr.mxu0 0.0
        %1950 = vmatpush1.msra.mxu0 0.0
        %1951 = vmatprep.subr.mxu0 0.0
        %1952 = vmatpush1.msra.mxu0 0.0
        %1953 = vmatprep.subr.mxu0 0.0
        %1954 = vmatpush1.msra.mxu0 0.0
        %1955 = vmatprep.mubr.f32.mxu0 0.0
        %1956 = vmatmul.mubr.f32.gmra.mrb[0].mxu0 %v1809
        %v1957 = vpop.f32.mrb[0].mxu0
        %v1958 = vadd.f32 0.0, %v1957
        %v1959 = vpop.f32.mrb[0].mxu0
        %v1960 = vadd.f32 0.0, %v1959
        %1961 = vmatprep.mubr.f32.mxu0 0.0
        %1962 = vmatmul.mubr.f32.gmra.mrb[0].mxu0 %v1812
        %v1963 = vpop.f32.mrb[0].mxu0
        %v1964 = vadd.f32 0.0, %v1963
        %v1965 = vpop.f32.mrb[0].mxu0
        %v1966 = vadd.f32 0.0, %v1965
        %1967 = vdwg.mxu0
        %1968 = vmatprep.subr.mxu0 %v1162
        %1969 = vmatpush1.msra.mxu0 %v1161
        %1970 = vmatprep.subr.mxu0 %v1170
        %1971 = vmatpush1.msra.mxu0 %v1169
        %1972 = vmatprep.subr.mxu0 0.0
        %1973 = vmatpush1.msra.mxu0 0.0
        %1974 = vmatprep.subr.mxu0 0.0
        %1975 = vmatpush1.msra.mxu0 0.0
        %1976 = vmatprep.subr.mxu0 0.0
        %1977 = vmatpush1.msra.mxu0 0.0
        %1978 = vmatprep.subr.mxu0 0.0
        %1979 = vmatpush1.msra.mxu0 0.0
        %1980 = vmatprep.subr.mxu0 0.0
        %1981 = vmatpush1.msra.mxu0 0.0
        %1982 = vmatprep.subr.mxu0 0.0
        %1983 = vmatpush1.msra.mxu0 0.0
        %1984 = vmatprep.subr.mxu0 0.0
        %1985 = vmatpush1.msra.mxu0 0.0
        %1986 = vmatprep.subr.mxu0 0.0
        %1987 = vmatpush1.msra.mxu0 0.0
        %1988 = vmatprep.subr.mxu0 0.0
        %1989 = vmatpush1.msra.mxu0 0.0
        %1990 = vmatprep.subr.mxu0 0.0
        %1991 = vmatpush1.msra.mxu0 0.0
        %1992 = vmatprep.subr.mxu0 0.0
        %1993 = vmatpush1.msra.mxu0 0.0
        %1994 = vmatprep.subr.mxu0 0.0
        %1995 = vmatpush1.msra.mxu0 0.0
        %1996 = vmatprep.subr.mxu0 0.0
        %1997 = vmatpush1.msra.mxu0 0.0
        %1998 = vmatprep.subr.mxu0 0.0
        %1999 = vmatpush1.msra.mxu0 0.0
        %2000 = vmatprep.subr.mxu0 0.0
        %2001 = vmatpush1.msra.mxu0 0.0
        %2002 = vmatprep.subr.mxu0 0.0
        %2003 = vmatpush1.msra.mxu0 0.0
        %2004 = vmatprep.subr.mxu0 0.0
        %2005 = vmatpush1.msra.mxu0 0.0
        %2006 = vmatprep.subr.mxu0 0.0
        %2007 = vmatpush1.msra.mxu0 0.0
        %2008 = vmatprep.subr.mxu0 0.0
        %2009 = vmatpush1.msra.mxu0 0.0
        %2010 = vmatprep.subr.mxu0 0.0
        %2011 = vmatpush1.msra.mxu0 0.0
        %2012 = vmatprep.subr.mxu0 0.0
        %2013 = vmatpush1.msra.mxu0 0.0
        %2014 = vmatprep.subr.mxu0 0.0
        %2015 = vmatpush1.msra.mxu0 0.0
        %2016 = vmatprep.subr.mxu0 0.0
        %2017 = vmatpush1.msra.mxu0 0.0
        %2018 = vmatprep.subr.mxu0 0.0
        %2019 = vmatpush1.msra.mxu0 0.0
        %2020 = vmatprep.subr.mxu0 0.0
        %2021 = vmatpush1.msra.mxu0 0.0
        %2022 = vmatprep.subr.mxu0 0.0
        %2023 = vmatpush1.msra.mxu0 0.0
        %2024 = vmatprep.subr.mxu0 0.0
        %2025 = vmatpush1.msra.mxu0 0.0
        %2026 = vmatprep.subr.mxu0 0.0
        %2027 = vmatpush1.msra.mxu0 0.0
        %2028 = vmatprep.subr.mxu0 0.0
        %2029 = vmatpush1.msra.mxu0 0.0
        %2030 = vmatprep.subr.mxu0 0.0
        %2031 = vmatpush1.msra.mxu0 0.0
        %2032 = vmatprep.mubr.f32.mxu0 0.0
        %2033 = vmatmul.mubr.f32.gmra.mrb[0].mxu0 %v1809
        %v2034 = vpop.f32.mrb[0].mxu0
        %v2035 = vadd.f32 0.0, %v2034
        %v2036 = vpop.f32.mrb[0].mxu0
        %v2037 = vadd.f32 0.0, %v2036
        %2038 = vmatprep.mubr.f32.mxu0 0.0
        %2039 = vmatmul.mubr.f32.gmra.mrb[0].mxu0 %v1812
        %v2040 = vpop.f32.mrb[0].mxu0
        %v2041 = vadd.f32 0.0, %v2040
        %v2042 = vpop.f32.mrb[0].mxu0
        %v2043 = vadd.f32 0.0, %v2042
        %2044 = vdwg.mxu0
        %2045 = vmatprep.subr.mxu0 %v1164
        %2046 = vmatpush1.msra.mxu0 %v1163
        %2047 = vmatprep.subr.mxu0 %v1172
        %2048 = vmatpush1.msra.mxu0 %v1171
        %2049 = vmatprep.subr.mxu0 0.0
        %2050 = vmatpush1.msra.mxu0 0.0
        %2051 = vmatprep.subr.mxu0 0.0
        %2052 = vmatpush1.msra.mxu0 0.0
        %2053 = vmatprep.subr.mxu0 0.0
        %2054 = vmatpush1.msra.mxu0 0.0
        %2055 = vmatprep.subr.mxu0 0.0
        %2056 = vmatpush1.msra.mxu0 0.0
        %2057 = vmatprep.subr.mxu0 0.0
        %2058 = vmatpush1.msra.mxu0 0.0
        %2059 = vmatprep.subr.mxu0 0.0
        %2060 = vmatpush1.msra.mxu0 0.0
        %2061 = vmatprep.subr.mxu0 0.0
        %2062 = vmatpush1.msra.mxu0 0.0
        %2063 = vmatprep.subr.mxu0 0.0
        %2064 = vmatpush1.msra.mxu0 0.0
        %2065 = vmatprep.subr.mxu0 0.0
        %2066 = vmatpush1.msra.mxu0 0.0
        %2067 = vmatprep.subr.mxu0 0.0
        %2068 = vmatpush1.msra.mxu0 0.0
        %2069 = vmatprep.subr.mxu0 0.0
        %2070 = vmatpush1.msra.mxu0 0.0
        %2071 = vmatprep.subr.mxu0 0.0
        %2072 = vmatpush1.msra.mxu0 0.0
        %2073 = vmatprep.subr.mxu0 0.0
        %2074 = vmatpush1.msra.mxu0 0.0
        %2075 = vmatprep.subr.mxu0 0.0
        %2076 = vmatpush1.msra.mxu0 0.0
        %2077 = vmatprep.subr.mxu0 0.0
        %2078 = vmatpush1.msra.mxu0 0.0
        %2079 = vmatprep.subr.mxu0 0.0
        %2080 = vmatpush1.msra.mxu0 0.0
        %2081 = vmatprep.subr.mxu0 0.0
        %2082 = vmatpush1.msra.mxu0 0.0
        %2083 = vmatprep.subr.mxu0 0.0
        %2084 = vmatpush1.msra.mxu0 0.0
        %2085 = vmatprep.subr.mxu0 0.0
        %2086 = vmatpush1.msra.mxu0 0.0
        %2087 = vmatprep.subr.mxu0 0.0
        %2088 = vmatpush1.msra.mxu0 0.0
        %2089 = vmatprep.subr.mxu0 0.0
        %2090 = vmatpush1.msra.mxu0 0.0
        %2091 = vmatprep.subr.mxu0 0.0
        %2092 = vmatpush1.msra.mxu0 0.0
        %2093 = vmatprep.subr.mxu0 0.0
        %2094 = vmatpush1.msra.mxu0 0.0
        %2095 = vmatprep.subr.mxu0 0.0
        %2096 = vmatpush1.msra.mxu0 0.0
        %2097 = vmatprep.subr.mxu0 0.0
        %2098 = vmatpush1.msra.mxu0 0.0
        %2099 = vmatprep.subr.mxu0 0.0
        %2100 = vmatpush1.msra.mxu0 0.0
        %2101 = vmatprep.subr.mxu0 0.0
        %2102 = vmatpush1.msra.mxu0 0.0
        %2103 = vmatprep.subr.mxu0 0.0
        %2104 = vmatpush1.msra.mxu0 0.0
        %2105 = vmatprep.subr.mxu0 0.0
        %2106 = vmatpush1.msra.mxu0 0.0
        %2107 = vmatprep.subr.mxu0 0.0
        %2108 = vmatpush1.msra.mxu0 0.0
        %2109 = vmatprep.mubr.f32.mxu0 0.0
        %2110 = vmatmul.mubr.f32.gmra.mrb[0].mxu0 %v1809
        %v2111 = vpop.f32.mrb[0].mxu0
        %v2112 = vadd.f32 0.0, %v2111
        %v2113 = vpop.f32.mrb[0].mxu0
        %v2114 = vadd.f32 0.0, %v2113
        %2115 = vmatprep.mubr.f32.mxu0 0.0
        %2116 = vmatmul.mubr.f32.gmra.mrb[0].mxu0 %v1812
        %v2117 = vpop.f32.mrb[0].mxu0
        %v2118 = vadd.f32 0.0, %v2117
        %v2119 = vpop.f32.mrb[0].mxu0
        %v2120 = vadd.f32 0.0, %v2119
        %2121 = vdwg.mxu0
        %v2122 = vadd.f32 %v1567, %v1881
        %v2123 = vadd.f32 %v1569, %v1883
        %v2124 = vadd.f32 %v1644, %v1958
        %v2125 = vadd.f32 %v1646, %v1960
        %v2126 = vadd.f32 %v1721, %v2035
        %v2127 = vadd.f32 %v1723, %v2037
        %v2128 = vadd.f32 %v1798, %v2112
        %v2129 = vadd.f32 %v1800, %v2114
        %v2130 = vadd.f32 %v1573, %v1887
        %v2131 = vadd.f32 %v1575, %v1889
        %v2132 = vadd.f32 %v1650, %v1964
        %v2133 = vadd.f32 %v1652, %v1966
        %v2134 = vadd.f32 %v1727, %v2041
        %v2135 = vadd.f32 %v1729, %v2043
        %v2136 = vadd.f32 %v1804, %v2118
        %v2137 = vadd.f32 %v1806, %v2120
        %v2138 = vld [vmem:[%s8] sm:$0xff]
        %v2139 = vld [vmem:[%s8 + $0x8] sm:$0xff]
        %2141 = vset.pattern.permute.xlu0 0
        %2142 = vperm.xlu0 %2141, %v2138
        %v2143 = vpop.permute.xlu0 %2142
        %2146 = vset.pattern.permute.xlu0 0
        %2147 = vperm.xlu0 %2146, %v2139
        %v2148 = vpop.permute.xlu0 %2147
        %v2150 = vadd.f32 %v2122, %v2143
        %v2151 = vadd.f32 %v2123, %v2143
        %v2152 = vadd.f32 %v2124, %v2143
        %v2153 = vadd.f32 %v2125, %v2143
        %v2154 = vadd.f32 %v2126, %v2143
        %v2155 = vadd.f32 %v2127, %v2143
        %v2156 = vadd.f32 %v2128, %v2143
        %v2157 = vadd.f32 %v2129, %v2143
        %v2158 = vadd.f32 %v2130, %v2148
        %v2159 = vadd.f32 %v2131, %v2148
        %v2160 = vadd.f32 %v2132, %v2148
        %v2161 = vadd.f32 %v2133, %v2148
        %v2162 = vadd.f32 %v2134, %v2148
        %v2163 = vadd.f32 %v2135, %v2148
        %v2164 = vadd.f32 %v2136, %v2148
        %v2165 = vadd.f32 %v2137, %v2148
        %v2166 = vmax.f32 %v2150, 0.0
        %v2167 = vmax.f32 %v2151, 0.0
        %v2168 = vmax.f32 %v2152, 0.0
        %v2169 = vmax.f32 %v2153, 0.0
        %v2170 = vmax.f32 %v2154, 0.0
        %v2171 = vmax.f32 %v2155, 0.0
        %v2172 = vmax.f32 %v2156, 0.0
        %v2173 = vmax.f32 %v2157, 0.0
        %v2174 = vmax.f32 %v2158, 0.0
        %v2175 = vmax.f32 %v2159, 0.0
        %v2176 = vmax.f32 %v2160, 0.0
        %v2177 = vmax.f32 %v2161, 0.0
        %v2178 = vmax.f32 %v2162, 0.0
        %v2179 = vmax.f32 %v2163, 0.0
        %v2180 = vmax.f32 %v2164, 0.0
        %v2181 = vmax.f32 %v2165, 0.0
        %2182 = vrot.lane.b32.xlu0 %v2166, 126
        %v2183 = vpop.permute.xlu0 %2182
        %2184 = vrot.lane.b32.xlu0 %v2174, 126
        %v2185 = vpop.permute.xlu0 %2184
        %2186 = vrot.lane.b32.xlu0 %v2167, 126
        %v2187 = vpop.permute.xlu0 %2186
        %2188 = vrot.lane.b32.xlu0 %v2175, 126
        %v2189 = vpop.permute.xlu0 %2188
        %2190 = vrot.lane.b32.xlu0 %v2168, 126
        %v2191 = vpop.permute.xlu0 %2190
        %2192 = vrot.lane.b32.xlu0 %v2176, 126
        %v2193 = vpop.permute.xlu0 %2192
        %2194 = vrot.lane.b32.xlu0 %v2169, 126
        %v2195 = vpop.permute.xlu0 %2194
        %2196 = vrot.lane.b32.xlu0 %v2177, 126
        %v2197 = vpop.permute.xlu0 %2196
        %2198 = vrot.lane.b32.xlu0 %v2170, 126
        %v2199 = vpop.permute.xlu0 %2198
        %2200 = vrot.lane.b32.xlu0 %v2178, 126
        %v2201 = vpop.permute.xlu0 %2200
        %2202 = vrot.lane.b32.xlu0 %v2171, 126
        %v2203 = vpop.permute.xlu0 %2202
        %2204 = vrot.lane.b32.xlu0 %v2179, 126
        %v2205 = vpop.permute.xlu0 %2204
        %2206 = vrot.lane.b32.xlu0 %v2172, 126
        %v2207 = vpop.permute.xlu0 %2206
        %2208 = vrot.lane.b32.xlu0 %v2180, 126
        %v2209 = vpop.permute.xlu0 %2208
        %2210 = vrot.lane.b32.xlu0 %v2173, 126
        %v2211 = vpop.permute.xlu0 %2210
        %2212 = vrot.lane.b32.xlu0 %v2181, 126
        %v2213 = vpop.permute.xlu0 %2212
        %v2214 = vsel %vm1099, %v2207, %v2211
        %v2215 = vsel %vm1099, %v2209, %v2213
        %v2216 = vsel %vm1099, %v2203, %v2207
        %v2217 = vsel %vm1099, %v2205, %v2209
        %v2218 = vsel %vm1099, %v2199, %v2203
        %v2219 = vsel %vm1099, %v2201, %v2205
        %v2220 = vsel %vm1099, %v2195, %v2199
        %v2221 = vsel %vm1099, %v2197, %v2201
        %v2222 = vsel %vm1099, %v2191, %v2195
        %v2223 = vsel %vm1099, %v2193, %v2197
        %v2224 = vsel %vm1099, %v2187, %v2191
        %v2225 = vsel %vm1099, %v2189, %v2193
        %v2226 = vsel %vm1099, %v2183, %v2187
        %v2227 = vsel %vm1099, %v2185, %v2189
        %v2228 = vsel %vm1099, %v2211, %v2183
        %v2229 = vsel %vm1099, %v2213, %v2185
        %v2230 = vmax.f32 %v2166, %v2226
        %v2231 = vmax.f32 %v2167, %v2224
        %v2232 = vmax.f32 %v2168, %v2222
        %v2233 = vmax.f32 %v2169, %v2220
        %v2234 = vmax.f32 %v2170, %v2218
        %v2235 = vmax.f32 %v2171, %v2216
        %v2236 = vmax.f32 %v2172, %v2214
        %v2237 = vmax.f32 %v2173, %v2228
        %v2238 = vmax.f32 %v2174, %v2227
        %v2239 = vmax.f32 %v2175, %v2225
        %v2240 = vmax.f32 %v2176, %v2223
        %v2241 = vmax.f32 %v2177, %v2221
        %v2242 = vmax.f32 %v2178, %v2219
        %v2243 = vmax.f32 %v2179, %v2217
        %v2244 = vmax.f32 %v2180, %v2215
        %v2245 = vmax.f32 %v2181, %v2229
        %v2246 = vld [vmem:[%s4] sm:$0xff]
        %2247 = vrot.lane.b32.xlu0 %v2230, 4
        %v2248 = vpop.permute.xlu0 %2247
        %2249 = vrot.lane.b32.xlu0 %v2238, 4
        %v2250 = vpop.permute.xlu0 %2249
        %2251 = vrot.lane.b32.xlu0 %v2231, 4
        %v2252 = vpop.permute.xlu0 %2251
        %2253 = vrot.lane.b32.xlu0 %v2239, 4
        %v2254 = vpop.permute.xlu0 %2253
        %2255 = vrot.lane.b32.xlu0 %v2232, 4
        %v2256 = vpop.permute.xlu0 %2255
        %2257 = vrot.lane.b32.xlu0 %v2240, 4
        %v2258 = vpop.permute.xlu0 %2257
        %2259 = vrot.lane.b32.xlu0 %v2233, 4
        %v2260 = vpop.permute.xlu0 %2259
        %2261 = vrot.lane.b32.xlu0 %v2241, 4
        %v2262 = vpop.permute.xlu0 %2261
        %2263 = vrot.lane.b32.xlu0 %v2234, 4
        %v2264 = vpop.permute.xlu0 %2263
        %2265 = vrot.lane.b32.xlu0 %v2242, 4
        %v2266 = vpop.permute.xlu0 %2265
        %2267 = vrot.lane.b32.xlu0 %v2235, 4
        %v2268 = vpop.permute.xlu0 %2267
        %2269 = vrot.lane.b32.xlu0 %v2243, 4
        %v2270 = vpop.permute.xlu0 %2269
        %2271 = vrot.lane.b32.xlu0 %v2236, 4
        %v2272 = vpop.permute.xlu0 %2271
        %2273 = vrot.lane.b32.xlu0 %v2244, 4
        %v2274 = vpop.permute.xlu0 %2273
        %2275 = vrot.lane.b32.xlu0 %v2237, 4
        %v2276 = vpop.permute.xlu0 %2275
        %2277 = vrot.lane.b32.xlu0 %v2245, 4
        %v2278 = vpop.permute.xlu0 %2277
        %vm2279 = vcmp.lt.s32.totalorder %v580, 4
        %v2280 = vsel %vm2279, %v2272, %v2276
        %v2281 = vsel %vm2279, %v2274, %v2278
        %v2282 = vsel %vm2279, %v2268, %v2272
        %v2283 = vsel %vm2279, %v2270, %v2274
        %v2284 = vsel %vm2279, %v2264, %v2268
        %v2285 = vsel %vm2279, %v2266, %v2270
        %v2286 = vsel %vm2279, %v2260, %v2264
        %v2287 = vsel %vm2279, %v2262, %v2266
        %v2288 = vsel %vm2279, %v2256, %v2260
        %v2289 = vsel %vm2279, %v2258, %v2262
        %v2290 = vsel %vm2279, %v2252, %v2256
        %v2291 = vsel %vm2279, %v2254, %v2258
        %v2292 = vsel %vm2279, %v2248, %v2252
        %v2293 = vsel %vm2279, %v2250, %v2254
        %v2294 = vsel %vm2279, %v2276, %v2248
        %v2295 = vsel %vm2279, %v2278, %v2250
        %v2296 = vmul.f32 %v2294, %v594
        %v2297 = vmul.f32 %v2292, %v598
        %v2298 = vmul.f32 %v2290, %v602
        %v2299 = vmul.f32 %v2288, %v606
        %v2300 = vmul.f32 %v2286, %v610
        %v2301 = vmul.f32 %v2284, %v614
        %v2302 = vmul.f32 %v2282, %v618
        %v2303 = vmul.f32 %v2280, %v622
        %v2304 = vmul.f32 %v2295, %v594
        %v2305 = vmul.f32 %v2293, %v598
        %v2306 = vmul.f32 %v2291, %v602
        %v2307 = vmul.f32 %v2289, %v606
        %v2308 = vmul.f32 %v2287, %v610
        %v2309 = vmul.f32 %v2285, %v614
        %v2310 = vmul.f32 %v2283, %v618
        %v2311 = vmul.f32 %v2281, %v622
        %2312 = vrot.lane.b32.xlu0 %v2230, 124
        %v2313 = vpop.permute.xlu0 %2312
        %2314 = vrot.lane.b32.xlu0 %v2238, 124
        %v2315 = vpop.permute.xlu0 %2314
        %2316 = vrot.lane.b32.xlu0 %v2231, 124
        %v2317 = vpop.permute.xlu0 %2316
        %2318 = vrot.lane.b32.xlu0 %v2239, 124
        %v2319 = vpop.permute.xlu0 %2318
        %2320 = vrot.lane.b32.xlu0 %v2232, 124
        %v2321 = vpop.permute.xlu0 %2320
        %2322 = vrot.lane.b32.xlu0 %v2240, 124
        %v2323 = vpop.permute.xlu0 %2322
        %2324 = vrot.lane.b32.xlu0 %v2233, 124
        %v2325 = vpop.permute.xlu0 %2324
        %2326 = vrot.lane.b32.xlu0 %v2241, 124
        %v2327 = vpop.permute.xlu0 %2326
        %2328 = vrot.lane.b32.xlu0 %v2234, 124
        %v2329 = vpop.permute.xlu0 %2328
        %2330 = vrot.lane.b32.xlu0 %v2242, 124
        %v2331 = vpop.permute.xlu0 %2330
        %2332 = vrot.lane.b32.xlu0 %v2235, 124
        %v2333 = vpop.permute.xlu0 %2332
        %2334 = vrot.lane.b32.xlu0 %v2243, 124
        %v2335 = vpop.permute.xlu0 %2334
        %2336 = vrot.lane.b32.xlu0 %v2236, 124
        %v2337 = vpop.permute.xlu0 %2336
        %2338 = vrot.lane.b32.xlu0 %v2244, 124
        %v2339 = vpop.permute.xlu0 %2338
        %2340 = vrot.lane.b32.xlu0 %v2237, 124
        %v2341 = vpop.permute.xlu0 %2340
        %2342 = vrot.lane.b32.xlu0 %v2245, 124
        %v2343 = vpop.permute.xlu0 %2342
        %vm2344 = vcmp.lt.s32.totalorder %v580, 124
        %v2345 = vsel %vm2344, %v2337, %v2341
        %v2346 = vsel %vm2344, %v2339, %v2343
        %v2347 = vsel %vm2344, %v2333, %v2337
        %v2348 = vsel %vm2344, %v2335, %v2339
        %v2349 = vsel %vm2344, %v2329, %v2333
        %v2350 = vsel %vm2344, %v2331, %v2335
        %v2351 = vsel %vm2344, %v2325, %v2329
        %v2352 = vsel %vm2344, %v2327, %v2331
        %v2353 = vsel %vm2344, %v2321, %v2325
        %v2354 = vsel %vm2344, %v2323, %v2327
        %v2355 = vsel %vm2344, %v2317, %v2321
        %v2356 = vsel %vm2344, %v2319, %v2323
        %v2357 = vsel %vm2344, %v2313, %v2317
        %v2358 = vsel %vm2344, %v2315, %v2319
        %v2359 = vsel %vm2344, %v2341, %v2313
        %v2360 = vsel %vm2344, %v2343, %v2315
        %v2362 = vlaneseq
        %v2363 = vshrl.u32 %v2362, 7
        %v2364 = vsub.s32 0, %v2363
        %v2365 = vrot.slane %v2246, %v2364
        %v2366 = vlaneseq
        %v2367 = vshrl.u32 %v2366, 7
        %v2368 = vsub.s32 1, %v2367
        %v2369 = vrot.slane %v2246, %v2368
        %v2370 = vlaneseq
        %v2371 = vshrl.u32 %v2370, 7
        %v2372 = vsub.s32 2, %v2371
        %v2373 = vrot.slane %v2246, %v2372
        %v2374 = vlaneseq
        %v2375 = vshrl.u32 %v2374, 7
        %v2376 = vsub.s32 3, %v2375
        %v2377 = vrot.slane %v2246, %v2376
        %v2378 = vlaneseq
        %v2379 = vshrl.u32 %v2378, 7
        %v2380 = vsub.s32 4, %v2379
        %v2381 = vrot.slane %v2246, %v2380
        %v2382 = vlaneseq
        %v2383 = vshrl.u32 %v2382, 7
        %v2384 = vsub.s32 5, %v2383
        %v2385 = vrot.slane %v2246, %v2384
        %v2386 = vlaneseq
        %v2387 = vshrl.u32 %v2386, 7
        %v2388 = vsub.s32 6, %v2387
        %v2389 = vrot.slane %v2246, %v2388
        %v2390 = vlaneseq
        %v2391 = vshrl.u32 %v2390, 7
        %v2392 = vsub.s32 7, %v2391
        %v2393 = vrot.slane %v2246, %v2392
        %v2402 = vmul.f32 %v2357, %v2365
        %v2403 = vmul.f32 %v2355, %v2369
        %v2404 = vmul.f32 %v2353, %v2373
        %v2405 = vmul.f32 %v2351, %v2377
        %v2406 = vmul.f32 %v2349, %v2381
        %v2407 = vmul.f32 %v2347, %v2385
        %v2408 = vmul.f32 %v2345, %v2389
        %v2409 = vmul.f32 %v2359, %v2393
        %v2410 = vmul.f32 %v2358, %v2365
        %v2411 = vmul.f32 %v2356, %v2369
        %v2412 = vmul.f32 %v2354, %v2373
        %v2413 = vmul.f32 %v2352, %v2377
        %v2414 = vmul.f32 %v2350, %v2381
        %v2415 = vmul.f32 %v2348, %v2385
        %v2416 = vmul.f32 %v2346, %v2389
        %v2417 = vmul.f32 %v2360, %v2393
        %v2418 = vld [vmem:[%s9] sm:$0xff]
        %v2419 = vld [vmem:[%s9 + $0x8] sm:$0xff]
        %v2420 = vld [vmem:[%s9 + $0x10] sm:$0xff]
        %v2421 = vld [vmem:[%s9 + $0x18] sm:$0xff]
        %v2422 = vld [vmem:[%s9 + $0x20] sm:$0xff]
        %v2423 = vld [vmem:[%s9 + $0x28] sm:$0xff]
        %v2424 = vld [vmem:[%s9 + $0x30] sm:$0xff]
        %v2425 = vld [vmem:[%s9 + $0x38] sm:$0xff]
        %v2426 = vld [vmem:[%s9 + $0x40] sm:$0xff]
        %v2427 = vld [vmem:[%s9 + $0x48] sm:$0xff]
        %v2428 = vld [vmem:[%s9 + $0x50] sm:$0xff]
        %v2429 = vld [vmem:[%s9 + $0x58] sm:$0xff]
        %v2431 = vsel %vm1179, %v2422, 0
        %v2434 = vsel %vm1179, %v2423, 0
        %v2437 = vsel %vm1179, %v2424, 0
        %v2440 = vsel %vm1179, %v2425, 0
        %2442 = vmatprep.subr.mxu0 %v2231
        %2443 = vmatpush1.msra.mxu0 %v2230
        %2444 = vmatprep.subr.mxu0 %v2239
        %2445 = vmatpush1.msra.mxu0 %v2238
        %2446 = vmatprep.subr.mxu0 0.0
        %2447 = vmatpush1.msra.mxu0 0.0
        %2448 = vmatprep.subr.mxu0 0.0
        %2449 = vmatpush1.msra.mxu0 0.0
        %2450 = vmatprep.subr.mxu0 0.0
        %2451 = vmatpush1.msra.mxu0 0.0
        %2452 = vmatprep.subr.mxu0 0.0
        %2453 = vmatpush1.msra.mxu0 0.0
        %2454 = vmatprep.subr.mxu0 0.0
        %2455 = vmatpush1.msra.mxu0 0.0
        %2456 = vmatprep.subr.mxu0 0.0
        %2457 = vmatpush1.msra.mxu0 0.0
        %2458 = vmatprep.subr.mxu0 0.0
        %2459 = vmatpush1.msra.mxu0 0.0
        %2460 = vmatprep.subr.mxu0 0.0
        %2461 = vmatpush1.msra.mxu0 0.0
        %2462 = vmatprep.subr.mxu0 0.0
        %2463 = vmatpush1.msra.mxu0 0.0
        %2464 = vmatprep.subr.mxu0 0.0
        %2465 = vmatpush1.msra.mxu0 0.0
        %2466 = vmatprep.subr.mxu0 0.0
        %2467 = vmatpush1.msra.mxu0 0.0
        %2468 = vmatprep.subr.mxu0 0.0
        %2469 = vmatpush1.msra.mxu0 0.0
        %2470 = vmatprep.subr.mxu0 0.0
        %2471 = vmatpush1.msra.mxu0 0.0
        %2472 = vmatprep.subr.mxu0 0.0
        %2473 = vmatpush1.msra.mxu0 0.0
        %2474 = vmatprep.subr.mxu0 0.0
        %2475 = vmatpush1.msra.mxu0 0.0
        %2476 = vmatprep.subr.mxu0 0.0
        %2477 = vmatpush1.msra.mxu0 0.0
        %2478 = vmatprep.subr.mxu0 0.0
        %2479 = vmatpush1.msra.mxu0 0.0
        %2480 = vmatprep.subr.mxu0 0.0
        %2481 = vmatpush1.msra.mxu0 0.0
        %2482 = vmatprep.subr.mxu0 0.0
        %2483 = vmatpush1.msra.mxu0 0.0
        %2484 = vmatprep.subr.mxu0 0.0
        %2485 = vmatpush1.msra.mxu0 0.0
        %2486 = vmatprep.subr.mxu0 0.0
        %2487 = vmatpush1.msra.mxu0 0.0
        %2488 = vmatprep.subr.mxu0 0.0
        %2489 = vmatpush1.msra.mxu0 0.0
        %2490 = vmatprep.subr.mxu0 0.0
        %2491 = vmatpush1.msra.mxu0 0.0
        %2492 = vmatprep.subr.mxu0 0.0
        %2493 = vmatpush1.msra.mxu0 0.0
        %2494 = vmatprep.subr.mxu0 0.0
        %2495 = vmatpush1.msra.mxu0 0.0
        %2496 = vmatprep.subr.mxu0 0.0
        %2497 = vmatpush1.msra.mxu0 0.0
        %2498 = vmatprep.subr.mxu0 0.0
        %2499 = vmatpush1.msra.mxu0 0.0
        %2500 = vmatprep.subr.mxu0 0.0
        %2501 = vmatpush1.msra.mxu0 0.0
        %2502 = vmatprep.subr.mxu0 0.0
        %2503 = vmatpush1.msra.mxu0 0.0
        %2504 = vmatprep.subr.mxu0 0.0
        %2505 = vmatpush1.msra.mxu0 0.0
        %2506 = vmatprep.mubr.f32.mxu0 0.0
        %2507 = vmatmul.mubr.f32.gmra.mrb[0].mxu0 %v2431
        %v2508 = vpop.f32.mrb[0].mxu0
        %v2509 = vadd.f32 0.0, %v2508
        %v2510 = vpop.f32.mrb[0].mxu0
        %v2511 = vadd.f32 0.0, %v2510
        %2512 = vmatprep.mubr.f32.mxu0 0.0
        %2513 = vmatmul.mubr.f32.gmra.mrb[0].mxu0 %v2434
        %v2514 = vpop.f32.mrb[0].mxu0
        %v2515 = vadd.f32 0.0, %v2514
        %v2516 = vpop.f32.mrb[0].mxu0
        %v2517 = vadd.f32 0.0, %v2516
        %2518 = vmatprep.mubr.f32.mxu0 0.0
        %2519 = vmatmul.mubr.f32.gmra.mrb[0].mxu0 %v2437
        %v2520 = vpop.f32.mrb[0].mxu0
        %v2521 = vadd.f32 0.0, %v2520
        %v2522 = vpop.f32.mrb[0].mxu0
        %v2523 = vadd.f32 0.0, %v2522
        %2524 = vmatprep.mubr.f32.mxu0 0.0
        %2525 = vmatmul.mubr.f32.gmra.mrb[0].mxu0 %v2440
        %v2526 = vpop.f32.mrb[0].mxu0
        %v2527 = vadd.f32 0.0, %v2526
        %v2528 = vpop.f32.mrb[0].mxu0
        %v2529 = vadd.f32 0.0, %v2528
        %2530 = vdwg.mxu0
        %2531 = vmatprep.subr.mxu0 %v2233
        %2532 = vmatpush1.msra.mxu0 %v2232
        %2533 = vmatprep.subr.mxu0 %v2241
        %2534 = vmatpush1.msra.mxu0 %v2240
        %2535 = vmatprep.subr.mxu0 0.0
        %2536 = vmatpush1.msra.mxu0 0.0
        %2537 = vmatprep.subr.mxu0 0.0
        %2538 = vmatpush1.msra.mxu0 0.0
        %2539 = vmatprep.subr.mxu0 0.0
        %2540 = vmatpush1.msra.mxu0 0.0
        %2541 = vmatprep.subr.mxu0 0.0
        %2542 = vmatpush1.msra.mxu0 0.0
        %2543 = vmatprep.subr.mxu0 0.0
        %2544 = vmatpush1.msra.mxu0 0.0
        %2545 = vmatprep.subr.mxu0 0.0
        %2546 = vmatpush1.msra.mxu0 0.0
        %2547 = vmatprep.subr.mxu0 0.0
        %2548 = vmatpush1.msra.mxu0 0.0
        %2549 = vmatprep.subr.mxu0 0.0
        %2550 = vmatpush1.msra.mxu0 0.0
        %2551 = vmatprep.subr.mxu0 0.0
        %2552 = vmatpush1.msra.mxu0 0.0
        %2553 = vmatprep.subr.mxu0 0.0
        %2554 = vmatpush1.msra.mxu0 0.0
        %2555 = vmatprep.subr.mxu0 0.0
        %2556 = vmatpush1.msra.mxu0 0.0
        %2557 = vmatprep.subr.mxu0 0.0
        %2558 = vmatpush1.msra.mxu0 0.0
        %2559 = vmatprep.subr.mxu0 0.0
        %2560 = vmatpush1.msra.mxu0 0.0
        %2561 = vmatprep.subr.mxu0 0.0
        %2562 = vmatpush1.msra.mxu0 0.0
        %2563 = vmatprep.subr.mxu0 0.0
        %2564 = vmatpush1.msra.mxu0 0.0
        %2565 = vmatprep.subr.mxu0 0.0
        %2566 = vmatpush1.msra.mxu0 0.0
        %2567 = vmatprep.subr.mxu0 0.0
        %2568 = vmatpush1.msra.mxu0 0.0
        %2569 = vmatprep.subr.mxu0 0.0
        %2570 = vmatpush1.msra.mxu0 0.0
        %2571 = vmatprep.subr.mxu0 0.0
        %2572 = vmatpush1.msra.mxu0 0.0
        %2573 = vmatprep.subr.mxu0 0.0
        %2574 = vmatpush1.msra.mxu0 0.0
        %2575 = vmatprep.subr.mxu0 0.0
        %2576 = vmatpush1.msra.mxu0 0.0
        %2577 = vmatprep.subr.mxu0 0.0
        %2578 = vmatpush1.msra.mxu0 0.0
        %2579 = vmatprep.subr.mxu0 0.0
        %2580 = vmatpush1.msra.mxu0 0.0
        %2581 = vmatprep.subr.mxu0 0.0
        %2582 = vmatpush1.msra.mxu0 0.0
        %2583 = vmatprep.subr.mxu0 0.0
        %2584 = vmatpush1.msra.mxu0 0.0
        %2585 = vmatprep.subr.mxu0 0.0
        %2586 = vmatpush1.msra.mxu0 0.0
        %2587 = vmatprep.subr.mxu0 0.0
        %2588 = vmatpush1.msra.mxu0 0.0
        %2589 = vmatprep.subr.mxu0 0.0
        %2590 = vmatpush1.msra.mxu0 0.0
        %2591 = vmatprep.subr.mxu0 0.0
        %2592 = vmatpush1.msra.mxu0 0.0
        %2593 = vmatprep.subr.mxu0 0.0
        %2594 = vmatpush1.msra.mxu0 0.0
        %2595 = vmatprep.mubr.f32.mxu0 0.0
        %2596 = vmatmul.mubr.f32.gmra.mrb[0].mxu0 %v2431
        %v2597 = vpop.f32.mrb[0].mxu0
        %v2598 = vadd.f32 0.0, %v2597
        %v2599 = vpop.f32.mrb[0].mxu0
        %v2600 = vadd.f32 0.0, %v2599
        %2601 = vmatprep.mubr.f32.mxu0 0.0
        %2602 = vmatmul.mubr.f32.gmra.mrb[0].mxu0 %v2434
        %v2603 = vpop.f32.mrb[0].mxu0
        %v2604 = vadd.f32 0.0, %v2603
        %v2605 = vpop.f32.mrb[0].mxu0
        %v2606 = vadd.f32 0.0, %v2605
        %2607 = vmatprep.mubr.f32.mxu0 0.0
        %2608 = vmatmul.mubr.f32.gmra.mrb[0].mxu0 %v2437
        %v2609 = vpop.f32.mrb[0].mxu0
        %v2610 = vadd.f32 0.0, %v2609
        %v2611 = vpop.f32.mrb[0].mxu0
        %v2612 = vadd.f32 0.0, %v2611
        %2613 = vmatprep.mubr.f32.mxu0 0.0
        %2614 = vmatmul.mubr.f32.gmra.mrb[0].mxu0 %v2440
        %v2615 = vpop.f32.mrb[0].mxu0
        %v2616 = vadd.f32 0.0, %v2615
        %v2617 = vpop.f32.mrb[0].mxu0
        %v2618 = vadd.f32 0.0, %v2617
        %2619 = vdwg.mxu0
        %2620 = vmatprep.subr.mxu0 %v2235
        %2621 = vmatpush1.msra.mxu0 %v2234
        %2622 = vmatprep.subr.mxu0 %v2243
        %2623 = vmatpush1.msra.mxu0 %v2242
        %2624 = vmatprep.subr.mxu0 0.0
        %2625 = vmatpush1.msra.mxu0 0.0
        %2626 = vmatprep.subr.mxu0 0.0
        %2627 = vmatpush1.msra.mxu0 0.0
        %2628 = vmatprep.subr.mxu0 0.0
        %2629 = vmatpush1.msra.mxu0 0.0
        %2630 = vmatprep.subr.mxu0 0.0
        %2631 = vmatpush1.msra.mxu0 0.0
        %2632 = vmatprep.subr.mxu0 0.0
        %2633 = vmatpush1.msra.mxu0 0.0
        %2634 = vmatprep.subr.mxu0 0.0
        %2635 = vmatpush1.msra.mxu0 0.0
        %2636 = vmatprep.subr.mxu0 0.0
        %2637 = vmatpush1.msra.mxu0 0.0
        %2638 = vmatprep.subr.mxu0 0.0
        %2639 = vmatpush1.msra.mxu0 0.0
        %2640 = vmatprep.subr.mxu0 0.0
        %2641 = vmatpush1.msra.mxu0 0.0
        %2642 = vmatprep.subr.mxu0 0.0
        %2643 = vmatpush1.msra.mxu0 0.0
        %2644 = vmatprep.subr.mxu0 0.0
        %2645 = vmatpush1.msra.mxu0 0.0
        %2646 = vmatprep.subr.mxu0 0.0
        %2647 = vmatpush1.msra.mxu0 0.0
        %2648 = vmatprep.subr.mxu0 0.0
        %2649 = vmatpush1.msra.mxu0 0.0
        %2650 = vmatprep.subr.mxu0 0.0
        %2651 = vmatpush1.msra.mxu0 0.0
        %2652 = vmatprep.subr.mxu0 0.0
        %2653 = vmatpush1.msra.mxu0 0.0
        %2654 = vmatprep.subr.mxu0 0.0
        %2655 = vmatpush1.msra.mxu0 0.0
        %2656 = vmatprep.subr.mxu0 0.0
        %2657 = vmatpush1.msra.mxu0 0.0
        %2658 = vmatprep.subr.mxu0 0.0
        %2659 = vmatpush1.msra.mxu0 0.0
        %2660 = vmatprep.subr.mxu0 0.0
        %2661 = vmatpush1.msra.mxu0 0.0
        %2662 = vmatprep.subr.mxu0 0.0
        %2663 = vmatpush1.msra.mxu0 0.0
        %2664 = vmatprep.subr.mxu0 0.0
        %2665 = vmatpush1.msra.mxu0 0.0
        %2666 = vmatprep.subr.mxu0 0.0
        %2667 = vmatpush1.msra.mxu0 0.0
        %2668 = vmatprep.subr.mxu0 0.0
        %2669 = vmatpush1.msra.mxu0 0.0
        %2670 = vmatprep.subr.mxu0 0.0
        %2671 = vmatpush1.msra.mxu0 0.0
        %2672 = vmatprep.subr.mxu0 0.0
        %2673 = vmatpush1.msra.mxu0 0.0
        %2674 = vmatprep.subr.mxu0 0.0
        %2675 = vmatpush1.msra.mxu0 0.0
        %2676 = vmatprep.subr.mxu0 0.0
        %2677 = vmatpush1.msra.mxu0 0.0
        %2678 = vmatprep.subr.mxu0 0.0
        %2679 = vmatpush1.msra.mxu0 0.0
        %2680 = vmatprep.subr.mxu0 0.0
        %2681 = vmatpush1.msra.mxu0 0.0
        %2682 = vmatprep.subr.mxu0 0.0
        %2683 = vmatpush1.msra.mxu0 0.0
        %2684 = vmatprep.mubr.f32.mxu0 0.0
        %2685 = vmatmul.mubr.f32.gmra.mrb[0].mxu0 %v2431
        %v2686 = vpop.f32.mrb[0].mxu0
        %v2687 = vadd.f32 0.0, %v2686
        %v2688 = vpop.f32.mrb[0].mxu0
        %v2689 = vadd.f32 0.0, %v2688
        %2690 = vmatprep.mubr.f32.mxu0 0.0
        %2691 = vmatmul.mubr.f32.gmra.mrb[0].mxu0 %v2434
        %v2692 = vpop.f32.mrb[0].mxu0
        %v2693 = vadd.f32 0.0, %v2692
        %v2694 = vpop.f32.mrb[0].mxu0
        %v2695 = vadd.f32 0.0, %v2694
        %2696 = vmatprep.mubr.f32.mxu0 0.0
        %2697 = vmatmul.mubr.f32.gmra.mrb[0].mxu0 %v2437
        %v2698 = vpop.f32.mrb[0].mxu0
        %v2699 = vadd.f32 0.0, %v2698
        %v2700 = vpop.f32.mrb[0].mxu0
        %v2701 = vadd.f32 0.0, %v2700
        %2702 = vmatprep.mubr.f32.mxu0 0.0
        %2703 = vmatmul.mubr.f32.gmra.mrb[0].mxu0 %v2440
        %v2704 = vpop.f32.mrb[0].mxu0
        %v2705 = vadd.f32 0.0, %v2704
        %v2706 = vpop.f32.mrb[0].mxu0
        %v2707 = vadd.f32 0.0, %v2706
        %2708 = vdwg.mxu0
        %2709 = vmatprep.subr.mxu0 %v2237
        %2710 = vmatpush1.msra.mxu0 %v2236
        %2711 = vmatprep.subr.mxu0 %v2245
        %2712 = vmatpush1.msra.mxu0 %v2244
        %2713 = vmatprep.subr.mxu0 0.0
        %2714 = vmatpush1.msra.mxu0 0.0
        %2715 = vmatprep.subr.mxu0 0.0
        %2716 = vmatpush1.msra.mxu0 0.0
        %2717 = vmatprep.subr.mxu0 0.0
        %2718 = vmatpush1.msra.mxu0 0.0
        %2719 = vmatprep.subr.mxu0 0.0
        %2720 = vmatpush1.msra.mxu0 0.0
        %2721 = vmatprep.subr.mxu0 0.0
        %2722 = vmatpush1.msra.mxu0 0.0
        %2723 = vmatprep.subr.mxu0 0.0
        %2724 = vmatpush1.msra.mxu0 0.0
        %2725 = vmatprep.subr.mxu0 0.0
        %2726 = vmatpush1.msra.mxu0 0.0
        %2727 = vmatprep.subr.mxu0 0.0
        %2728 = vmatpush1.msra.mxu0 0.0
        %2729 = vmatprep.subr.mxu0 0.0
        %2730 = vmatpush1.msra.mxu0 0.0
        %2731 = vmatprep.subr.mxu0 0.0
        %2732 = vmatpush1.msra.mxu0 0.0
        %2733 = vmatprep.subr.mxu0 0.0
        %2734 = vmatpush1.msra.mxu0 0.0
        %2735 = vmatprep.subr.mxu0 0.0
        %2736 = vmatpush1.msra.mxu0 0.0
        %2737 = vmatprep.subr.mxu0 0.0
        %2738 = vmatpush1.msra.mxu0 0.0
        %2739 = vmatprep.subr.mxu0 0.0
        %2740 = vmatpush1.msra.mxu0 0.0
        %2741 = vmatprep.subr.mxu0 0.0
        %2742 = vmatpush1.msra.mxu0 0.0
        %2743 = vmatprep.subr.mxu0 0.0
        %2744 = vmatpush1.msra.mxu0 0.0
        %2745 = vmatprep.subr.mxu0 0.0
        %2746 = vmatpush1.msra.mxu0 0.0
        %2747 = vmatprep.subr.mxu0 0.0
        %2748 = vmatpush1.msra.mxu0 0.0
        %2749 = vmatprep.subr.mxu0 0.0
        %2750 = vmatpush1.msra.mxu0 0.0
        %2751 = vmatprep.subr.mxu0 0.0
        %2752 = vmatpush1.msra.mxu0 0.0
        %2753 = vmatprep.subr.mxu0 0.0
        %2754 = vmatpush1.msra.mxu0 0.0
        %2755 = vmatprep.subr.mxu0 0.0
        %2756 = vmatpush1.msra.mxu0 0.0
        %2757 = vmatprep.subr.mxu0 0.0
        %2758 = vmatpush1.msra.mxu0 0.0
        %2759 = vmatprep.subr.mxu0 0.0
        %2760 = vmatpush1.msra.mxu0 0.0
        %2761 = vmatprep.subr.mxu0 0.0
        %2762 = vmatpush1.msra.mxu0 0.0
        %2763 = vmatprep.subr.mxu0 0.0
        %2764 = vmatpush1.msra.mxu0 0.0
        %2765 = vmatprep.subr.mxu0 0.0
        %2766 = vmatpush1.msra.mxu0 0.0
        %2767 = vmatprep.subr.mxu0 0.0
        %2768 = vmatpush1.msra.mxu0 0.0
        %2769 = vmatprep.subr.mxu0 0.0
        %2770 = vmatpush1.msra.mxu0 0.0
        %2771 = vmatprep.subr.mxu0 0.0
        %2772 = vmatpush1.msra.mxu0 0.0
        %2773 = vmatprep.mubr.f32.mxu0 0.0
        %2774 = vmatmul.mubr.f32.gmra.mrb[0].mxu0 %v2431
        %v2775 = vpop.f32.mrb[0].mxu0
        %v2776 = vadd.f32 0.0, %v2775
        %v2777 = vpop.f32.mrb[0].mxu0
        %v2778 = vadd.f32 0.0, %v2777
        %2779 = vmatprep.mubr.f32.mxu0 0.0
        %2780 = vmatmul.mubr.f32.gmra.mrb[0].mxu0 %v2434
        %v2781 = vpop.f32.mrb[0].mxu0
        %v2782 = vadd.f32 0.0, %v2781
        %v2783 = vpop.f32.mrb[0].mxu0
        %v2784 = vadd.f32 0.0, %v2783
        %2785 = vmatprep.mubr.f32.mxu0 0.0
        %2786 = vmatmul.mubr.f32.gmra.mrb[0].mxu0 %v2437
        %v2787 = vpop.f32.mrb[0].mxu0
        %v2788 = vadd.f32 0.0, %v2787
        %v2789 = vpop.f32.mrb[0].mxu0
        %v2790 = vadd.f32 0.0, %v2789
        %2791 = vmatprep.mubr.f32.mxu0 0.0
        %2792 = vmatmul.mubr.f32.gmra.mrb[0].mxu0 %v2440
        %v2793 = vpop.f32.mrb[0].mxu0
        %v2794 = vadd.f32 0.0, %v2793
        %v2795 = vpop.f32.mrb[0].mxu0
        %v2796 = vadd.f32 0.0, %v2795
        %2797 = vdwg.mxu0
        %v2799 = vsel %vm1179, %v2418, 0
        %v2802 = vsel %vm1179, %v2419, 0
        %v2805 = vsel %vm1179, %v2420, 0
        %v2808 = vsel %vm1179, %v2421, 0
        %2810 = vmatprep.subr.mxu0 %v2297
        %2811 = vmatpush1.msra.mxu0 %v2296
        %2812 = vmatprep.subr.mxu0 %v2305
        %2813 = vmatpush1.msra.mxu0 %v2304
        %2814 = vmatprep.subr.mxu0 0.0
        %2815 = vmatpush1.msra.mxu0 0.0
        %2816 = vmatprep.subr.mxu0 0.0
        %2817 = vmatpush1.msra.mxu0 0.0
        %2818 = vmatprep.subr.mxu0 0.0
        %2819 = vmatpush1.msra.mxu0 0.0
        %2820 = vmatprep.subr.mxu0 0.0
        %2821 = vmatpush1.msra.mxu0 0.0
        %2822 = vmatprep.subr.mxu0 0.0
        %2823 = vmatpush1.msra.mxu0 0.0
        %2824 = vmatprep.subr.mxu0 0.0
        %2825 = vmatpush1.msra.mxu0 0.0
        %2826 = vmatprep.subr.mxu0 0.0
        %2827 = vmatpush1.msra.mxu0 0.0
        %2828 = vmatprep.subr.mxu0 0.0
        %2829 = vmatpush1.msra.mxu0 0.0
        %2830 = vmatprep.subr.mxu0 0.0
        %2831 = vmatpush1.msra.mxu0 0.0
        %2832 = vmatprep.subr.mxu0 0.0
        %2833 = vmatpush1.msra.mxu0 0.0
        %2834 = vmatprep.subr.mxu0 0.0
        %2835 = vmatpush1.msra.mxu0 0.0
        %2836 = vmatprep.subr.mxu0 0.0
        %2837 = vmatpush1.msra.mxu0 0.0
        %2838 = vmatprep.subr.mxu0 0.0
        %2839 = vmatpush1.msra.mxu0 0.0
        %2840 = vmatprep.subr.mxu0 0.0
        %2841 = vmatpush1.msra.mxu0 0.0
        %2842 = vmatprep.subr.mxu0 0.0
        %2843 = vmatpush1.msra.mxu0 0.0
        %2844 = vmatprep.subr.mxu0 0.0
        %2845 = vmatpush1.msra.mxu0 0.0
        %2846 = vmatprep.subr.mxu0 0.0
        %2847 = vmatpush1.msra.mxu0 0.0
        %2848 = vmatprep.subr.mxu0 0.0
        %2849 = vmatpush1.msra.mxu0 0.0
        %2850 = vmatprep.subr.mxu0 0.0
        %2851 = vmatpush1.msra.mxu0 0.0
        %2852 = vmatprep.subr.mxu0 0.0
        %2853 = vmatpush1.msra.mxu0 0.0
        %2854 = vmatprep.subr.mxu0 0.0
        %2855 = vmatpush1.msra.mxu0 0.0
        %2856 = vmatprep.subr.mxu0 0.0
        %2857 = vmatpush1.msra.mxu0 0.0
        %2858 = vmatprep.subr.mxu0 0.0
        %2859 = vmatpush1.msra.mxu0 0.0
        %2860 = vmatprep.subr.mxu0 0.0
        %2861 = vmatpush1.msra.mxu0 0.0
        %2862 = vmatprep.subr.mxu0 0.0
        %2863 = vmatpush1.msra.mxu0 0.0
        %2864 = vmatprep.subr.mxu0 0.0
        %2865 = vmatpush1.msra.mxu0 0.0
        %2866 = vmatprep.subr.mxu0 0.0
        %2867 = vmatpush1.msra.mxu0 0.0
        %2868 = vmatprep.subr.mxu0 0.0
        %2869 = vmatpush1.msra.mxu0 0.0
        %2870 = vmatprep.subr.mxu0 0.0
        %2871 = vmatpush1.msra.mxu0 0.0
        %2872 = vmatprep.subr.mxu0 0.0
        %2873 = vmatpush1.msra.mxu0 0.0
        %2874 = vmatprep.mubr.f32.mxu0 0.0
        %2875 = vmatmul.mubr.f32.gmra.mrb[0].mxu0 %v2799
        %v2876 = vpop.f32.mrb[0].mxu0
        %v2877 = vadd.f32 %v2509, %v2876
        %v2878 = vpop.f32.mrb[0].mxu0
        %v2879 = vadd.f32 %v2511, %v2878
        %2880 = vmatprep.mubr.f32.mxu0 0.0
        %2881 = vmatmul.mubr.f32.gmra.mrb[0].mxu0 %v2802
        %v2882 = vpop.f32.mrb[0].mxu0
        %v2883 = vadd.f32 %v2515, %v2882
        %v2884 = vpop.f32.mrb[0].mxu0
        %v2885 = vadd.f32 %v2517, %v2884
        %2886 = vmatprep.mubr.f32.mxu0 0.0
        %2887 = vmatmul.mubr.f32.gmra.mrb[0].mxu0 %v2805
        %v2888 = vpop.f32.mrb[0].mxu0
        %v2889 = vadd.f32 %v2521, %v2888
        %v2890 = vpop.f32.mrb[0].mxu0
        %v2891 = vadd.f32 %v2523, %v2890
        %2892 = vmatprep.mubr.f32.mxu0 0.0
        %2893 = vmatmul.mubr.f32.gmra.mrb[0].mxu0 %v2808
        %v2894 = vpop.f32.mrb[0].mxu0
        %v2895 = vadd.f32 %v2527, %v2894
        %v2896 = vpop.f32.mrb[0].mxu0
        %v2897 = vadd.f32 %v2529, %v2896
        %2898 = vdwg.mxu0
        %2899 = vmatprep.subr.mxu0 %v2299
        %2900 = vmatpush1.msra.mxu0 %v2298
        %2901 = vmatprep.subr.mxu0 %v2307
        %2902 = vmatpush1.msra.mxu0 %v2306
        %2903 = vmatprep.subr.mxu0 0.0
        %2904 = vmatpush1.msra.mxu0 0.0
        %2905 = vmatprep.subr.mxu0 0.0
        %2906 = vmatpush1.msra.mxu0 0.0
        %2907 = vmatprep.subr.mxu0 0.0
        %2908 = vmatpush1.msra.mxu0 0.0
        %2909 = vmatprep.subr.mxu0 0.0
        %2910 = vmatpush1.msra.mxu0 0.0
        %2911 = vmatprep.subr.mxu0 0.0
        %2912 = vmatpush1.msra.mxu0 0.0
        %2913 = vmatprep.subr.mxu0 0.0
        %2914 = vmatpush1.msra.mxu0 0.0
        %2915 = vmatprep.subr.mxu0 0.0
        %2916 = vmatpush1.msra.mxu0 0.0
        %2917 = vmatprep.subr.mxu0 0.0
        %2918 = vmatpush1.msra.mxu0 0.0
        %2919 = vmatprep.subr.mxu0 0.0
        %2920 = vmatpush1.msra.mxu0 0.0
        %2921 = vmatprep.subr.mxu0 0.0
        %2922 = vmatpush1.msra.mxu0 0.0
        %2923 = vmatprep.subr.mxu0 0.0
        %2924 = vmatpush1.msra.mxu0 0.0
        %2925 = vmatprep.subr.mxu0 0.0
        %2926 = vmatpush1.msra.mxu0 0.0
        %2927 = vmatprep.subr.mxu0 0.0
        %2928 = vmatpush1.msra.mxu0 0.0
        %2929 = vmatprep.subr.mxu0 0.0
        %2930 = vmatpush1.msra.mxu0 0.0
        %2931 = vmatprep.subr.mxu0 0.0
        %2932 = vmatpush1.msra.mxu0 0.0
        %2933 = vmatprep.subr.mxu0 0.0
        %2934 = vmatpush1.msra.mxu0 0.0
        %2935 = vmatprep.subr.mxu0 0.0
        %2936 = vmatpush1.msra.mxu0 0.0
        %2937 = vmatprep.subr.mxu0 0.0
        %2938 = vmatpush1.msra.mxu0 0.0
        %2939 = vmatprep.subr.mxu0 0.0
        %2940 = vmatpush1.msra.mxu0 0.0
        %2941 = vmatprep.subr.mxu0 0.0
        %2942 = vmatpush1.msra.mxu0 0.0
        %2943 = vmatprep.subr.mxu0 0.0
        %2944 = vmatpush1.msra.mxu0 0.0
        %2945 = vmatprep.subr.mxu0 0.0
        %2946 = vmatpush1.msra.mxu0 0.0
        %2947 = vmatprep.subr.mxu0 0.0
        %2948 = vmatpush1.msra.mxu0 0.0
        %2949 = vmatprep.subr.mxu0 0.0
        %2950 = vmatpush1.msra.mxu0 0.0
        %2951 = vmatprep.subr.mxu0 0.0
        %2952 = vmatpush1.msra.mxu0 0.0
        %2953 = vmatprep.subr.mxu0 0.0
        %2954 = vmatpush1.msra.mxu0 0.0
        %2955 = vmatprep.subr.mxu0 0.0
        %2956 = vmatpush1.msra.mxu0 0.0
        %2957 = vmatprep.subr.mxu0 0.0
        %2958 = vmatpush1.msra.mxu0 0.0
        %2959 = vmatprep.subr.mxu0 0.0
        %2960 = vmatpush1.msra.mxu0 0.0
        %2961 = vmatprep.subr.mxu0 0.0
        %2962 = vmatpush1.msra.mxu0 0.0
        %2963 = vmatprep.mubr.f32.mxu0 0.0
        %2964 = vmatmul.mubr.f32.gmra.mrb[0].mxu0 %v2799
        %v2965 = vpop.f32.mrb[0].mxu0
        %v2966 = vadd.f32 %v2598, %v2965
        %v2967 = vpop.f32.mrb[0].mxu0
        %v2968 = vadd.f32 %v2600, %v2967
        %2969 = vmatprep.mubr.f32.mxu0 0.0
        %2970 = vmatmul.mubr.f32.gmra.mrb[0].mxu0 %v2802
        %v2971 = vpop.f32.mrb[0].mxu0
        %v2972 = vadd.f32 %v2604, %v2971
        %v2973 = vpop.f32.mrb[0].mxu0
        %v2974 = vadd.f32 %v2606, %v2973
        %2975 = vmatprep.mubr.f32.mxu0 0.0
        %2976 = vmatmul.mubr.f32.gmra.mrb[0].mxu0 %v2805
        %v2977 = vpop.f32.mrb[0].mxu0
        %v2978 = vadd.f32 %v2610, %v2977
        %v2979 = vpop.f32.mrb[0].mxu0
        %v2980 = vadd.f32 %v2612, %v2979
        %2981 = vmatprep.mubr.f32.mxu0 0.0
        %2982 = vmatmul.mubr.f32.gmra.mrb[0].mxu0 %v2808
        %v2983 = vpop.f32.mrb[0].mxu0
        %v2984 = vadd.f32 %v2616, %v2983
        %v2985 = vpop.f32.mrb[0].mxu0
        %v2986 = vadd.f32 %v2618, %v2985
        %2987 = vdwg.mxu0
        %2988 = vmatprep.subr.mxu0 %v2301
        %2989 = vmatpush1.msra.mxu0 %v2300
        %2990 = vmatprep.subr.mxu0 %v2309
        %2991 = vmatpush1.msra.mxu0 %v2308
        %2992 = vmatprep.subr.mxu0 0.0
        %2993 = vmatpush1.msra.mxu0 0.0
        %2994 = vmatprep.subr.mxu0 0.0
        %2995 = vmatpush1.msra.mxu0 0.0
        %2996 = vmatprep.subr.mxu0 0.0
        %2997 = vmatpush1.msra.mxu0 0.0
        %2998 = vmatprep.subr.mxu0 0.0
        %2999 = vmatpush1.msra.mxu0 0.0
        %3000 = vmatprep.subr.mxu0 0.0
        %3001 = vmatpush1.msra.mxu0 0.0
        %3002 = vmatprep.subr.mxu0 0.0
        %3003 = vmatpush1.msra.mxu0 0.0
        %3004 = vmatprep.subr.mxu0 0.0
        %3005 = vmatpush1.msra.mxu0 0.0
        %3006 = vmatprep.subr.mxu0 0.0
        %3007 = vmatpush1.msra.mxu0 0.0
        %3008 = vmatprep.subr.mxu0 0.0
        %3009 = vmatpush1.msra.mxu0 0.0
        %3010 = vmatprep.subr.mxu0 0.0
        %3011 = vmatpush1.msra.mxu0 0.0
        %3012 = vmatprep.subr.mxu0 0.0
        %3013 = vmatpush1.msra.mxu0 0.0
        %3014 = vmatprep.subr.mxu0 0.0
        %3015 = vmatpush1.msra.mxu0 0.0
        %3016 = vmatprep.subr.mxu0 0.0
        %3017 = vmatpush1.msra.mxu0 0.0
        %3018 = vmatprep.subr.mxu0 0.0
        %3019 = vmatpush1.msra.mxu0 0.0
        %3020 = vmatprep.subr.mxu0 0.0
        %3021 = vmatpush1.msra.mxu0 0.0
        %3022 = vmatprep.subr.mxu0 0.0
        %3023 = vmatpush1.msra.mxu0 0.0
        %3024 = vmatprep.subr.mxu0 0.0
        %3025 = vmatpush1.msra.mxu0 0.0
        %3026 = vmatprep.subr.mxu0 0.0
        %3027 = vmatpush1.msra.mxu0 0.0
        %3028 = vmatprep.subr.mxu0 0.0
        %3029 = vmatpush1.msra.mxu0 0.0
        %3030 = vmatprep.subr.mxu0 0.0
        %3031 = vmatpush1.msra.mxu0 0.0
        %3032 = vmatprep.subr.mxu0 0.0
        %3033 = vmatpush1.msra.mxu0 0.0
        %3034 = vmatprep.subr.mxu0 0.0
        %3035 = vmatpush1.msra.mxu0 0.0
        %3036 = vmatprep.subr.mxu0 0.0
        %3037 = vmatpush1.msra.mxu0 0.0
        %3038 = vmatprep.subr.mxu0 0.0
        %3039 = vmatpush1.msra.mxu0 0.0
        %3040 = vmatprep.subr.mxu0 0.0
        %3041 = vmatpush1.msra.mxu0 0.0
        %3042 = vmatprep.subr.mxu0 0.0
        %3043 = vmatpush1.msra.mxu0 0.0
        %3044 = vmatprep.subr.mxu0 0.0
        %3045 = vmatpush1.msra.mxu0 0.0
        %3046 = vmatprep.subr.mxu0 0.0
        %3047 = vmatpush1.msra.mxu0 0.0
        %3048 = vmatprep.subr.mxu0 0.0
        %3049 = vmatpush1.msra.mxu0 0.0
        %3050 = vmatprep.subr.mxu0 0.0
        %3051 = vmatpush1.msra.mxu0 0.0
        %3052 = vmatprep.mubr.f32.mxu0 0.0
        %3053 = vmatmul.mubr.f32.gmra.mrb[0].mxu0 %v2799
        %v3054 = vpop.f32.mrb[0].mxu0
        %v3055 = vadd.f32 %v2687, %v3054
        %v3056 = vpop.f32.mrb[0].mxu0
        %v3057 = vadd.f32 %v2689, %v3056
        %3058 = vmatprep.mubr.f32.mxu0 0.0
        %3059 = vmatmul.mubr.f32.gmra.mrb[0].mxu0 %v2802
        %v3060 = vpop.f32.mrb[0].mxu0
        %v3061 = vadd.f32 %v2693, %v3060
        %v3062 = vpop.f32.mrb[0].mxu0
        %v3063 = vadd.f32 %v2695, %v3062
        %3064 = vmatprep.mubr.f32.mxu0 0.0
        %3065 = vmatmul.mubr.f32.gmra.mrb[0].mxu0 %v2805
        %v3066 = vpop.f32.mrb[0].mxu0
        %v3067 = vadd.f32 %v2699, %v3066
        %v3068 = vpop.f32.mrb[0].mxu0
        %v3069 = vadd.f32 %v2701, %v3068
        %3070 = vmatprep.mubr.f32.mxu0 0.0
        %3071 = vmatmul.mubr.f32.gmra.mrb[0].mxu0 %v2808
        %v3072 = vpop.f32.mrb[0].mxu0
        %v3073 = vadd.f32 %v2705, %v3072
        %v3074 = vpop.f32.mrb[0].mxu0
        %v3075 = vadd.f32 %v2707, %v3074
        %3076 = vdwg.mxu0
        %3077 = vmatprep.subr.mxu0 %v2303
        %3078 = vmatpush1.msra.mxu0 %v2302
        %3079 = vmatprep.subr.mxu0 %v2311
        %3080 = vmatpush1.msra.mxu0 %v2310
        %3081 = vmatprep.subr.mxu0 0.0
        %3082 = vmatpush1.msra.mxu0 0.0
        %3083 = vmatprep.subr.mxu0 0.0
        %3084 = vmatpush1.msra.mxu0 0.0
        %3085 = vmatprep.subr.mxu0 0.0
        %3086 = vmatpush1.msra.mxu0 0.0
        %3087 = vmatprep.subr.mxu0 0.0
        %3088 = vmatpush1.msra.mxu0 0.0
        %3089 = vmatprep.subr.mxu0 0.0
        %3090 = vmatpush1.msra.mxu0 0.0
        %3091 = vmatprep.subr.mxu0 0.0
        %3092 = vmatpush1.msra.mxu0 0.0
        %3093 = vmatprep.subr.mxu0 0.0
        %3094 = vmatpush1.msra.mxu0 0.0
        %3095 = vmatprep.subr.mxu0 0.0
        %3096 = vmatpush1.msra.mxu0 0.0
        %3097 = vmatprep.subr.mxu0 0.0
        %3098 = vmatpush1.msra.mxu0 0.0
        %3099 = vmatprep.subr.mxu0 0.0
        %3100 = vmatpush1.msra.mxu0 0.0
        %3101 = vmatprep.subr.mxu0 0.0
        %3102 = vmatpush1.msra.mxu0 0.0
        %3103 = vmatprep.subr.mxu0 0.0
        %3104 = vmatpush1.msra.mxu0 0.0
        %3105 = vmatprep.subr.mxu0 0.0
        %3106 = vmatpush1.msra.mxu0 0.0
        %3107 = vmatprep.subr.mxu0 0.0
        %3108 = vmatpush1.msra.mxu0 0.0
        %3109 = vmatprep.subr.mxu0 0.0
        %3110 = vmatpush1.msra.mxu0 0.0
        %3111 = vmatprep.subr.mxu0 0.0
        %3112 = vmatpush1.msra.mxu0 0.0
        %3113 = vmatprep.subr.mxu0 0.0
        %3114 = vmatpush1.msra.mxu0 0.0
        %3115 = vmatprep.subr.mxu0 0.0
        %3116 = vmatpush1.msra.mxu0 0.0
        %3117 = vmatprep.subr.mxu0 0.0
        %3118 = vmatpush1.msra.mxu0 0.0
        %3119 = vmatprep.subr.mxu0 0.0
        %3120 = vmatpush1.msra.mxu0 0.0
        %3121 = vmatprep.subr.mxu0 0.0
        %3122 = vmatpush1.msra.mxu0 0.0
        %3123 = vmatprep.subr.mxu0 0.0
        %3124 = vmatpush1.msra.mxu0 0.0
        %3125 = vmatprep.subr.mxu0 0.0
        %3126 = vmatpush1.msra.mxu0 0.0
        %3127 = vmatprep.subr.mxu0 0.0
        %3128 = vmatpush1.msra.mxu0 0.0
        %3129 = vmatprep.subr.mxu0 0.0
        %3130 = vmatpush1.msra.mxu0 0.0
        %3131 = vmatprep.subr.mxu0 0.0
        %3132 = vmatpush1.msra.mxu0 0.0
        %3133 = vmatprep.subr.mxu0 0.0
        %3134 = vmatpush1.msra.mxu0 0.0
        %3135 = vmatprep.subr.mxu0 0.0
        %3136 = vmatpush1.msra.mxu0 0.0
        %3137 = vmatprep.subr.mxu0 0.0
        %3138 = vmatpush1.msra.mxu0 0.0
        %3139 = vmatprep.subr.mxu0 0.0
        %3140 = vmatpush1.msra.mxu0 0.0
        %3141 = vmatprep.mubr.f32.mxu0 0.0
        %3142 = vmatmul.mubr.f32.gmra.mrb[0].mxu0 %v2799
        %v3143 = vpop.f32.mrb[0].mxu0
        %v3144 = vadd.f32 %v2776, %v3143
        %v3145 = vpop.f32.mrb[0].mxu0
        %v3146 = vadd.f32 %v2778, %v3145
        %3147 = vmatprep.mubr.f32.mxu0 0.0
        %3148 = vmatmul.mubr.f32.gmra.mrb[0].mxu0 %v2802
        %v3149 = vpop.f32.mrb[0].mxu0
        %v3150 = vadd.f32 %v2782, %v3149
        %v3151 = vpop.f32.mrb[0].mxu0
        %v3152 = vadd.f32 %v2784, %v3151
        %3153 = vmatprep.mubr.f32.mxu0 0.0
        %3154 = vmatmul.mubr.f32.gmra.mrb[0].mxu0 %v2805
        %v3155 = vpop.f32.mrb[0].mxu0
        %v3156 = vadd.f32 %v2788, %v3155
        %v3157 = vpop.f32.mrb[0].mxu0
        %v3158 = vadd.f32 %v2790, %v3157
        %3159 = vmatprep.mubr.f32.mxu0 0.0
        %3160 = vmatmul.mubr.f32.gmra.mrb[0].mxu0 %v2808
        %v3161 = vpop.f32.mrb[0].mxu0
        %v3162 = vadd.f32 %v2794, %v3161
        %v3163 = vpop.f32.mrb[0].mxu0
        %v3164 = vadd.f32 %v2796, %v3163
        %3165 = vdwg.mxu0
        %v3167 = vsel %vm1179, %v2426, 0
        %v3170 = vsel %vm1179, %v2427, 0
        %v3173 = vsel %vm1179, %v2428, 0
        %v3176 = vsel %vm1179, %v2429, 0
        %3178 = vmatprep.subr.mxu0 %v2403
        %3179 = vmatpush1.msra.mxu0 %v2402
        %3180 = vmatprep.subr.mxu0 %v2411
        %3181 = vmatpush1.msra.mxu0 %v2410
        %3182 = vmatprep.subr.mxu0 0.0
        %3183 = vmatpush1.msra.mxu0 0.0
        %3184 = vmatprep.subr.mxu0 0.0
        %3185 = vmatpush1.msra.mxu0 0.0
        %3186 = vmatprep.subr.mxu0 0.0
        %3187 = vmatpush1.msra.mxu0 0.0
        %3188 = vmatprep.subr.mxu0 0.0
        %3189 = vmatpush1.msra.mxu0 0.0
        %3190 = vmatprep.subr.mxu0 0.0
        %3191 = vmatpush1.msra.mxu0 0.0
        %3192 = vmatprep.subr.mxu0 0.0
        %3193 = vmatpush1.msra.mxu0 0.0
        %3194 = vmatprep.subr.mxu0 0.0
        %3195 = vmatpush1.msra.mxu0 0.0
        %3196 = vmatprep.subr.mxu0 0.0
        %3197 = vmatpush1.msra.mxu0 0.0
        %3198 = vmatprep.subr.mxu0 0.0
        %3199 = vmatpush1.msra.mxu0 0.0
        %3200 = vmatprep.subr.mxu0 0.0
        %3201 = vmatpush1.msra.mxu0 0.0
        %3202 = vmatprep.subr.mxu0 0.0
        %3203 = vmatpush1.msra.mxu0 0.0
        %3204 = vmatprep.subr.mxu0 0.0
        %3205 = vmatpush1.msra.mxu0 0.0
        %3206 = vmatprep.subr.mxu0 0.0
        %3207 = vmatpush1.msra.mxu0 0.0
        %3208 = vmatprep.subr.mxu0 0.0
        %3209 = vmatpush1.msra.mxu0 0.0
        %3210 = vmatprep.subr.mxu0 0.0
        %3211 = vmatpush1.msra.mxu0 0.0
        %3212 = vmatprep.subr.mxu0 0.0
        %3213 = vmatpush1.msra.mxu0 0.0
        %3214 = vmatprep.subr.mxu0 0.0
        %3215 = vmatpush1.msra.mxu0 0.0
        %3216 = vmatprep.subr.mxu0 0.0
        %3217 = vmatpush1.msra.mxu0 0.0
        %3218 = vmatprep.subr.mxu0 0.0
        %3219 = vmatpush1.msra.mxu0 0.0
        %3220 = vmatprep.subr.mxu0 0.0
        %3221 = vmatpush1.msra.mxu0 0.0
        %3222 = vmatprep.subr.mxu0 0.0
        %3223 = vmatpush1.msra.mxu0 0.0
        %3224 = vmatprep.subr.mxu0 0.0
        %3225 = vmatpush1.msra.mxu0 0.0
        %3226 = vmatprep.subr.mxu0 0.0
        %3227 = vmatpush1.msra.mxu0 0.0
        %3228 = vmatprep.subr.mxu0 0.0
        %3229 = vmatpush1.msra.mxu0 0.0
        %3230 = vmatprep.subr.mxu0 0.0
        %3231 = vmatpush1.msra.mxu0 0.0
        %3232 = vmatprep.subr.mxu0 0.0
        %3233 = vmatpush1.msra.mxu0 0.0
        %3234 = vmatprep.subr.mxu0 0.0
        %3235 = vmatpush1.msra.mxu0 0.0
        %3236 = vmatprep.subr.mxu0 0.0
        %3237 = vmatpush1.msra.mxu0 0.0
        %3238 = vmatprep.subr.mxu0 0.0
        %3239 = vmatpush1.msra.mxu0 0.0
        %3240 = vmatprep.subr.mxu0 0.0
        %3241 = vmatpush1.msra.mxu0 0.0
        %3242 = vmatprep.mubr.f32.mxu0 0.0
        %3243 = vmatmul.mubr.f32.gmra.mrb[0].mxu0 %v3167
        %v3244 = vpop.f32.mrb[0].mxu0
        %v3245 = vadd.f32 0.0, %v3244
        %v3246 = vpop.f32.mrb[0].mxu0
        %v3247 = vadd.f32 0.0, %v3246
        %3248 = vmatprep.mubr.f32.mxu0 0.0
        %3249 = vmatmul.mubr.f32.gmra.mrb[0].mxu0 %v3170
        %v3250 = vpop.f32.mrb[0].mxu0
        %v3251 = vadd.f32 0.0, %v3250
        %v3252 = vpop.f32.mrb[0].mxu0
        %v3253 = vadd.f32 0.0, %v3252
        %3254 = vmatprep.mubr.f32.mxu0 0.0
        %3255 = vmatmul.mubr.f32.gmra.mrb[0].mxu0 %v3173
        %v3256 = vpop.f32.mrb[0].mxu0
        %v3257 = vadd.f32 0.0, %v3256
        %v3258 = vpop.f32.mrb[0].mxu0
        %v3259 = vadd.f32 0.0, %v3258
        %3260 = vmatprep.mubr.f32.mxu0 0.0
        %3261 = vmatmul.mubr.f32.gmra.mrb[0].mxu0 %v3176
        %v3262 = vpop.f32.mrb[0].mxu0
        %v3263 = vadd.f32 0.0, %v3262
        %v3264 = vpop.f32.mrb[0].mxu0
        %v3265 = vadd.f32 0.0, %v3264
        %3266 = vdwg.mxu0
        %3267 = vmatprep.subr.mxu0 %v2405
        %3268 = vmatpush1.msra.mxu0 %v2404
        %3269 = vmatprep.subr.mxu0 %v2413
        %3270 = vmatpush1.msra.mxu0 %v2412
        %3271 = vmatprep.subr.mxu0 0.0
        %3272 = vmatpush1.msra.mxu0 0.0
        %3273 = vmatprep.subr.mxu0 0.0
        %3274 = vmatpush1.msra.mxu0 0.0
        %3275 = vmatprep.subr.mxu0 0.0
        %3276 = vmatpush1.msra.mxu0 0.0
        %3277 = vmatprep.subr.mxu0 0.0
        %3278 = vmatpush1.msra.mxu0 0.0
        %3279 = vmatprep.subr.mxu0 0.0
        %3280 = vmatpush1.msra.mxu0 0.0
        %3281 = vmatprep.subr.mxu0 0.0
        %3282 = vmatpush1.msra.mxu0 0.0
        %3283 = vmatprep.subr.mxu0 0.0
        %3284 = vmatpush1.msra.mxu0 0.0
        %3285 = vmatprep.subr.mxu0 0.0
        %3286 = vmatpush1.msra.mxu0 0.0
        %3287 = vmatprep.subr.mxu0 0.0
        %3288 = vmatpush1.msra.mxu0 0.0
        %3289 = vmatprep.subr.mxu0 0.0
        %3290 = vmatpush1.msra.mxu0 0.0
        %3291 = vmatprep.subr.mxu0 0.0
        %3292 = vmatpush1.msra.mxu0 0.0
        %3293 = vmatprep.subr.mxu0 0.0
        %3294 = vmatpush1.msra.mxu0 0.0
        %3295 = vmatprep.subr.mxu0 0.0
        %3296 = vmatpush1.msra.mxu0 0.0
        %3297 = vmatprep.subr.mxu0 0.0
        %3298 = vmatpush1.msra.mxu0 0.0
        %3299 = vmatprep.subr.mxu0 0.0
        %3300 = vmatpush1.msra.mxu0 0.0
        %3301 = vmatprep.subr.mxu0 0.0
        %3302 = vmatpush1.msra.mxu0 0.0
        %3303 = vmatprep.subr.mxu0 0.0
        %3304 = vmatpush1.msra.mxu0 0.0
        %3305 = vmatprep.subr.mxu0 0.0
        %3306 = vmatpush1.msra.mxu0 0.0
        %3307 = vmatprep.subr.mxu0 0.0
        %3308 = vmatpush1.msra.mxu0 0.0
        %3309 = vmatprep.subr.mxu0 0.0
        %3310 = vmatpush1.msra.mxu0 0.0
        %3311 = vmatprep.subr.mxu0 0.0
        %3312 = vmatpush1.msra.mxu0 0.0
        %3313 = vmatprep.subr.mxu0 0.0
        %3314 = vmatpush1.msra.mxu0 0.0
        %3315 = vmatprep.subr.mxu0 0.0
        %3316 = vmatpush1.msra.mxu0 0.0
        %3317 = vmatprep.subr.mxu0 0.0
        %3318 = vmatpush1.msra.mxu0 0.0
        %3319 = vmatprep.subr.mxu0 0.0
        %3320 = vmatpush1.msra.mxu0 0.0
        %3321 = vmatprep.subr.mxu0 0.0
        %3322 = vmatpush1.msra.mxu0 0.0
        %3323 = vmatprep.subr.mxu0 0.0
        %3324 = vmatpush1.msra.mxu0 0.0
        %3325 = vmatprep.subr.mxu0 0.0
        %3326 = vmatpush1.msra.mxu0 0.0
        %3327 = vmatprep.subr.mxu0 0.0
        %3328 = vmatpush1.msra.mxu0 0.0
        %3329 = vmatprep.subr.mxu0 0.0
        %3330 = vmatpush1.msra.mxu0 0.0
        %3331 = vmatprep.mubr.f32.mxu0 0.0
        %3332 = vmatmul.mubr.f32.gmra.mrb[0].mxu0 %v3167
        %v3333 = vpop.f32.mrb[0].mxu0
        %v3334 = vadd.f32 0.0, %v3333
        %v3335 = vpop.f32.mrb[0].mxu0
        %v3336 = vadd.f32 0.0, %v3335
        %3337 = vmatprep.mubr.f32.mxu0 0.0
        %3338 = vmatmul.mubr.f32.gmra.mrb[0].mxu0 %v3170
        %v3339 = vpop.f32.mrb[0].mxu0
        %v3340 = vadd.f32 0.0, %v3339
        %v3341 = vpop.f32.mrb[0].mxu0
        %v3342 = vadd.f32 0.0, %v3341
        %3343 = vmatprep.mubr.f32.mxu0 0.0
        %3344 = vmatmul.mubr.f32.gmra.mrb[0].mxu0 %v3173
        %v3345 = vpop.f32.mrb[0].mxu0
        %v3346 = vadd.f32 0.0, %v3345
        %v3347 = vpop.f32.mrb[0].mxu0
        %v3348 = vadd.f32 0.0, %v3347
        %3349 = vmatprep.mubr.f32.mxu0 0.0
        %3350 = vmatmul.mubr.f32.gmra.mrb[0].mxu0 %v3176
        %v3351 = vpop.f32.mrb[0].mxu0
        %v3352 = vadd.f32 0.0, %v3351
        %v3353 = vpop.f32.mrb[0].mxu0
        %v3354 = vadd.f32 0.0, %v3353
        %3355 = vdwg.mxu0
        %3356 = vmatprep.subr.mxu0 %v2407
        %3357 = vmatpush1.msra.mxu0 %v2406
        %3358 = vmatprep.subr.mxu0 %v2415
        %3359 = vmatpush1.msra.mxu0 %v2414
        %3360 = vmatprep.subr.mxu0 0.0
        %3361 = vmatpush1.msra.mxu0 0.0
        %3362 = vmatprep.subr.mxu0 0.0
        %3363 = vmatpush1.msra.mxu0 0.0
        %3364 = vmatprep.subr.mxu0 0.0
        %3365 = vmatpush1.msra.mxu0 0.0
        %3366 = vmatprep.subr.mxu0 0.0
        %3367 = vmatpush1.msra.mxu0 0.0
        %3368 = vmatprep.subr.mxu0 0.0
        %3369 = vmatpush1.msra.mxu0 0.0
        %3370 = vmatprep.subr.mxu0 0.0
        %3371 = vmatpush1.msra.mxu0 0.0
        %3372 = vmatprep.subr.mxu0 0.0
        %3373 = vmatpush1.msra.mxu0 0.0
        %3374 = vmatprep.subr.mxu0 0.0
        %3375 = vmatpush1.msra.mxu0 0.0
        %3376 = vmatprep.subr.mxu0 0.0
        %3377 = vmatpush1.msra.mxu0 0.0
        %3378 = vmatprep.subr.mxu0 0.0
        %3379 = vmatpush1.msra.mxu0 0.0
        %3380 = vmatprep.subr.mxu0 0.0
        %3381 = vmatpush1.msra.mxu0 0.0
        %3382 = vmatprep.subr.mxu0 0.0
        %3383 = vmatpush1.msra.mxu0 0.0
        %3384 = vmatprep.subr.mxu0 0.0
        %3385 = vmatpush1.msra.mxu0 0.0
        %3386 = vmatprep.subr.mxu0 0.0
        %3387 = vmatpush1.msra.mxu0 0.0
        %3388 = vmatprep.subr.mxu0 0.0
        %3389 = vmatpush1.msra.mxu0 0.0
        %3390 = vmatprep.subr.mxu0 0.0
        %3391 = vmatpush1.msra.mxu0 0.0
        %3392 = vmatprep.subr.mxu0 0.0
        %3393 = vmatpush1.msra.mxu0 0.0
        %3394 = vmatprep.subr.mxu0 0.0
        %3395 = vmatpush1.msra.mxu0 0.0
        %3396 = vmatprep.subr.mxu0 0.0
        %3397 = vmatpush1.msra.mxu0 0.0
        %3398 = vmatprep.subr.mxu0 0.0
        %3399 = vmatpush1.msra.mxu0 0.0
        %3400 = vmatprep.subr.mxu0 0.0
        %3401 = vmatpush1.msra.mxu0 0.0
        %3402 = vmatprep.subr.mxu0 0.0
        %3403 = vmatpush1.msra.mxu0 0.0
        %3404 = vmatprep.subr.mxu0 0.0
        %3405 = vmatpush1.msra.mxu0 0.0
        %3406 = vmatprep.subr.mxu0 0.0
        %3407 = vmatpush1.msra.mxu0 0.0
        %3408 = vmatprep.subr.mxu0 0.0
        %3409 = vmatpush1.msra.mxu0 0.0
        %3410 = vmatprep.subr.mxu0 0.0
        %3411 = vmatpush1.msra.mxu0 0.0
        %3412 = vmatprep.subr.mxu0 0.0
        %3413 = vmatpush1.msra.mxu0 0.0
        %3414 = vmatprep.subr.mxu0 0.0
        %3415 = vmatpush1.msra.mxu0 0.0
        %3416 = vmatprep.subr.mxu0 0.0
        %3417 = vmatpush1.msra.mxu0 0.0
        %3418 = vmatprep.subr.mxu0 0.0
        %3419 = vmatpush1.msra.mxu0 0.0
        %3420 = vmatprep.mubr.f32.mxu0 0.0
        %3421 = vmatmul.mubr.f32.gmra.mrb[0].mxu0 %v3167
        %v3422 = vpop.f32.mrb[0].mxu0
        %v3423 = vadd.f32 0.0, %v3422
        %v3424 = vpop.f32.mrb[0].mxu0
        %v3425 = vadd.f32 0.0, %v3424
        %3426 = vmatprep.mubr.f32.mxu0 0.0
        %3427 = vmatmul.mubr.f32.gmra.mrb[0].mxu0 %v3170
        %v3428 = vpop.f32.mrb[0].mxu0
        %v3429 = vadd.f32 0.0, %v3428
        %v3430 = vpop.f32.mrb[0].mxu0
        %v3431 = vadd.f32 0.0, %v3430
        %3432 = vmatprep.mubr.f32.mxu0 0.0
        %3433 = vmatmul.mubr.f32.gmra.mrb[0].mxu0 %v3173
        %v3434 = vpop.f32.mrb[0].mxu0
        %v3435 = vadd.f32 0.0, %v3434
        %v3436 = vpop.f32.mrb[0].mxu0
        %v3437 = vadd.f32 0.0, %v3436
        %3438 = vmatprep.mubr.f32.mxu0 0.0
        %3439 = vmatmul.mubr.f32.gmra.mrb[0].mxu0 %v3176
        %v3440 = vpop.f32.mrb[0].mxu0
        %v3441 = vadd.f32 0.0, %v3440
        %v3442 = vpop.f32.mrb[0].mxu0
        %v3443 = vadd.f32 0.0, %v3442
        %3444 = vdwg.mxu0
        %3445 = vmatprep.subr.mxu0 %v2409
        %3446 = vmatpush1.msra.mxu0 %v2408
        %3447 = vmatprep.subr.mxu0 %v2417
        %3448 = vmatpush1.msra.mxu0 %v2416
        %3449 = vmatprep.subr.mxu0 0.0
        %3450 = vmatpush1.msra.mxu0 0.0
        %3451 = vmatprep.subr.mxu0 0.0
        %3452 = vmatpush1.msra.mxu0 0.0
        %3453 = vmatprep.subr.mxu0 0.0
        %3454 = vmatpush1.msra.mxu0 0.0
        %3455 = vmatprep.subr.mxu0 0.0
        %3456 = vmatpush1.msra.mxu0 0.0
        %3457 = vmatprep.subr.mxu0 0.0
        %3458 = vmatpush1.msra.mxu0 0.0
        %3459 = vmatprep.subr.mxu0 0.0
        %3460 = vmatpush1.msra.mxu0 0.0
        %3461 = vmatprep.subr.mxu0 0.0
        %3462 = vmatpush1.msra.mxu0 0.0
        %3463 = vmatprep.subr.mxu0 0.0
        %3464 = vmatpush1.msra.mxu0 0.0
        %3465 = vmatprep.subr.mxu0 0.0
        %3466 = vmatpush1.msra.mxu0 0.0
        %3467 = vmatprep.subr.mxu0 0.0
        %3468 = vmatpush1.msra.mxu0 0.0
        %3469 = vmatprep.subr.mxu0 0.0
        %3470 = vmatpush1.msra.mxu0 0.0
        %3471 = vmatprep.subr.mxu0 0.0
        %3472 = vmatpush1.msra.mxu0 0.0
        %3473 = vmatprep.subr.mxu0 0.0
        %3474 = vmatpush1.msra.mxu0 0.0
        %3475 = vmatprep.subr.mxu0 0.0
        %3476 = vmatpush1.msra.mxu0 0.0
        %3477 = vmatprep.subr.mxu0 0.0
        %3478 = vmatpush1.msra.mxu0 0.0
        %3479 = vmatprep.subr.mxu0 0.0
        %3480 = vmatpush1.msra.mxu0 0.0
        %3481 = vmatprep.subr.mxu0 0.0
        %3482 = vmatpush1.msra.mxu0 0.0
        %3483 = vmatprep.subr.mxu0 0.0
        %3484 = vmatpush1.msra.mxu0 0.0
        %3485 = vmatprep.subr.mxu0 0.0
        %3486 = vmatpush1.msra.mxu0 0.0
        %3487 = vmatprep.subr.mxu0 0.0
        %3488 = vmatpush1.msra.mxu0 0.0
        %3489 = vmatprep.subr.mxu0 0.0
        %3490 = vmatpush1.msra.mxu0 0.0
        %3491 = vmatprep.subr.mxu0 0.0
        %3492 = vmatpush1.msra.mxu0 0.0
        %3493 = vmatprep.subr.mxu0 0.0
        %3494 = vmatpush1.msra.mxu0 0.0
        %3495 = vmatprep.subr.mxu0 0.0
        %3496 = vmatpush1.msra.mxu0 0.0
        %3497 = vmatprep.subr.mxu0 0.0
        %3498 = vmatpush1.msra.mxu0 0.0
        %3499 = vmatprep.subr.mxu0 0.0
        %3500 = vmatpush1.msra.mxu0 0.0
        %3501 = vmatprep.subr.mxu0 0.0
        %3502 = vmatpush1.msra.mxu0 0.0
        %3503 = vmatprep.subr.mxu0 0.0
        %3504 = vmatpush1.msra.mxu0 0.0
        %3505 = vmatprep.subr.mxu0 0.0
        %3506 = vmatpush1.msra.mxu0 0.0
        %3507 = vmatprep.subr.mxu0 0.0
        %3508 = vmatpush1.msra.mxu0 0.0
        %3509 = vmatprep.mubr.f32.mxu0 0.0
        %3510 = vmatmul.mubr.f32.gmra.mrb[0].mxu0 %v3167
        %v3511 = vpop.f32.mrb[0].mxu0
        %v3512 = vadd.f32 0.0, %v3511
        %v3513 = vpop.f32.mrb[0].mxu0
        %v3514 = vadd.f32 0.0, %v3513
        %3515 = vmatprep.mubr.f32.mxu0 0.0
        %3516 = vmatmul.mubr.f32.gmra.mrb[0].mxu0 %v3170
        %v3517 = vpop.f32.mrb[0].mxu0
        %v3518 = vadd.f32 0.0, %v3517
        %v3519 = vpop.f32.mrb[0].mxu0
        %v3520 = vadd.f32 0.0, %v3519
        %3521 = vmatprep.mubr.f32.mxu0 0.0
        %3522 = vmatmul.mubr.f32.gmra.mrb[0].mxu0 %v3173
        %v3523 = vpop.f32.mrb[0].mxu0
        %v3524 = vadd.f32 0.0, %v3523
        %v3525 = vpop.f32.mrb[0].mxu0
        %v3526 = vadd.f32 0.0, %v3525
        %3527 = vmatprep.mubr.f32.mxu0 0.0
        %3528 = vmatmul.mubr.f32.gmra.mrb[0].mxu0 %v3176
        %v3529 = vpop.f32.mrb[0].mxu0
        %v3530 = vadd.f32 0.0, %v3529
        %v3531 = vpop.f32.mrb[0].mxu0
        %v3532 = vadd.f32 0.0, %v3531
        %3533 = vdwg.mxu0
        %v3534 = vadd.f32 %v2877, %v3245
        %v3535 = vadd.f32 %v2879, %v3247
        %v3536 = vadd.f32 %v2966, %v3334
        %v3537 = vadd.f32 %v2968, %v3336
        %v3538 = vadd.f32 %v3055, %v3423
        %v3539 = vadd.f32 %v3057, %v3425
        %v3540 = vadd.f32 %v3144, %v3512
        %v3541 = vadd.f32 %v3146, %v3514
        %v3542 = vadd.f32 %v2883, %v3251
        %v3543 = vadd.f32 %v2885, %v3253
        %v3544 = vadd.f32 %v2972, %v3340
        %v3545 = vadd.f32 %v2974, %v3342
        %v3546 = vadd.f32 %v3061, %v3429
        %v3547 = vadd.f32 %v3063, %v3431
        %v3548 = vadd.f32 %v3150, %v3518
        %v3549 = vadd.f32 %v3152, %v3520
        %v3550 = vadd.f32 %v2889, %v3257
        %v3551 = vadd.f32 %v2891, %v3259
        %v3552 = vadd.f32 %v2978, %v3346
        %v3553 = vadd.f32 %v2980, %v3348
        %v3554 = vadd.f32 %v3067, %v3435
        %v3555 = vadd.f32 %v3069, %v3437
        %v3556 = vadd.f32 %v3156, %v3524
        %v3557 = vadd.f32 %v3158, %v3526
        %v3558 = vadd.f32 %v2895, %v3263
        %v3559 = vadd.f32 %v2897, %v3265
        %v3560 = vadd.f32 %v2984, %v3352
        %v3561 = vadd.f32 %v2986, %v3354
        %v3562 = vadd.f32 %v3073, %v3441
        %v3563 = vadd.f32 %v3075, %v3443
        %v3564 = vadd.f32 %v3162, %v3530
        %v3565 = vadd.f32 %v3164, %v3532
        %v3566 = vld [vmem:[%s10] sm:$0xff]
        %v3567 = vld [vmem:[%s10 + $0x8] sm:$0xff]
        %v3568 = vld [vmem:[%s10 + $0x10] sm:$0xff]
        %v3569 = vld [vmem:[%s10 + $0x18] sm:$0xff]
        %3571 = vset.pattern.permute.xlu0 0
        %3572 = vperm.xlu0 %3571, %v3566
        %v3573 = vpop.permute.xlu0 %3572
        %3576 = vset.pattern.permute.xlu0 0
        %3577 = vperm.xlu0 %3576, %v3567
        %v3578 = vpop.permute.xlu0 %3577
        %3581 = vset.pattern.permute.xlu0 0
        %3582 = vperm.xlu0 %3581, %v3568
        %v3583 = vpop.permute.xlu0 %3582
        %3586 = vset.pattern.permute.xlu0 0
        %3587 = vperm.xlu0 %3586, %v3569
        %v3588 = vpop.permute.xlu0 %3587
        %v3590 = vadd.f32 %v3534, %v3573
        %v3591 = vadd.f32 %v3535, %v3573
        %v3592 = vadd.f32 %v3536, %v3573
        %v3593 = vadd.f32 %v3537, %v3573
        %v3594 = vadd.f32 %v3538, %v3573
        %v3595 = vadd.f32 %v3539, %v3573
        %v3596 = vadd.f32 %v3540, %v3573
        %v3597 = vadd.f32 %v3541, %v3573
        %v3598 = vadd.f32 %v3542, %v3578
        %v3599 = vadd.f32 %v3543, %v3578
        %v3600 = vadd.f32 %v3544, %v3578
        %v3601 = vadd.f32 %v3545, %v3578
        %v3602 = vadd.f32 %v3546, %v3578
        %v3603 = vadd.f32 %v3547, %v3578
        %v3604 = vadd.f32 %v3548, %v3578
        %v3605 = vadd.f32 %v3549, %v3578
        %v3606 = vadd.f32 %v3550, %v3583
        %v3607 = vadd.f32 %v3551, %v3583
        %v3608 = vadd.f32 %v3552, %v3583
        %v3609 = vadd.f32 %v3553, %v3583
        %v3610 = vadd.f32 %v3554, %v3583
        %v3611 = vadd.f32 %v3555, %v3583
        %v3612 = vadd.f32 %v3556, %v3583
        %v3613 = vadd.f32 %v3557, %v3583
        %v3614 = vadd.f32 %v3558, %v3588
        %v3615 = vadd.f32 %v3559, %v3588
        %v3616 = vadd.f32 %v3560, %v3588
        %v3617 = vadd.f32 %v3561, %v3588
        %v3618 = vadd.f32 %v3562, %v3588
        %v3619 = vadd.f32 %v3563, %v3588
        %v3620 = vadd.f32 %v3564, %v3588
        %v3621 = vadd.f32 %v3565, %v3588
        %v3622 = vmax.f32 %v3590, 0.0
        %v3623 = vmax.f32 %v3591, 0.0
        %v3624 = vmax.f32 %v3592, 0.0
        %v3625 = vmax.f32 %v3593, 0.0
        %v3626 = vmax.f32 %v3594, 0.0
        %v3627 = vmax.f32 %v3595, 0.0
        %v3628 = vmax.f32 %v3596, 0.0
        %v3629 = vmax.f32 %v3597, 0.0
        %v3630 = vmax.f32 %v3598, 0.0
        %v3631 = vmax.f32 %v3599, 0.0
        %v3632 = vmax.f32 %v3600, 0.0
        %v3633 = vmax.f32 %v3601, 0.0
        %v3634 = vmax.f32 %v3602, 0.0
        %v3635 = vmax.f32 %v3603, 0.0
        %v3636 = vmax.f32 %v3604, 0.0
        %v3637 = vmax.f32 %v3605, 0.0
        %v3638 = vmax.f32 %v3606, 0.0
        %v3639 = vmax.f32 %v3607, 0.0
        %v3640 = vmax.f32 %v3608, 0.0
        %v3641 = vmax.f32 %v3609, 0.0
        %v3642 = vmax.f32 %v3610, 0.0
        %v3643 = vmax.f32 %v3611, 0.0
        %v3644 = vmax.f32 %v3612, 0.0
        %v3645 = vmax.f32 %v3613, 0.0
        %v3646 = vmax.f32 %v3614, 0.0
        %v3647 = vmax.f32 %v3615, 0.0
        %v3648 = vmax.f32 %v3616, 0.0
        %v3649 = vmax.f32 %v3617, 0.0
        %v3650 = vmax.f32 %v3618, 0.0
        %v3651 = vmax.f32 %v3619, 0.0
        %v3652 = vmax.f32 %v3620, 0.0
        %v3653 = vmax.f32 %v3621, 0.0
        %3654 = vrot.lane.b32.xlu0 %v3622, 124
        %v3655 = vpop.permute.xlu0 %3654
        %3656 = vrot.lane.b32.xlu0 %v3630, 124
        %v3657 = vpop.permute.xlu0 %3656
        %3658 = vrot.lane.b32.xlu0 %v3638, 124
        %v3659 = vpop.permute.xlu0 %3658
        %3660 = vrot.lane.b32.xlu0 %v3646, 124
        %v3661 = vpop.permute.xlu0 %3660
        %3662 = vrot.lane.b32.xlu0 %v3623, 124
        %v3663 = vpop.permute.xlu0 %3662
        %3664 = vrot.lane.b32.xlu0 %v3631, 124
        %v3665 = vpop.permute.xlu0 %3664
        %3666 = vrot.lane.b32.xlu0 %v3639, 124
        %v3667 = vpop.permute.xlu0 %3666
        %3668 = vrot.lane.b32.xlu0 %v3647, 124
        %v3669 = vpop.permute.xlu0 %3668
        %3670 = vrot.lane.b32.xlu0 %v3624, 124
        %v3671 = vpop.permute.xlu0 %3670
        %3672 = vrot.lane.b32.xlu0 %v3632, 124
        %v3673 = vpop.permute.xlu0 %3672
        %3674 = vrot.lane.b32.xlu0 %v3640, 124
        %v3675 = vpop.permute.xlu0 %3674
        %3676 = vrot.lane.b32.xlu0 %v3648, 124
        %v3677 = vpop.permute.xlu0 %3676
        %3678 = vrot.lane.b32.xlu0 %v3625, 124
        %v3679 = vpop.permute.xlu0 %3678
        %3680 = vrot.lane.b32.xlu0 %v3633, 124
        %v3681 = vpop.permute.xlu0 %3680
        %3682 = vrot.lane.b32.xlu0 %v3641, 124
        %v3683 = vpop.permute.xlu0 %3682
        %3684 = vrot.lane.b32.xlu0 %v3649, 124
        %v3685 = vpop.permute.xlu0 %3684
        %3686 = vrot.lane.b32.xlu0 %v3626, 124
        %v3687 = vpop.permute.xlu0 %3686
        %3688 = vrot.lane.b32.xlu0 %v3634, 124
        %v3689 = vpop.permute.xlu0 %3688
        %3690 = vrot.lane.b32.xlu0 %v3642, 124
        %v3691 = vpop.permute.xlu0 %3690
        %3692 = vrot.lane.b32.xlu0 %v3650, 124
        %v3693 = vpop.permute.xlu0 %3692
        %3694 = vrot.lane.b32.xlu0 %v3627, 124
        %v3695 = vpop.permute.xlu0 %3694
        %3696 = vrot.lane.b32.xlu0 %v3635, 124
        %v3697 = vpop.permute.xlu0 %3696
        %3698 = vrot.lane.b32.xlu0 %v3643, 124
        %v3699 = vpop.permute.xlu0 %3698
        %3700 = vrot.lane.b32.xlu0 %v3651, 124
        %v3701 = vpop.permute.xlu0 %3700
        %3702 = vrot.lane.b32.xlu0 %v3628, 124
        %v3703 = vpop.permute.xlu0 %3702
        %3704 = vrot.lane.b32.xlu0 %v3636, 124
        %v3705 = vpop.permute.xlu0 %3704
        %3706 = vrot.lane.b32.xlu0 %v3644, 124
        %v3707 = vpop.permute.xlu0 %3706
        %3708 = vrot.lane.b32.xlu0 %v3652, 124
        %v3709 = vpop.permute.xlu0 %3708
        %3710 = vrot.lane.b32.xlu0 %v3629, 124
        %v3711 = vpop.permute.xlu0 %3710
        %3712 = vrot.lane.b32.xlu0 %v3637, 124
        %v3713 = vpop.permute.xlu0 %3712
        %3714 = vrot.lane.b32.xlu0 %v3645, 124
        %v3715 = vpop.permute.xlu0 %3714
        %3716 = vrot.lane.b32.xlu0 %v3653, 124
        %v3717 = vpop.permute.xlu0 %3716
        %v3718 = vsel %vm2344, %v3703, %v3711
        %v3719 = vsel %vm2344, %v3705, %v3713
        %v3720 = vsel %vm2344, %v3707, %v3715
        %v3721 = vsel %vm2344, %v3709, %v3717
        %v3722 = vsel %vm2344, %v3695, %v3703
        %v3723 = vsel %vm2344, %v3697, %v3705
        %v3724 = vsel %vm2344, %v3699, %v3707
        %v3725 = vsel %vm2344, %v3701, %v3709
        %v3726 = vsel %vm2344, %v3687, %v3695
        %v3727 = vsel %vm2344, %v3689, %v3697
        %v3728 = vsel %vm2344, %v3691, %v3699
        %v3729 = vsel %vm2344, %v3693, %v3701
        %v3730 = vsel %vm2344, %v3679, %v3687
        %v3731 = vsel %vm2344, %v3681, %v3689
        %v3732 = vsel %vm2344, %v3683, %v3691
        %v3733 = vsel %vm2344, %v3685, %v3693
        %v3734 = vsel %vm2344, %v3671, %v3679
        %v3735 = vsel %vm2344, %v3673, %v3681
        %v3736 = vsel %vm2344, %v3675, %v3683
        %v3737 = vsel %vm2344, %v3677, %v3685
        %v3738 = vsel %vm2344, %v3663, %v3671
        %v3739 = vsel %vm2344, %v3665, %v3673
        %v3740 = vsel %vm2344, %v3667, %v3675
        %v3741 = vsel %vm2344, %v3669, %v3677
        %v3742 = vsel %vm2344, %v3655, %v3663
        %v3743 = vsel %vm2344, %v3657, %v3665
        %v3744 = vsel %vm2344, %v3659, %v3667
        %v3745 = vsel %vm2344, %v3661, %v3669
        %v3746 = vsel %vm2344, %v3711, %v3655
        %v3747 = vsel %vm2344, %v3713, %v3657
        %v3748 = vsel %vm2344, %v3715, %v3659
        %v3749 = vsel %vm2344, %v3717, %v3661
        %v3750 = vmax.f32 %v3622, %v3742
        %v3751 = vmax.f32 %v3623, %v3738
        %v3752 = vmax.f32 %v3624, %v3734
        %v3753 = vmax.f32 %v3625, %v3730
        %v3754 = vmax.f32 %v3626, %v3726
        %v3755 = vmax.f32 %v3627, %v3722
        %v3756 = vmax.f32 %v3628, %v3718
        %v3757 = vmax.f32 %v3629, %v3746
        %v3758 = vmax.f32 %v3630, %v3743
        %v3759 = vmax.f32 %v3631, %v3739
        %v3760 = vmax.f32 %v3632, %v3735
        %v3761 = vmax.f32 %v3633, %v3731
        %v3762 = vmax.f32 %v3634, %v3727
        %v3763 = vmax.f32 %v3635, %v3723
        %v3764 = vmax.f32 %v3636, %v3719
        %v3765 = vmax.f32 %v3637, %v3747
        %v3766 = vmax.f32 %v3638, %v3744
        %v3767 = vmax.f32 %v3639, %v3740
        %v3768 = vmax.f32 %v3640, %v3736
        %v3769 = vmax.f32 %v3641, %v3732
        %v3770 = vmax.f32 %v3642, %v3728
        %v3771 = vmax.f32 %v3643, %v3724
        %v3772 = vmax.f32 %v3644, %v3720
        %v3773 = vmax.f32 %v3645, %v3748
        %v3774 = vmax.f32 %v3646, %v3745
        %v3775 = vmax.f32 %v3647, %v3741
        %v3776 = vmax.f32 %v3648, %v3737
        %v3777 = vmax.f32 %v3649, %v3733
        %v3778 = vmax.f32 %v3650, %v3729
        %v3779 = vmax.f32 %v3651, %v3725
        %v3780 = vmax.f32 %v3652, %v3721
        %v3781 = vmax.f32 %v3653, %v3749
        %v3782 = vld [vmem:[%s11] sm:$0xf]
        %v3783 = vld [vmem:[%s11 + $0x4] sm:$0xf]
        %v3784 = vld [vmem:[%s11 + $0x8] sm:$0xf]
        %v3785 = vld [vmem:[%s11 + $0xc] sm:$0xf]
        %v3786 = vld [vmem:[%s11 + $0x10] sm:$0xf]
        %v3787 = vld [vmem:[%s11 + $0x14] sm:$0xf]
        %v3788 = vld [vmem:[%s11 + $0x18] sm:$0xf]
        %v3789 = vld [vmem:[%s11 + $0x1c] sm:$0xf]
        %v3790 = vld [vmem:[%s11 + $0x20] sm:$0xf]
        %v3791 = vld [vmem:[%s11 + $0x24] sm:$0xf]
        %v3792 = vld [vmem:[%s11 + $0x28] sm:$0xf]
        %v3793 = vld [vmem:[%s11 + $0x2c] sm:$0xf]
        %v3794 = vld [vmem:[%s11 + $0x30] sm:$0xf]
        %v3795 = vld [vmem:[%s11 + $0x34] sm:$0xf]
        %v3796 = vld [vmem:[%s11 + $0x38] sm:$0xf]
        %v3797 = vld [vmem:[%s11 + $0x3c] sm:$0xf]
        %v3798 = vld [vmem:[%s11 + $0x40] sm:$0xf]
        %v3799 = vld [vmem:[%s11 + $0x44] sm:$0xf]
        %v3800 = vld [vmem:[%s11 + $0x48] sm:$0xf]
        %v3801 = vld [vmem:[%s11 + $0x4c] sm:$0xf]
        %v3802 = vld [vmem:[%s11 + $0x50] sm:$0xf]
        %v3803 = vld [vmem:[%s11 + $0x54] sm:$0xf]
        %v3804 = vld [vmem:[%s11 + $0x58] sm:$0xf]
        %v3805 = vld [vmem:[%s11 + $0x5c] sm:$0xf]
        %v3806 = vld [vmem:[%s11 + $0x60] sm:$0xf]
        %v3807 = vld [vmem:[%s11 + $0x64] sm:$0xf]
        %v3808 = vld [vmem:[%s11 + $0x68] sm:$0xf]
        %v3809 = vld [vmem:[%s11 + $0x6c] sm:$0xf]
        %v3810 = vld [vmem:[%s11 + $0x70] sm:$0xf]
        %v3811 = vld [vmem:[%s11 + $0x74] sm:$0xf]
        %v3812 = vld [vmem:[%s11 + $0x78] sm:$0xf]
        %v3813 = vld [vmem:[%s11 + $0x7c] sm:$0xf]
        %v3814 = vld [vmem:[%s11 + $0x80] sm:$0xf]
        %v3815 = vld [vmem:[%s11 + $0x84] sm:$0xf]
        %v3816 = vld [vmem:[%s11 + $0x88] sm:$0xf]
        %v3817 = vld [vmem:[%s11 + $0x8c] sm:$0xf]
        %v3818 = vld [vmem:[%s11 + $0x90] sm:$0xf]
        %v3819 = vld [vmem:[%s11 + $0x94] sm:$0xf]
        %v3820 = vld [vmem:[%s11 + $0x98] sm:$0xf]
        %v3821 = vld [vmem:[%s11 + $0x9c] sm:$0xf]
        %v3822 = vld [vmem:[%s11 + $0xa0] sm:$0xf]
        %v3823 = vld [vmem:[%s11 + $0xa4] sm:$0xf]
        %v3824 = vld [vmem:[%s11 + $0xa8] sm:$0xf]
        %v3825 = vld [vmem:[%s11 + $0xac] sm:$0xf]
        %v3826 = vld [vmem:[%s11 + $0xb0] sm:$0xf]
        %v3827 = vld [vmem:[%s11 + $0xb4] sm:$0xf]
        %v3828 = vld [vmem:[%s11 + $0xb8] sm:$0xf]
        %v3829 = vld [vmem:[%s11 + $0xbc] sm:$0xf]
        %v3830 = vld [vmem:[%s11 + $0xc0] sm:$0xf]
        %v3831 = vld [vmem:[%s11 + $0xc4] sm:$0xf]
        %v3832 = vld [vmem:[%s11 + $0xc8] sm:$0xf]
        %v3833 = vld [vmem:[%s11 + $0xcc] sm:$0xf]
        %v3834 = vld [vmem:[%s11 + $0xd0] sm:$0xf]
        %v3835 = vld [vmem:[%s11 + $0xd4] sm:$0xf]
        %v3836 = vld [vmem:[%s11 + $0xd8] sm:$0xf]
        %v3837 = vld [vmem:[%s11 + $0xdc] sm:$0xf]
        %v3838 = vld [vmem:[%s11 + $0xe0] sm:$0xf]
        %v3839 = vld [vmem:[%s11 + $0xe4] sm:$0xf]
        %v3840 = vld [vmem:[%s11 + $0xe8] sm:$0xf]
        %v3841 = vld [vmem:[%s11 + $0xec] sm:$0xf]
        %v3842 = vld [vmem:[%s11 + $0xf0] sm:$0xf]
        %v3843 = vld [vmem:[%s11 + $0xf4] sm:$0xf]
        %v3844 = vld [vmem:[%s11 + $0xf8] sm:$0xf]
        %v3845 = vld [vmem:[%s11 + $0xfc] sm:$0xf]
        %v3846 = vld [vmem:[%s11 + $0x100] sm:$0xf]
        %v3847 = vld [vmem:[%s11 + $0x104] sm:$0xf]
        %v3848 = vld [vmem:[%s11 + $0x108] sm:$0xf]
        %v3849 = vld [vmem:[%s11 + $0x10c] sm:$0xf]
        %v3850 = vld [vmem:[%s11 + $0x110] sm:$0xf]
        %v3851 = vld [vmem:[%s11 + $0x114] sm:$0xf]
        %v3852 = vld [vmem:[%s11 + $0x118] sm:$0xf]
        %v3853 = vld [vmem:[%s11 + $0x11c] sm:$0xf]
        %v3854 = vld [vmem:[%s11 + $0x120] sm:$0xf]
        %v3855 = vld [vmem:[%s11 + $0x124] sm:$0xf]
        %v3856 = vld [vmem:[%s11 + $0x128] sm:$0xf]
        %v3857 = vld [vmem:[%s11 + $0x12c] sm:$0xf]
        %v3858 = vld [vmem:[%s11 + $0x130] sm:$0xf]
        %v3859 = vld [vmem:[%s11 + $0x134] sm:$0xf]
        %v3860 = vld [vmem:[%s11 + $0x138] sm:$0xf]
        %v3861 = vld [vmem:[%s11 + $0x13c] sm:$0xf]
        %v3862 = vld [vmem:[%s11 + $0x140] sm:$0xf]
        %v3863 = vld [vmem:[%s11 + $0x144] sm:$0xf]
        %v3864 = vld [vmem:[%s11 + $0x148] sm:$0xf]
        %v3865 = vld [vmem:[%s11 + $0x14c] sm:$0xf]
        %v3866 = vld [vmem:[%s11 + $0x150] sm:$0xf]
        %v3867 = vld [vmem:[%s11 + $0x154] sm:$0xf]
        %v3868 = vld [vmem:[%s11 + $0x158] sm:$0xf]
        %v3869 = vld [vmem:[%s11 + $0x15c] sm:$0xf]
        %v3870 = vld [vmem:[%s11 + $0x160] sm:$0xf]
        %v3871 = vld [vmem:[%s11 + $0x164] sm:$0xf]
        %v3872 = vld [vmem:[%s11 + $0x168] sm:$0xf]
        %v3873 = vld [vmem:[%s11 + $0x16c] sm:$0xf]
        %v3874 = vld [vmem:[%s11 + $0x170] sm:$0xf]
        %v3875 = vld [vmem:[%s11 + $0x174] sm:$0xf]
        %v3876 = vld [vmem:[%s11 + $0x178] sm:$0xf]
        %v3877 = vld [vmem:[%s11 + $0x17c] sm:$0xf]
        %v3878 = vld [vmem:[%s11 + $0x180] sm:$0xf]
        %v3879 = vld [vmem:[%s11 + $0x184] sm:$0xf]
        %v3880 = vld [vmem:[%s11 + $0x188] sm:$0xf]
        %v3881 = vld [vmem:[%s11 + $0x18c] sm:$0xf]
        %v3882 = vld [vmem:[%s11 + $0x190] sm:$0xf]
        %v3883 = vld [vmem:[%s11 + $0x194] sm:$0xf]
        %v3884 = vld [vmem:[%s11 + $0x198] sm:$0xf]
        %v3885 = vld [vmem:[%s11 + $0x19c] sm:$0xf]
        %v3886 = vld [vmem:[%s11 + $0x1a0] sm:$0xf]
        %v3887 = vld [vmem:[%s11 + $0x1a4] sm:$0xf]
        %v3888 = vld [vmem:[%s11 + $0x1a8] sm:$0xf]
        %v3889 = vld [vmem:[%s11 + $0x1ac] sm:$0xf]
        %v3890 = vld [vmem:[%s11 + $0x1b0] sm:$0xf]
        %v3891 = vld [vmem:[%s11 + $0x1b4] sm:$0xf]
        %v3892 = vld [vmem:[%s11 + $0x1b8] sm:$0xf]
        %v3893 = vld [vmem:[%s11 + $0x1bc] sm:$0xf]
        %v3894 = vld [vmem:[%s11 + $0x1c0] sm:$0xf]
        %v3895 = vld [vmem:[%s11 + $0x1c4] sm:$0xf]
        %v3896 = vld [vmem:[%s11 + $0x1c8] sm:$0xf]
        %v3897 = vld [vmem:[%s11 + $0x1cc] sm:$0xf]
        %v3898 = vld [vmem:[%s11 + $0x1d0] sm:$0xf]
        %v3899 = vld [vmem:[%s11 + $0x1d4] sm:$0xf]
        %v3900 = vld [vmem:[%s11 + $0x1d8] sm:$0xf]
        %v3901 = vld [vmem:[%s11 + $0x1dc] sm:$0xf]
        %v3902 = vld [vmem:[%s11 + $0x1e0] sm:$0xf]
        %v3903 = vld [vmem:[%s11 + $0x1e4] sm:$0xf]
        %v3904 = vld [vmem:[%s11 + $0x1e8] sm:$0xf]
        %v3905 = vld [vmem:[%s11 + $0x1ec] sm:$0xf]
        %v3906 = vld [vmem:[%s11 + $0x1f0] sm:$0xf]
        %v3907 = vld [vmem:[%s11 + $0x1f4] sm:$0xf]
        %v3908 = vld [vmem:[%s11 + $0x1f8] sm:$0xf]
        %v3909 = vld [vmem:[%s11 + $0x1fc] sm:$0xf]
        %v3910 = vunpack.c.l.bf16 %v3782
        %v3911 = vunpack.c.l.bf16 %v3783
        %v3912 = vunpack.c.l.bf16 %v3784
        %v3913 = vunpack.c.l.bf16 %v3785
        %v3914 = vunpack.c.l.bf16 %v3786
        %v3915 = vunpack.c.l.bf16 %v3787
        %v3916 = vunpack.c.l.bf16 %v3788
        %v3917 = vunpack.c.l.bf16 %v3789
        %v3918 = vunpack.c.l.bf16 %v3790
        %v3919 = vunpack.c.l.bf16 %v3791
        %v3920 = vunpack.c.l.bf16 %v3792
        %v3921 = vunpack.c.l.bf16 %v3793
        %v3922 = vunpack.c.l.bf16 %v3794
        %v3923 = vunpack.c.l.bf16 %v3795
        %v3924 = vunpack.c.l.bf16 %v3796
        %v3925 = vunpack.c.l.bf16 %v3797
        %v3926 = vunpack.c.l.bf16 %v3798
        %v3927 = vunpack.c.l.bf16 %v3799
        %v3928 = vunpack.c.l.bf16 %v3800
        %v3929 = vunpack.c.l.bf16 %v3801
        %v3930 = vunpack.c.l.bf16 %v3802
        %v3931 = vunpack.c.l.bf16 %v3803
        %v3932 = vunpack.c.l.bf16 %v3804
        %v3933 = vunpack.c.l.bf16 %v3805
        %v3934 = vunpack.c.l.bf16 %v3806
        %v3935 = vunpack.c.l.bf16 %v3807
        %v3936 = vunpack.c.l.bf16 %v3808
        %v3937 = vunpack.c.l.bf16 %v3809
        %v3938 = vunpack.c.l.bf16 %v3810
        %v3939 = vunpack.c.l.bf16 %v3811
        %v3940 = vunpack.c.l.bf16 %v3812
        %v3941 = vunpack.c.l.bf16 %v3813
        %v3942 = vunpack.c.l.bf16 %v3814
        %v3943 = vunpack.c.l.bf16 %v3815
        %v3944 = vunpack.c.l.bf16 %v3816
        %v3945 = vunpack.c.l.bf16 %v3817
        %v3946 = vunpack.c.l.bf16 %v3818
        %v3947 = vunpack.c.l.bf16 %v3819
        %v3948 = vunpack.c.l.bf16 %v3820
        %v3949 = vunpack.c.l.bf16 %v3821
        %v3950 = vunpack.c.l.bf16 %v3822
        %v3951 = vunpack.c.l.bf16 %v3823
        %v3952 = vunpack.c.l.bf16 %v3824
        %v3953 = vunpack.c.l.bf16 %v3825
        %v3954 = vunpack.c.l.bf16 %v3826
        %v3955 = vunpack.c.l.bf16 %v3827
        %v3956 = vunpack.c.l.bf16 %v3828
        %v3957 = vunpack.c.l.bf16 %v3829
        %v3958 = vunpack.c.l.bf16 %v3830
        %v3959 = vunpack.c.l.bf16 %v3831
        %v3960 = vunpack.c.l.bf16 %v3832
        %v3961 = vunpack.c.l.bf16 %v3833
        %v3962 = vunpack.c.l.bf16 %v3834
        %v3963 = vunpack.c.l.bf16 %v3835
        %v3964 = vunpack.c.l.bf16 %v3836
        %v3965 = vunpack.c.l.bf16 %v3837
        %v3966 = vunpack.c.l.bf16 %v3838
        %v3967 = vunpack.c.l.bf16 %v3839
        %v3968 = vunpack.c.l.bf16 %v3840
        %v3969 = vunpack.c.l.bf16 %v3841
        %v3970 = vunpack.c.l.bf16 %v3842
        %v3971 = vunpack.c.l.bf16 %v3843
        %v3972 = vunpack.c.l.bf16 %v3844
        %v3973 = vunpack.c.l.bf16 %v3845
        %v3974 = vunpack.c.l.bf16 %v3846
        %v3975 = vunpack.c.l.bf16 %v3847
        %v3976 = vunpack.c.l.bf16 %v3848
        %v3977 = vunpack.c.l.bf16 %v3849
        %v3978 = vunpack.c.l.bf16 %v3850
        %v3979 = vunpack.c.l.bf16 %v3851
        %v3980 = vunpack.c.l.bf16 %v3852
        %v3981 = vunpack.c.l.bf16 %v3853
        %v3982 = vunpack.c.l.bf16 %v3854
        %v3983 = vunpack.c.l.bf16 %v3855
        %v3984 = vunpack.c.l.bf16 %v3856
        %v3985 = vunpack.c.l.bf16 %v3857
        %v3986 = vunpack.c.l.bf16 %v3858
        %v3987 = vunpack.c.l.bf16 %v3859
        %v3988 = vunpack.c.l.bf16 %v3860
        %v3989 = vunpack.c.l.bf16 %v3861
        %v3990 = vunpack.c.l.bf16 %v3862
        %v3991 = vunpack.c.l.bf16 %v3863
        %v3992 = vunpack.c.l.bf16 %v3864
        %v3993 = vunpack.c.l.bf16 %v3865
        %v3994 = vunpack.c.l.bf16 %v3866
        %v3995 = vunpack.c.l.bf16 %v3867
        %v3996 = vunpack.c.l.bf16 %v3868
        %v3997 = vunpack.c.l.bf16 %v3869
        %v3998 = vunpack.c.l.bf16 %v3870
        %v3999 = vunpack.c.l.bf16 %v3871
        %v4000 = vunpack.c.l.bf16 %v3872
        %v4001 = vunpack.c.l.bf16 %v3873
        %v4002 = vunpack.c.l.bf16 %v3874
        %v4003 = vunpack.c.l.bf16 %v3875
        %v4004 = vunpack.c.l.bf16 %v3876
        %v4005 = vunpack.c.l.bf16 %v3877
        %v4006 = vunpack.c.l.bf16 %v3878
        %v4007 = vunpack.c.l.bf16 %v3879
        %v4008 = vunpack.c.l.bf16 %v3880
        %v4009 = vunpack.c.l.bf16 %v3881
        %v4010 = vunpack.c.l.bf16 %v3882
        %v4011 = vunpack.c.l.bf16 %v3883
        %v4012 = vunpack.c.l.bf16 %v3884
        %v4013 = vunpack.c.l.bf16 %v3885
        %v4014 = vunpack.c.l.bf16 %v3886
        %v4015 = vunpack.c.l.bf16 %v3887
        %v4016 = vunpack.c.l.bf16 %v3888
        %v4017 = vunpack.c.l.bf16 %v3889
        %v4018 = vunpack.c.l.bf16 %v3890
        %v4019 = vunpack.c.l.bf16 %v3891
        %v4020 = vunpack.c.l.bf16 %v3892
        %v4021 = vunpack.c.l.bf16 %v3893
        %v4022 = vunpack.c.l.bf16 %v3894
        %v4023 = vunpack.c.l.bf16 %v3895
        %v4024 = vunpack.c.l.bf16 %v3896
        %v4025 = vunpack.c.l.bf16 %v3897
        %v4026 = vunpack.c.l.bf16 %v3898
        %v4027 = vunpack.c.l.bf16 %v3899
        %v4028 = vunpack.c.l.bf16 %v3900
        %v4029 = vunpack.c.l.bf16 %v3901
        %v4030 = vunpack.c.l.bf16 %v3902
        %v4031 = vunpack.c.l.bf16 %v3903
        %v4032 = vunpack.c.l.bf16 %v3904
        %v4033 = vunpack.c.l.bf16 %v3905
        %v4034 = vunpack.c.l.bf16 %v3906
        %v4035 = vunpack.c.l.bf16 %v3907
        %v4036 = vunpack.c.l.bf16 %v3908
        %v4037 = vunpack.c.l.bf16 %v3909
        %4038 = vmatprep.subr.mxu0 0.0
        %4039 = vmatpush1.msra.mxu0 %v3910
        %4040 = vmatprep.subr.mxu0 0.0
        %4041 = vmatpush1.msra.mxu0 %v3911
        %4042 = vmatprep.subr.mxu0 0.0
        %4043 = vmatpush1.msra.mxu0 %v3912
        %4044 = vmatprep.subr.mxu0 0.0
        %4045 = vmatpush1.msra.mxu0 %v3913
        %4046 = vmatprep.subr.mxu0 0.0
        %4047 = vmatpush1.msra.mxu0 %v3914
        %4048 = vmatprep.subr.mxu0 0.0
        %4049 = vmatpush1.msra.mxu0 %v3915
        %4050 = vmatprep.subr.mxu0 0.0
        %4051 = vmatpush1.msra.mxu0 %v3916
        %4052 = vmatprep.subr.mxu0 0.0
        %4053 = vmatpush1.msra.mxu0 %v3917
        %4054 = vmatprep.subr.mxu0 0.0
        %4055 = vmatpush1.msra.mxu0 %v3918
        %4056 = vmatprep.subr.mxu0 0.0
        %4057 = vmatpush1.msra.mxu0 %v3919
        %4058 = vmatprep.subr.mxu0 0.0
        %4059 = vmatpush1.msra.mxu0 %v3920
        %4060 = vmatprep.subr.mxu0 0.0
        %4061 = vmatpush1.msra.mxu0 %v3921
        %4062 = vmatprep.subr.mxu0 0.0
        %4063 = vmatpush1.msra.mxu0 %v3922
        %4064 = vmatprep.subr.mxu0 0.0
        %4065 = vmatpush1.msra.mxu0 %v3923
        %4066 = vmatprep.subr.mxu0 0.0
        %4067 = vmatpush1.msra.mxu0 %v3924
        %4068 = vmatprep.subr.mxu0 0.0
        %4069 = vmatpush1.msra.mxu0 %v3925
        %4070 = vmatprep.subr.mxu0 0.0
        %4071 = vmatpush1.msra.mxu0 %v3926
        %4072 = vmatprep.subr.mxu0 0.0
        %4073 = vmatpush1.msra.mxu0 %v3927
        %4074 = vmatprep.subr.mxu0 0.0
        %4075 = vmatpush1.msra.mxu0 %v3928
        %4076 = vmatprep.subr.mxu0 0.0
        %4077 = vmatpush1.msra.mxu0 %v3929
        %4078 = vmatprep.subr.mxu0 0.0
        %4079 = vmatpush1.msra.mxu0 %v3930
        %4080 = vmatprep.subr.mxu0 0.0
        %4081 = vmatpush1.msra.mxu0 %v3931
        %4082 = vmatprep.subr.mxu0 0.0
        %4083 = vmatpush1.msra.mxu0 %v3932
        %4084 = vmatprep.subr.mxu0 0.0
        %4085 = vmatpush1.msra.mxu0 %v3933
        %4086 = vmatprep.subr.mxu0 0.0
        %4087 = vmatpush1.msra.mxu0 %v3934
        %4088 = vmatprep.subr.mxu0 0.0
        %4089 = vmatpush1.msra.mxu0 %v3935
        %4090 = vmatprep.subr.mxu0 0.0
        %4091 = vmatpush1.msra.mxu0 %v3936
        %4092 = vmatprep.subr.mxu0 0.0
        %4093 = vmatpush1.msra.mxu0 %v3937
        %4094 = vmatprep.subr.mxu0 0.0
        %4095 = vmatpush1.msra.mxu0 %v3938
        %4096 = vmatprep.subr.mxu0 0.0
        %4097 = vmatpush1.msra.mxu0 %v3939
        %4098 = vmatprep.subr.mxu0 0.0
        %4099 = vmatpush1.msra.mxu0 %v3940
        %4100 = vmatprep.subr.mxu0 0.0
        %4101 = vmatpush1.msra.mxu0 %v3941
        %4102 = vmatprep.mubr.f32.mxu0 %v3751
        %4103 = vmatmul.mubr.f32.gmra.mrb[0].mxu0 %v3750
        %v4104 = vpop.f32.mrb[0].mxu0
        %v4105 = vadd.f32 0.0, %v4104
        %v4106 = vpop.f32.mrb[0].mxu0
        %4107 = vmatprep.mubr.f32.mxu0 %v3759
        %4108 = vmatmul.mubr.f32.gmra.mrb[0].mxu0 %v3758
        %v4109 = vpop.f32.mrb[0].mxu0
        %v4110 = vadd.f32 0.0, %v4109
        %v4111 = vpop.f32.mrb[0].mxu0
        %4112 = vmatprep.mubr.f32.mxu0 %v3767
        %4113 = vmatmul.mubr.f32.gmra.mrb[0].mxu0 %v3766
        %v4114 = vpop.f32.mrb[0].mxu0
        %v4115 = vadd.f32 0.0, %v4114
        %v4116 = vpop.f32.mrb[0].mxu0
        %4117 = vmatprep.mubr.f32.mxu0 %v3775
        %4118 = vmatmul.mubr.f32.gmra.mrb[0].mxu0 %v3774
        %v4119 = vpop.f32.mrb[0].mxu0
        %v4120 = vadd.f32 0.0, %v4119
        %v4121 = vpop.f32.mrb[0].mxu0
        %4122 = vdwg.mxu0
        %4123 = vmatprep.subr.mxu0 0.0
        %4124 = vmatpush1.msra.mxu0 %v3942
        %4125 = vmatprep.subr.mxu0 0.0
        %4126 = vmatpush1.msra.mxu0 %v3943
        %4127 = vmatprep.subr.mxu0 0.0
        %4128 = vmatpush1.msra.mxu0 %v3944
        %4129 = vmatprep.subr.mxu0 0.0
        %4130 = vmatpush1.msra.mxu0 %v3945
        %4131 = vmatprep.subr.mxu0 0.0
        %4132 = vmatpush1.msra.mxu0 %v3946
        %4133 = vmatprep.subr.mxu0 0.0
        %4134 = vmatpush1.msra.mxu0 %v3947
        %4135 = vmatprep.subr.mxu0 0.0
        %4136 = vmatpush1.msra.mxu0 %v3948
        %4137 = vmatprep.subr.mxu0 0.0
        %4138 = vmatpush1.msra.mxu0 %v3949
        %4139 = vmatprep.subr.mxu0 0.0
        %4140 = vmatpush1.msra.mxu0 %v3950
        %4141 = vmatprep.subr.mxu0 0.0
        %4142 = vmatpush1.msra.mxu0 %v3951
        %4143 = vmatprep.subr.mxu0 0.0
        %4144 = vmatpush1.msra.mxu0 %v3952
        %4145 = vmatprep.subr.mxu0 0.0
        %4146 = vmatpush1.msra.mxu0 %v3953
        %4147 = vmatprep.subr.mxu0 0.0
        %4148 = vmatpush1.msra.mxu0 %v3954
        %4149 = vmatprep.subr.mxu0 0.0
        %4150 = vmatpush1.msra.mxu0 %v3955
        %4151 = vmatprep.subr.mxu0 0.0
        %4152 = vmatpush1.msra.mxu0 %v3956
        %4153 = vmatprep.subr.mxu0 0.0
        %4154 = vmatpush1.msra.mxu0 %v3957
        %4155 = vmatprep.subr.mxu0 0.0
        %4156 = vmatpush1.msra.mxu0 %v3958
        %4157 = vmatprep.subr.mxu0 0.0
        %4158 = vmatpush1.msra.mxu0 %v3959
        %4159 = vmatprep.subr.mxu0 0.0
        %4160 = vmatpush1.msra.mxu0 %v3960
        %4161 = vmatprep.subr.mxu0 0.0
        %4162 = vmatpush1.msra.mxu0 %v3961
        %4163 = vmatprep.subr.mxu0 0.0
        %4164 = vmatpush1.msra.mxu0 %v3962
        %4165 = vmatprep.subr.mxu0 0.0
        %4166 = vmatpush1.msra.mxu0 %v3963
        %4167 = vmatprep.subr.mxu0 0.0
        %4168 = vmatpush1.msra.mxu0 %v3964
        %4169 = vmatprep.subr.mxu0 0.0
        %4170 = vmatpush1.msra.mxu0 %v3965
        %4171 = vmatprep.subr.mxu0 0.0
        %4172 = vmatpush1.msra.mxu0 %v3966
        %4173 = vmatprep.subr.mxu0 0.0
        %4174 = vmatpush1.msra.mxu0 %v3967
        %4175 = vmatprep.subr.mxu0 0.0
        %4176 = vmatpush1.msra.mxu0 %v3968
        %4177 = vmatprep.subr.mxu0 0.0
        %4178 = vmatpush1.msra.mxu0 %v3969
        %4179 = vmatprep.subr.mxu0 0.0
        %4180 = vmatpush1.msra.mxu0 %v3970
        %4181 = vmatprep.subr.mxu0 0.0
        %4182 = vmatpush1.msra.mxu0 %v3971
        %4183 = vmatprep.subr.mxu0 0.0
        %4184 = vmatpush1.msra.mxu0 %v3972
        %4185 = vmatprep.subr.mxu0 0.0
        %4186 = vmatpush1.msra.mxu0 %v3973
        %4187 = vmatprep.mubr.f32.mxu0 %v3753
        %4188 = vmatmul.mubr.f32.gmra.mrb[0].mxu0 %v3752
        %v4189 = vpop.f32.mrb[0].mxu0
        %v4190 = vadd.f32 %v4105, %v4189
        %v4191 = vpop.f32.mrb[0].mxu0
        %4192 = vmatprep.mubr.f32.mxu0 %v3761
        %4193 = vmatmul.mubr.f32.gmra.mrb[0].mxu0 %v3760
        %v4194 = vpop.f32.mrb[0].mxu0
        %v4195 = vadd.f32 %v4110, %v4194
        %v4196 = vpop.f32.mrb[0].mxu0
        %4197 = vmatprep.mubr.f32.mxu0 %v3769
        %4198 = vmatmul.mubr.f32.gmra.mrb[0].mxu0 %v3768
        %v4199 = vpop.f32.mrb[0].mxu0
        %v4200 = vadd.f32 %v4115, %v4199
        %v4201 = vpop.f32.mrb[0].mxu0
        %4202 = vmatprep.mubr.f32.mxu0 %v3777
        %4203 = vmatmul.mubr.f32.gmra.mrb[0].mxu0 %v3776
        %v4204 = vpop.f32.mrb[0].mxu0
        %v4205 = vadd.f32 %v4120, %v4204
        %v4206 = vpop.f32.mrb[0].mxu0
        %4207 = vdwg.mxu0
        %4208 = vmatprep.subr.mxu0 0.0
        %4209 = vmatpush1.msra.mxu0 %v3974
        %4210 = vmatprep.subr.mxu0 0.0
        %4211 = vmatpush1.msra.mxu0 %v3975
        %4212 = vmatprep.subr.mxu0 0.0
        %4213 = vmatpush1.msra.mxu0 %v3976
        %4214 = vmatprep.subr.mxu0 0.0
        %4215 = vmatpush1.msra.mxu0 %v3977
        %4216 = vmatprep.subr.mxu0 0.0
        %4217 = vmatpush1.msra.mxu0 %v3978
        %4218 = vmatprep.subr.mxu0 0.0
        %4219 = vmatpush1.msra.mxu0 %v3979
        %4220 = vmatprep.subr.mxu0 0.0
        %4221 = vmatpush1.msra.mxu0 %v3980
        %4222 = vmatprep.subr.mxu0 0.0
        %4223 = vmatpush1.msra.mxu0 %v3981
        %4224 = vmatprep.subr.mxu0 0.0
        %4225 = vmatpush1.msra.mxu0 %v3982
        %4226 = vmatprep.subr.mxu0 0.0
        %4227 = vmatpush1.msra.mxu0 %v3983
        %4228 = vmatprep.subr.mxu0 0.0
        %4229 = vmatpush1.msra.mxu0 %v3984
        %4230 = vmatprep.subr.mxu0 0.0
        %4231 = vmatpush1.msra.mxu0 %v3985
        %4232 = vmatprep.subr.mxu0 0.0
        %4233 = vmatpush1.msra.mxu0 %v3986
        %4234 = vmatprep.subr.mxu0 0.0
        %4235 = vmatpush1.msra.mxu0 %v3987
        %4236 = vmatprep.subr.mxu0 0.0
        %4237 = vmatpush1.msra.mxu0 %v3988
        %4238 = vmatprep.subr.mxu0 0.0
        %4239 = vmatpush1.msra.mxu0 %v3989
        %4240 = vmatprep.subr.mxu0 0.0
        %4241 = vmatpush1.msra.mxu0 %v3990
        %4242 = vmatprep.subr.mxu0 0.0
        %4243 = vmatpush1.msra.mxu0 %v3991
        %4244 = vmatprep.subr.mxu0 0.0
        %4245 = vmatpush1.msra.mxu0 %v3992
        %4246 = vmatprep.subr.mxu0 0.0
        %4247 = vmatpush1.msra.mxu0 %v3993
        %4248 = vmatprep.subr.mxu0 0.0
        %4249 = vmatpush1.msra.mxu0 %v3994
        %4250 = vmatprep.subr.mxu0 0.0
        %4251 = vmatpush1.msra.mxu0 %v3995
        %4252 = vmatprep.subr.mxu0 0.0
        %4253 = vmatpush1.msra.mxu0 %v3996
        %4254 = vmatprep.subr.mxu0 0.0
        %4255 = vmatpush1.msra.mxu0 %v3997
        %4256 = vmatprep.subr.mxu0 0.0
        %4257 = vmatpush1.msra.mxu0 %v3998
        %4258 = vmatprep.subr.mxu0 0.0
        %4259 = vmatpush1.msra.mxu0 %v3999
        %4260 = vmatprep.subr.mxu0 0.0
        %4261 = vmatpush1.msra.mxu0 %v4000
        %4262 = vmatprep.subr.mxu0 0.0
        %4263 = vmatpush1.msra.mxu0 %v4001
        %4264 = vmatprep.subr.mxu0 0.0
        %4265 = vmatpush1.msra.mxu0 %v4002
        %4266 = vmatprep.subr.mxu0 0.0
        %4267 = vmatpush1.msra.mxu0 %v4003
        %4268 = vmatprep.subr.mxu0 0.0
        %4269 = vmatpush1.msra.mxu0 %v4004
        %4270 = vmatprep.subr.mxu0 0.0
        %4271 = vmatpush1.msra.mxu0 %v4005
        %4272 = vmatprep.mubr.f32.mxu0 %v3755
        %4273 = vmatmul.mubr.f32.gmra.mrb[0].mxu0 %v3754
        %v4274 = vpop.f32.mrb[0].mxu0
        %v4275 = vadd.f32 %v4190, %v4274
        %v4276 = vpop.f32.mrb[0].mxu0
        %4277 = vmatprep.mubr.f32.mxu0 %v3763
        %4278 = vmatmul.mubr.f32.gmra.mrb[0].mxu0 %v3762
        %v4279 = vpop.f32.mrb[0].mxu0
        %v4280 = vadd.f32 %v4195, %v4279
        %v4281 = vpop.f32.mrb[0].mxu0
        %4282 = vmatprep.mubr.f32.mxu0 %v3771
        %4283 = vmatmul.mubr.f32.gmra.mrb[0].mxu0 %v3770
        %v4284 = vpop.f32.mrb[0].mxu0
        %v4285 = vadd.f32 %v4200, %v4284
        %v4286 = vpop.f32.mrb[0].mxu0
        %4287 = vmatprep.mubr.f32.mxu0 %v3779
        %4288 = vmatmul.mubr.f32.gmra.mrb[0].mxu0 %v3778
        %v4289 = vpop.f32.mrb[0].mxu0
        %v4290 = vadd.f32 %v4205, %v4289
        %v4291 = vpop.f32.mrb[0].mxu0
        %4292 = vdwg.mxu0
        %4293 = vmatprep.subr.mxu0 0.0
        %4294 = vmatpush1.msra.mxu0 %v4006
        %4295 = vmatprep.subr.mxu0 0.0
        %4296 = vmatpush1.msra.mxu0 %v4007
        %4297 = vmatprep.subr.mxu0 0.0
        %4298 = vmatpush1.msra.mxu0 %v4008
        %4299 = vmatprep.subr.mxu0 0.0
        %4300 = vmatpush1.msra.mxu0 %v4009
        %4301 = vmatprep.subr.mxu0 0.0
        %4302 = vmatpush1.msra.mxu0 %v4010
        %4303 = vmatprep.subr.mxu0 0.0
        %4304 = vmatpush1.msra.mxu0 %v4011
        %4305 = vmatprep.subr.mxu0 0.0
        %4306 = vmatpush1.msra.mxu0 %v4012
        %4307 = vmatprep.subr.mxu0 0.0
        %4308 = vmatpush1.msra.mxu0 %v4013
        %4309 = vmatprep.subr.mxu0 0.0
        %4310 = vmatpush1.msra.mxu0 %v4014
        %4311 = vmatprep.subr.mxu0 0.0
        %4312 = vmatpush1.msra.mxu0 %v4015
        %4313 = vmatprep.subr.mxu0 0.0
        %4314 = vmatpush1.msra.mxu0 %v4016
        %4315 = vmatprep.subr.mxu0 0.0
        %4316 = vmatpush1.msra.mxu0 %v4017
        %4317 = vmatprep.subr.mxu0 0.0
        %4318 = vmatpush1.msra.mxu0 %v4018
        %4319 = vmatprep.subr.mxu0 0.0
        %4320 = vmatpush1.msra.mxu0 %v4019
        %4321 = vmatprep.subr.mxu0 0.0
        %4322 = vmatpush1.msra.mxu0 %v4020
        %4323 = vmatprep.subr.mxu0 0.0
        %4324 = vmatpush1.msra.mxu0 %v4021
        %4325 = vmatprep.subr.mxu0 0.0
        %4326 = vmatpush1.msra.mxu0 %v4022
        %4327 = vmatprep.subr.mxu0 0.0
        %4328 = vmatpush1.msra.mxu0 %v4023
        %4329 = vmatprep.subr.mxu0 0.0
        %4330 = vmatpush1.msra.mxu0 %v4024
        %4331 = vmatprep.subr.mxu0 0.0
        %4332 = vmatpush1.msra.mxu0 %v4025
        %4333 = vmatprep.subr.mxu0 0.0
        %4334 = vmatpush1.msra.mxu0 %v4026
        %4335 = vmatprep.subr.mxu0 0.0
        %4336 = vmatpush1.msra.mxu0 %v4027
        %4337 = vmatprep.subr.mxu0 0.0
        %4338 = vmatpush1.msra.mxu0 %v4028
        %4339 = vmatprep.subr.mxu0 0.0
        %4340 = vmatpush1.msra.mxu0 %v4029
        %4341 = vmatprep.subr.mxu0 0.0
        %4342 = vmatpush1.msra.mxu0 %v4030
        %4343 = vmatprep.subr.mxu0 0.0
        %4344 = vmatpush1.msra.mxu0 %v4031
        %4345 = vmatprep.subr.mxu0 0.0
        %4346 = vmatpush1.msra.mxu0 %v4032
        %4347 = vmatprep.subr.mxu0 0.0
        %4348 = vmatpush1.msra.mxu0 %v4033
        %4349 = vmatprep.subr.mxu0 0.0
        %4350 = vmatpush1.msra.mxu0 %v4034
        %4351 = vmatprep.subr.mxu0 0.0
        %4352 = vmatpush1.msra.mxu0 %v4035
        %4353 = vmatprep.subr.mxu0 0.0
        %4354 = vmatpush1.msra.mxu0 %v4036
        %4355 = vmatprep.subr.mxu0 0.0
        %4356 = vmatpush1.msra.mxu0 %v4037
        %4357 = vmatprep.mubr.f32.mxu0 %v3757
        %4358 = vmatmul.mubr.f32.gmra.mrb[0].mxu0 %v3756
        %v4359 = vpop.f32.mrb[0].mxu0
        %v4360 = vadd.f32 %v4275, %v4359
        %v4361 = vpop.f32.mrb[0].mxu0
        %4362 = vmatprep.mubr.f32.mxu0 %v3765
        %4363 = vmatmul.mubr.f32.gmra.mrb[0].mxu0 %v3764
        %v4364 = vpop.f32.mrb[0].mxu0
        %v4365 = vadd.f32 %v4280, %v4364
        %v4366 = vpop.f32.mrb[0].mxu0
        %4367 = vmatprep.mubr.f32.mxu0 %v3773
        %4368 = vmatmul.mubr.f32.gmra.mrb[0].mxu0 %v3772
        %v4369 = vpop.f32.mrb[0].mxu0
        %v4370 = vadd.f32 %v4285, %v4369
        %v4371 = vpop.f32.mrb[0].mxu0
        %4372 = vmatprep.mubr.f32.mxu0 %v3781
        %4373 = vmatmul.mubr.f32.gmra.mrb[0].mxu0 %v3780
        %v4374 = vpop.f32.mrb[0].mxu0
        %v4375 = vadd.f32 %v4290, %v4374
        %v4376 = vpop.f32.mrb[0].mxu0
        %4377 = vdwg.mxu0
        %vm4378 = vcmask 523264
        %4379 = vst.msk [vmem:[#allocation2] sm:$0xff] %vm4378, %v4360
        %4380 = vst.msk [vmem:[#allocation2 + $0x8] sm:$0xff] %vm4378, %v4365
        %4381 = vst.msk [vmem:[#allocation2 + $0x10] sm:$0xff] %vm4378, %v4370
        %4382 = vst.msk [vmem:[#allocation2 + $0x18] sm:$0xff] %vm4378, %v4375
        %v4383 = vld [vmem:[%s12] sm:$0xf]
        %v4384 = vld [vmem:[%s12 + $0x4] sm:$0xf]
        %v4385 = vld [vmem:[%s12 + $0x8] sm:$0xf]
        %v4386 = vld [vmem:[%s12 + $0xc] sm:$0xf]
        %v4387 = vld [vmem:[%s12 + $0x10] sm:$0xf]
        %v4388 = vld [vmem:[%s12 + $0x14] sm:$0xf]
        %v4389 = vld [vmem:[%s12 + $0x18] sm:$0xf]
        %v4390 = vld [vmem:[%s12 + $0x1c] sm:$0xf]
        %v4391 = vld [vmem:[%s12 + $0x20] sm:$0xf]
        %v4392 = vld [vmem:[%s12 + $0x24] sm:$0xf]
        %v4393 = vld [vmem:[%s12 + $0x28] sm:$0xf]
        %v4394 = vld [vmem:[%s12 + $0x2c] sm:$0xf]
        %v4395 = vld [vmem:[%s12 + $0x30] sm:$0xf]
        %v4396 = vld [vmem:[%s12 + $0x34] sm:$0xf]
        %v4397 = vld [vmem:[%s12 + $0x38] sm:$0xf]
        %v4398 = vld [vmem:[%s12 + $0x3c] sm:$0xf]
        %v4399 = vld [vmem:[%s12 + $0x40] sm:$0xf]
        %v4400 = vld [vmem:[%s12 + $0x44] sm:$0xf]
        %v4401 = vld [vmem:[%s12 + $0x48] sm:$0xf]
        %v4402 = vld [vmem:[%s12 + $0x4c] sm:$0xf]
        %v4403 = vld [vmem:[%s12 + $0x50] sm:$0xf]
        %v4404 = vld [vmem:[%s12 + $0x54] sm:$0xf]
        %v4405 = vld [vmem:[%s12 + $0x58] sm:$0xf]
        %v4406 = vld [vmem:[%s12 + $0x5c] sm:$0xf]
        %v4407 = vld [vmem:[%s12 + $0x60] sm:$0xf]
        %v4408 = vld [vmem:[%s12 + $0x64] sm:$0xf]
        %v4409 = vld [vmem:[%s12 + $0x68] sm:$0xf]
        %v4410 = vld [vmem:[%s12 + $0x6c] sm:$0xf]
        %v4411 = vld [vmem:[%s12 + $0x70] sm:$0xf]
        %v4412 = vld [vmem:[%s12 + $0x74] sm:$0xf]
        %v4413 = vld [vmem:[%s12 + $0x78] sm:$0xf]
        %v4414 = vld [vmem:[%s12 + $0x7c] sm:$0xf]
        %v4415 = vld [vmem:[%s12 + $0x80] sm:$0xf]
        %v4416 = vld [vmem:[%s12 + $0x84] sm:$0xf]
        %v4417 = vld [vmem:[%s12 + $0x88] sm:$0xf]
        %v4418 = vld [vmem:[%s12 + $0x8c] sm:$0xf]
        %v4419 = vld [vmem:[%s12 + $0x90] sm:$0xf]
        %v4420 = vld [vmem:[%s12 + $0x94] sm:$0xf]
        %v4421 = vld [vmem:[%s12 + $0x98] sm:$0xf]
        %v4422 = vld [vmem:[%s12 + $0x9c] sm:$0xf]
        %v4423 = vld [vmem:[%s12 + $0xa0] sm:$0xf]
        %v4424 = vld [vmem:[%s12 + $0xa4] sm:$0xf]
        %v4425 = vld [vmem:[%s12 + $0xa8] sm:$0xf]
        %v4426 = vld [vmem:[%s12 + $0xac] sm:$0xf]
        %v4427 = vld [vmem:[%s12 + $0xb0] sm:$0xf]
        %v4428 = vld [vmem:[%s12 + $0xb4] sm:$0xf]
        %v4429 = vld [vmem:[%s12 + $0xb8] sm:$0xf]
        %v4430 = vld [vmem:[%s12 + $0xbc] sm:$0xf]
        %v4431 = vld [vmem:[%s12 + $0xc0] sm:$0xf]
        %v4432 = vld [vmem:[%s12 + $0xc4] sm:$0xf]
        %v4433 = vld [vmem:[%s12 + $0xc8] sm:$0xf]
        %v4434 = vld [vmem:[%s12 + $0xcc] sm:$0xf]
        %v4435 = vld [vmem:[%s12 + $0xd0] sm:$0xf]
        %v4436 = vld [vmem:[%s12 + $0xd4] sm:$0xf]
        %v4437 = vld [vmem:[%s12 + $0xd8] sm:$0xf]
        %v4438 = vld [vmem:[%s12 + $0xdc] sm:$0xf]
        %v4439 = vld [vmem:[%s12 + $0xe0] sm:$0xf]
        %v4440 = vld [vmem:[%s12 + $0xe4] sm:$0xf]
        %v4441 = vld [vmem:[%s12 + $0xe8] sm:$0xf]
        %v4442 = vld [vmem:[%s12 + $0xec] sm:$0xf]
        %v4443 = vld [vmem:[%s12 + $0xf0] sm:$0xf]
        %v4444 = vld [vmem:[%s12 + $0xf4] sm:$0xf]
        %v4445 = vld [vmem:[%s12 + $0xf8] sm:$0xf]
        %v4446 = vld [vmem:[%s12 + $0xfc] sm:$0xf]
        %v4447 = vunpack.c.l.bf16 %v4383
        %v4448 = vunpack.c.l.bf16 %v4384
        %v4449 = vunpack.c.l.bf16 %v4385
        %v4450 = vunpack.c.l.bf16 %v4386
        %v4451 = vunpack.c.l.bf16 %v4387
        %v4452 = vunpack.c.l.bf16 %v4388
        %v4453 = vunpack.c.l.bf16 %v4389
        %v4454 = vunpack.c.l.bf16 %v4390
        %v4455 = vunpack.c.l.bf16 %v4391
        %v4456 = vunpack.c.l.bf16 %v4392
        %v4457 = vunpack.c.l.bf16 %v4393
        %v4458 = vunpack.c.l.bf16 %v4394
        %v4459 = vunpack.c.l.bf16 %v4395
        %v4460 = vunpack.c.l.bf16 %v4396
        %v4461 = vunpack.c.l.bf16 %v4397
        %v4462 = vunpack.c.l.bf16 %v4398
        %v4463 = vunpack.c.l.bf16 %v4399
        %v4464 = vunpack.c.l.bf16 %v4400
        %v4465 = vunpack.c.l.bf16 %v4401
        %v4466 = vunpack.c.l.bf16 %v4402
        %v4467 = vunpack.c.l.bf16 %v4403
        %v4468 = vunpack.c.l.bf16 %v4404
        %v4469 = vunpack.c.l.bf16 %v4405
        %v4470 = vunpack.c.l.bf16 %v4406
        %v4471 = vunpack.c.l.bf16 %v4407
        %v4472 = vunpack.c.l.bf16 %v4408
        %v4473 = vunpack.c.l.bf16 %v4409
        %v4474 = vunpack.c.l.bf16 %v4410
        %v4475 = vunpack.c.l.bf16 %v4411
        %v4476 = vunpack.c.l.bf16 %v4412
        %v4477 = vunpack.c.l.bf16 %v4413
        %v4478 = vunpack.c.l.bf16 %v4414
        %v4479 = vunpack.c.l.bf16 %v4415
        %v4480 = vunpack.c.l.bf16 %v4416
        %v4481 = vunpack.c.l.bf16 %v4417
        %v4482 = vunpack.c.l.bf16 %v4418
        %v4483 = vunpack.c.l.bf16 %v4419
        %v4484 = vunpack.c.l.bf16 %v4420
        %v4485 = vunpack.c.l.bf16 %v4421
        %v4486 = vunpack.c.l.bf16 %v4422
        %v4487 = vunpack.c.l.bf16 %v4423
        %v4488 = vunpack.c.l.bf16 %v4424
        %v4489 = vunpack.c.l.bf16 %v4425
        %v4490 = vunpack.c.l.bf16 %v4426
        %v4491 = vunpack.c.l.bf16 %v4427
        %v4492 = vunpack.c.l.bf16 %v4428
        %v4493 = vunpack.c.l.bf16 %v4429
        %v4494 = vunpack.c.l.bf16 %v4430
        %v4495 = vunpack.c.l.bf16 %v4431
        %v4496 = vunpack.c.l.bf16 %v4432
        %v4497 = vunpack.c.l.bf16 %v4433
        %v4498 = vunpack.c.l.bf16 %v4434
        %v4499 = vunpack.c.l.bf16 %v4435
        %v4500 = vunpack.c.l.bf16 %v4436
        %v4501 = vunpack.c.l.bf16 %v4437
        %v4502 = vunpack.c.l.bf16 %v4438
        %v4503 = vunpack.c.l.bf16 %v4439
        %v4504 = vunpack.c.l.bf16 %v4440
        %v4505 = vunpack.c.l.bf16 %v4441
        %v4506 = vunpack.c.l.bf16 %v4442
        %v4507 = vunpack.c.l.bf16 %v4443
        %v4508 = vunpack.c.l.bf16 %v4444
        %v4509 = vunpack.c.l.bf16 %v4445
        %v4510 = vunpack.c.l.bf16 %v4446
        %v4511 = vld [vmem:[#allocation2] sm:$0xff]
        %v4512 = vld [vmem:[#allocation2 + $0x8] sm:$0xff]
        %v4513 = vld [vmem:[#allocation2 + $0x10] sm:$0xff]
        %v4514 = vld [vmem:[#allocation2 + $0x18] sm:$0xff]
        %4519 = vrot.lane.b32.xlu0 %v4511, 120
        %v4520 = vpop.permute.xlu0 %4519
        %4521 = vrot.lane.b32.xlu0 %v4512, 120
        %v4522 = vpop.permute.xlu0 %4521
        %4523 = vrot.lane.b32.xlu0 %v4513, 120
        %v4524 = vpop.permute.xlu0 %4523
        %4525 = vrot.lane.b32.xlu0 %v4514, 120
        %v4526 = vpop.permute.xlu0 %4525
        %vm4531 = vcmask 261120
        %v4533 = vsel %vm4531, %v4455, 0
        %v4536 = vsel %vm4531, %v4456, 0
        %v4539 = vsel %vm4531, %v4457, 0
        %v4542 = vsel %vm4531, %v4458, 0
        %v4545 = vsel %vm4531, %v4459, 0
        %v4548 = vsel %vm4531, %v4460, 0
        %v4551 = vsel %vm4531, %v4461, 0
        %v4554 = vsel %vm4531, %v4462, 0
        %4556 = vmatprep.subr.mxu0 0.0
        %4557 = vmatpush1.msra.mxu0 %v4520
        %4558 = vmatprep.subr.mxu0 0.0
        %4559 = vmatpush1.msra.mxu0 %v4522
        %4560 = vmatprep.subr.mxu0 0.0
        %4561 = vmatpush1.msra.mxu0 %v4524
        %4562 = vmatprep.subr.mxu0 0.0
        %4563 = vmatpush1.msra.mxu0 %v4526
        %4564 = vmatprep.subr.mxu0 0.0
        %4565 = vmatpush1.msra.mxu0 0.0
        %4566 = vmatprep.subr.mxu0 0.0
        %4567 = vmatpush1.msra.mxu0 0.0
        %4568 = vmatprep.subr.mxu0 0.0
        %4569 = vmatpush1.msra.mxu0 0.0
        %4570 = vmatprep.subr.mxu0 0.0
        %4571 = vmatpush1.msra.mxu0 0.0
        %4572 = vmatprep.subr.mxu0 0.0
        %4573 = vmatpush1.msra.mxu0 0.0
        %4574 = vmatprep.subr.mxu0 0.0
        %4575 = vmatpush1.msra.mxu0 0.0
        %4576 = vmatprep.subr.mxu0 0.0
        %4577 = vmatpush1.msra.mxu0 0.0
        %4578 = vmatprep.subr.mxu0 0.0
        %4579 = vmatpush1.msra.mxu0 0.0
        %4580 = vmatprep.subr.mxu0 0.0
        %4581 = vmatpush1.msra.mxu0 0.0
        %4582 = vmatprep.subr.mxu0 0.0
        %4583 = vmatpush1.msra.mxu0 0.0
        %4584 = vmatprep.subr.mxu0 0.0
        %4585 = vmatpush1.msra.mxu0 0.0
        %4586 = vmatprep.subr.mxu0 0.0
        %4587 = vmatpush1.msra.mxu0 0.0
        %4588 = vmatprep.subr.mxu0 0.0
        %4589 = vmatpush1.msra.mxu0 0.0
        %4590 = vmatprep.subr.mxu0 0.0
        %4591 = vmatpush1.msra.mxu0 0.0
        %4592 = vmatprep.subr.mxu0 0.0
        %4593 = vmatpush1.msra.mxu0 0.0
        %4594 = vmatprep.subr.mxu0 0.0
        %4595 = vmatpush1.msra.mxu0 0.0
        %4596 = vmatprep.subr.mxu0 0.0
        %4597 = vmatpush1.msra.mxu0 0.0
        %4598 = vmatprep.subr.mxu0 0.0
        %4599 = vmatpush1.msra.mxu0 0.0
        %4600 = vmatprep.subr.mxu0 0.0
        %4601 = vmatpush1.msra.mxu0 0.0
        %4602 = vmatprep.subr.mxu0 0.0
        %4603 = vmatpush1.msra.mxu0 0.0
        %4604 = vmatprep.subr.mxu0 0.0
        %4605 = vmatpush1.msra.mxu0 0.0
        %4606 = vmatprep.subr.mxu0 0.0
        %4607 = vmatpush1.msra.mxu0 0.0
        %4608 = vmatprep.subr.mxu0 0.0
        %4609 = vmatpush1.msra.mxu0 0.0
        %4610 = vmatprep.subr.mxu0 0.0
        %4611 = vmatpush1.msra.mxu0 0.0
        %4612 = vmatprep.subr.mxu0 0.0
        %4613 = vmatpush1.msra.mxu0 0.0
        %4614 = vmatprep.subr.mxu0 0.0
        %4615 = vmatpush1.msra.mxu0 0.0
        %4616 = vmatprep.subr.mxu0 0.0
        %4617 = vmatpush1.msra.mxu0 0.0
        %4618 = vmatprep.subr.mxu0 0.0
        %4619 = vmatpush1.msra.mxu0 0.0
        %4620 = vmatprep.mubr.f32.mxu0 0.0
        %4621 = vmatmul.mubr.f32.gmra.mrb[0].mxu0 %v4533
        %v4622 = vpop.f32.mrb[0].mxu0
        %v4623 = vadd.f32 0.0, %v4622
        %v4624 = vpop.f32.mrb[0].mxu0
        %4625 = vmatprep.mubr.f32.mxu0 0.0
        %4626 = vmatmul.mubr.f32.gmra.mrb[0].mxu0 %v4536
        %v4627 = vpop.f32.mrb[0].mxu0
        %v4628 = vadd.f32 0.0, %v4627
        %v4629 = vpop.f32.mrb[0].mxu0
        %4630 = vmatprep.mubr.f32.mxu0 0.0
        %4631 = vmatmul.mubr.f32.gmra.mrb[0].mxu0 %v4539
        %v4632 = vpop.f32.mrb[0].mxu0
        %v4633 = vadd.f32 0.0, %v4632
        %v4634 = vpop.f32.mrb[0].mxu0
        %4635 = vmatprep.mubr.f32.mxu0 0.0
        %4636 = vmatmul.mubr.f32.gmra.mrb[0].mxu0 %v4542
        %v4637 = vpop.f32.mrb[0].mxu0
        %v4638 = vadd.f32 0.0, %v4637
        %v4639 = vpop.f32.mrb[0].mxu0
        %4640 = vmatprep.mubr.f32.mxu0 0.0
        %4641 = vmatmul.mubr.f32.gmra.mrb[0].mxu0 %v4545
        %v4642 = vpop.f32.mrb[0].mxu0
        %v4643 = vadd.f32 0.0, %v4642
        %v4644 = vpop.f32.mrb[0].mxu0
        %4645 = vmatprep.mubr.f32.mxu0 0.0
        %4646 = vmatmul.mubr.f32.gmra.mrb[0].mxu0 %v4548
        %v4647 = vpop.f32.mrb[0].mxu0
        %v4648 = vadd.f32 0.0, %v4647
        %v4649 = vpop.f32.mrb[0].mxu0
        %4650 = vmatprep.mubr.f32.mxu0 0.0
        %4651 = vmatmul.mubr.f32.gmra.mrb[0].mxu0 %v4551
        %v4652 = vpop.f32.mrb[0].mxu0
        %v4653 = vadd.f32 0.0, %v4652
        %v4654 = vpop.f32.mrb[0].mxu0
        %4655 = vmatprep.mubr.f32.mxu0 0.0
        %4656 = vmatmul.mubr.f32.gmra.mrb[0].mxu0 %v4554
        %v4657 = vpop.f32.mrb[0].mxu0
        %v4658 = vadd.f32 0.0, %v4657
        %v4659 = vpop.f32.mrb[0].mxu0
        %4660 = vdwg.mxu0
        %v4662 = vsel %vm4531, %v4447, 0
        %v4665 = vsel %vm4531, %v4448, 0
        %v4668 = vsel %vm4531, %v4449, 0
        %v4671 = vsel %vm4531, %v4450, 0
        %v4674 = vsel %vm4531, %v4451, 0
        %v4677 = vsel %vm4531, %v4452, 0
        %v4680 = vsel %vm4531, %v4453, 0
        %v4683 = vsel %vm4531, %v4454, 0
        %4685 = vmatprep.subr.mxu0 0.0
        %4686 = vmatpush1.msra.mxu0 %v4511
        %4687 = vmatprep.subr.mxu0 0.0
        %4688 = vmatpush1.msra.mxu0 %v4512
        %4689 = vmatprep.subr.mxu0 0.0
        %4690 = vmatpush1.msra.mxu0 %v4513
        %4691 = vmatprep.subr.mxu0 0.0
        %4692 = vmatpush1.msra.mxu0 %v4514
        %4693 = vmatprep.subr.mxu0 0.0
        %4694 = vmatpush1.msra.mxu0 0.0
        %4695 = vmatprep.subr.mxu0 0.0
        %4696 = vmatpush1.msra.mxu0 0.0
        %4697 = vmatprep.subr.mxu0 0.0
        %4698 = vmatpush1.msra.mxu0 0.0
        %4699 = vmatprep.subr.mxu0 0.0
        %4700 = vmatpush1.msra.mxu0 0.0
        %4701 = vmatprep.subr.mxu0 0.0
        %4702 = vmatpush1.msra.mxu0 0.0
        %4703 = vmatprep.subr.mxu0 0.0
        %4704 = vmatpush1.msra.mxu0 0.0
        %4705 = vmatprep.subr.mxu0 0.0
        %4706 = vmatpush1.msra.mxu0 0.0
        %4707 = vmatprep.subr.mxu0 0.0
        %4708 = vmatpush1.msra.mxu0 0.0
        %4709 = vmatprep.subr.mxu0 0.0
        %4710 = vmatpush1.msra.mxu0 0.0
        %4711 = vmatprep.subr.mxu0 0.0
        %4712 = vmatpush1.msra.mxu0 0.0
        %4713 = vmatprep.subr.mxu0 0.0
        %4714 = vmatpush1.msra.mxu0 0.0
        %4715 = vmatprep.subr.mxu0 0.0
        %4716 = vmatpush1.msra.mxu0 0.0
        %4717 = vmatprep.subr.mxu0 0.0
        %4718 = vmatpush1.msra.mxu0 0.0
        %4719 = vmatprep.subr.mxu0 0.0
        %4720 = vmatpush1.msra.mxu0 0.0
        %4721 = vmatprep.subr.mxu0 0.0
        %4722 = vmatpush1.msra.mxu0 0.0
        %4723 = vmatprep.subr.mxu0 0.0
        %4724 = vmatpush1.msra.mxu0 0.0
        %4725 = vmatprep.subr.mxu0 0.0
        %4726 = vmatpush1.msra.mxu0 0.0
        %4727 = vmatprep.subr.mxu0 0.0
        %4728 = vmatpush1.msra.mxu0 0.0
        %4729 = vmatprep.subr.mxu0 0.0
        %4730 = vmatpush1.msra.mxu0 0.0
        %4731 = vmatprep.subr.mxu0 0.0
        %4732 = vmatpush1.msra.mxu0 0.0
        %4733 = vmatprep.subr.mxu0 0.0
        %4734 = vmatpush1.msra.mxu0 0.0
        %4735 = vmatprep.subr.mxu0 0.0
        %4736 = vmatpush1.msra.mxu0 0.0
        %4737 = vmatprep.subr.mxu0 0.0
        %4738 = vmatpush1.msra.mxu0 0.0
        %4739 = vmatprep.subr.mxu0 0.0
        %4740 = vmatpush1.msra.mxu0 0.0
        %4741 = vmatprep.subr.mxu0 0.0
        %4742 = vmatpush1.msra.mxu0 0.0
        %4743 = vmatprep.subr.mxu0 0.0
        %4744 = vmatpush1.msra.mxu0 0.0
        %4745 = vmatprep.subr.mxu0 0.0
        %4746 = vmatpush1.msra.mxu0 0.0
        %4747 = vmatprep.subr.mxu0 0.0
        %4748 = vmatpush1.msra.mxu0 0.0
        %4749 = vmatprep.mubr.f32.mxu0 0.0
        %4750 = vmatmul.mubr.f32.gmra.mrb[0].mxu0 %v4662
        %v4751 = vpop.f32.mrb[0].mxu0
        %v4752 = vadd.f32 %v4623, %v4751
        %v4753 = vpop.f32.mrb[0].mxu0
        %4754 = vmatprep.mubr.f32.mxu0 0.0
        %4755 = vmatmul.mubr.f32.gmra.mrb[0].mxu0 %v4665
        %v4756 = vpop.f32.mrb[0].mxu0
        %v4757 = vadd.f32 %v4628, %v4756
        %v4758 = vpop.f32.mrb[0].mxu0
        %4759 = vmatprep.mubr.f32.mxu0 0.0
        %4760 = vmatmul.mubr.f32.gmra.mrb[0].mxu0 %v4668
        %v4761 = vpop.f32.mrb[0].mxu0
        %v4762 = vadd.f32 %v4633, %v4761
        %v4763 = vpop.f32.mrb[0].mxu0
        %4764 = vmatprep.mubr.f32.mxu0 0.0
        %4765 = vmatmul.mubr.f32.gmra.mrb[0].mxu0 %v4671
        %v4766 = vpop.f32.mrb[0].mxu0
        %v4767 = vadd.f32 %v4638, %v4766
        %v4768 = vpop.f32.mrb[0].mxu0
        %4769 = vmatprep.mubr.f32.mxu0 0.0
        %4770 = vmatmul.mubr.f32.gmra.mrb[0].mxu0 %v4674
        %v4771 = vpop.f32.mrb[0].mxu0
        %v4772 = vadd.f32 %v4643, %v4771
        %v4773 = vpop.f32.mrb[0].mxu0
        %4774 = vmatprep.mubr.f32.mxu0 0.0
        %4775 = vmatmul.mubr.f32.gmra.mrb[0].mxu0 %v4677
        %v4776 = vpop.f32.mrb[0].mxu0
        %v4777 = vadd.f32 %v4648, %v4776
        %v4778 = vpop.f32.mrb[0].mxu0
        %4779 = vmatprep.mubr.f32.mxu0 0.0
        %4780 = vmatmul.mubr.f32.gmra.mrb[0].mxu0 %v4680
        %v4781 = vpop.f32.mrb[0].mxu0
        %v4782 = vadd.f32 %v4653, %v4781
        %v4783 = vpop.f32.mrb[0].mxu0
        %4784 = vmatprep.mubr.f32.mxu0 0.0
        %4785 = vmatmul.mubr.f32.gmra.mrb[0].mxu0 %v4683
        %v4786 = vpop.f32.mrb[0].mxu0
        %v4787 = vadd.f32 %v4658, %v4786
        %v4788 = vpop.f32.mrb[0].mxu0
        %4789 = vdwg.mxu0
        %4790 = vrot.lane.b32.xlu0 %v4511, 112
        %v4791 = vpop.permute.xlu0 %4790
        %4792 = vrot.lane.b32.xlu0 %v4512, 112
        %v4793 = vpop.permute.xlu0 %4792
        %4794 = vrot.lane.b32.xlu0 %v4513, 112
        %v4795 = vpop.permute.xlu0 %4794
        %4796 = vrot.lane.b32.xlu0 %v4514, 112
        %v4797 = vpop.permute.xlu0 %4796
        %v4803 = vsel %vm4531, %v4463, 0
        %v4806 = vsel %vm4531, %v4464, 0
        %v4809 = vsel %vm4531, %v4465, 0
        %v4812 = vsel %vm4531, %v4466, 0
        %v4815 = vsel %vm4531, %v4467, 0
        %v4818 = vsel %vm4531, %v4468, 0
        %v4821 = vsel %vm4531, %v4469, 0
        %v4824 = vsel %vm4531, %v4470, 0
        %4826 = vmatprep.subr.mxu0 0.0
        %4827 = vmatpush1.msra.mxu0 %v4791
        %4828 = vmatprep.subr.mxu0 0.0
        %4829 = vmatpush1.msra.mxu0 %v4793
        %4830 = vmatprep.subr.mxu0 0.0
        %4831 = vmatpush1.msra.mxu0 %v4795
        %4832 = vmatprep.subr.mxu0 0.0
        %4833 = vmatpush1.msra.mxu0 %v4797
        %4834 = vmatprep.subr.mxu0 0.0
        %4835 = vmatpush1.msra.mxu0 0.0
        %4836 = vmatprep.subr.mxu0 0.0
        %4837 = vmatpush1.msra.mxu0 0.0
        %4838 = vmatprep.subr.mxu0 0.0
        %4839 = vmatpush1.msra.mxu0 0.0
        %4840 = vmatprep.subr.mxu0 0.0
        %4841 = vmatpush1.msra.mxu0 0.0
        %4842 = vmatprep.subr.mxu0 0.0
        %4843 = vmatpush1.msra.mxu0 0.0
        %4844 = vmatprep.subr.mxu0 0.0
        %4845 = vmatpush1.msra.mxu0 0.0
        %4846 = vmatprep.subr.mxu0 0.0
        %4847 = vmatpush1.msra.mxu0 0.0
        %4848 = vmatprep.subr.mxu0 0.0
        %4849 = vmatpush1.msra.mxu0 0.0
        %4850 = vmatprep.subr.mxu0 0.0
        %4851 = vmatpush1.msra.mxu0 0.0
        %4852 = vmatprep.subr.mxu0 0.0
        %4853 = vmatpush1.msra.mxu0 0.0
        %4854 = vmatprep.subr.mxu0 0.0
        %4855 = vmatpush1.msra.mxu0 0.0
        %4856 = vmatprep.subr.mxu0 0.0
        %4857 = vmatpush1.msra.mxu0 0.0
        %4858 = vmatprep.subr.mxu0 0.0
        %4859 = vmatpush1.msra.mxu0 0.0
        %4860 = vmatprep.subr.mxu0 0.0
        %4861 = vmatpush1.msra.mxu0 0.0
        %4862 = vmatprep.subr.mxu0 0.0
        %4863 = vmatpush1.msra.mxu0 0.0
        %4864 = vmatprep.subr.mxu0 0.0
        %4865 = vmatpush1.msra.mxu0 0.0
        %4866 = vmatprep.subr.mxu0 0.0
        %4867 = vmatpush1.msra.mxu0 0.0
        %4868 = vmatprep.subr.mxu0 0.0
        %4869 = vmatpush1.msra.mxu0 0.0
        %4870 = vmatprep.subr.mxu0 0.0
        %4871 = vmatpush1.msra.mxu0 0.0
        %4872 = vmatprep.subr.mxu0 0.0
        %4873 = vmatpush1.msra.mxu0 0.0
        %4874 = vmatprep.subr.mxu0 0.0
        %4875 = vmatpush1.msra.mxu0 0.0
        %4876 = vmatprep.subr.mxu0 0.0
        %4877 = vmatpush1.msra.mxu0 0.0
        %4878 = vmatprep.subr.mxu0 0.0
        %4879 = vmatpush1.msra.mxu0 0.0
        %4880 = vmatprep.subr.mxu0 0.0
        %4881 = vmatpush1.msra.mxu0 0.0
        %4882 = vmatprep.subr.mxu0 0.0
        %4883 = vmatpush1.msra.mxu0 0.0
        %4884 = vmatprep.subr.mxu0 0.0
        %4885 = vmatpush1.msra.mxu0 0.0
        %4886 = vmatprep.subr.mxu0 0.0
        %4887 = vmatpush1.msra.mxu0 0.0
        %4888 = vmatprep.subr.mxu0 0.0
        %4889 = vmatpush1.msra.mxu0 0.0
        %4890 = vmatprep.mubr.f32.mxu0 0.0
        %4891 = vmatmul.mubr.f32.gmra.mrb[0].mxu0 %v4803
        %v4892 = vpop.f32.mrb[0].mxu0
        %v4893 = vadd.f32 0.0, %v4892
        %v4894 = vpop.f32.mrb[0].mxu0
        %4895 = vmatprep.mubr.f32.mxu0 0.0
        %4896 = vmatmul.mubr.f32.gmra.mrb[0].mxu0 %v4806
        %v4897 = vpop.f32.mrb[0].mxu0
        %v4898 = vadd.f32 0.0, %v4897
        %v4899 = vpop.f32.mrb[0].mxu0
        %4900 = vmatprep.mubr.f32.mxu0 0.0
        %4901 = vmatmul.mubr.f32.gmra.mrb[0].mxu0 %v4809
        %v4902 = vpop.f32.mrb[0].mxu0
        %v4903 = vadd.f32 0.0, %v4902
        %v4904 = vpop.f32.mrb[0].mxu0
        %4905 = vmatprep.mubr.f32.mxu0 0.0
        %4906 = vmatmul.mubr.f32.gmra.mrb[0].mxu0 %v4812
        %v4907 = vpop.f32.mrb[0].mxu0
        %v4908 = vadd.f32 0.0, %v4907
        %v4909 = vpop.f32.mrb[0].mxu0
        %4910 = vmatprep.mubr.f32.mxu0 0.0
        %4911 = vmatmul.mubr.f32.gmra.mrb[0].mxu0 %v4815
        %v4912 = vpop.f32.mrb[0].mxu0
        %v4913 = vadd.f32 0.0, %v4912
        %v4914 = vpop.f32.mrb[0].mxu0
        %4915 = vmatprep.mubr.f32.mxu0 0.0
        %4916 = vmatmul.mubr.f32.gmra.mrb[0].mxu0 %v4818
        %v4917 = vpop.f32.mrb[0].mxu0
        %v4918 = vadd.f32 0.0, %v4917
        %v4919 = vpop.f32.mrb[0].mxu0
        %4920 = vmatprep.mubr.f32.mxu0 0.0
        %4921 = vmatmul.mubr.f32.gmra.mrb[0].mxu0 %v4821
        %v4922 = vpop.f32.mrb[0].mxu0
        %v4923 = vadd.f32 0.0, %v4922
        %v4924 = vpop.f32.mrb[0].mxu0
        %4925 = vmatprep.mubr.f32.mxu0 0.0
        %4926 = vmatmul.mubr.f32.gmra.mrb[0].mxu0 %v4824
        %v4927 = vpop.f32.mrb[0].mxu0
        %v4928 = vadd.f32 0.0, %v4927
        %v4929 = vpop.f32.mrb[0].mxu0
        %4930 = vdwg.mxu0
        %v4931 = vadd.f32 %v4752, %v4893
        %v4932 = vadd.f32 %v4757, %v4898
        %v4933 = vadd.f32 %v4762, %v4903
        %v4934 = vadd.f32 %v4767, %v4908
        %v4935 = vadd.f32 %v4772, %v4913
        %v4936 = vadd.f32 %v4777, %v4918
        %v4937 = vadd.f32 %v4782, %v4923
        %v4938 = vadd.f32 %v4787, %v4928
        %4939 = vrot.lane.b32.xlu0 %v4511, 104
        %v4940 = vpop.permute.xlu0 %4939
        %4941 = vrot.lane.b32.xlu0 %v4512, 104
        %v4942 = vpop.permute.xlu0 %4941
        %4943 = vrot.lane.b32.xlu0 %v4513, 104
        %v4944 = vpop.permute.xlu0 %4943
        %4945 = vrot.lane.b32.xlu0 %v4514, 104
        %v4946 = vpop.permute.xlu0 %4945
        %v4952 = vsel %vm4531, %v4471, 0
        %v4955 = vsel %vm4531, %v4472, 0
        %v4958 = vsel %vm4531, %v4473, 0
        %v4961 = vsel %vm4531, %v4474, 0
        %v4964 = vsel %vm4531, %v4475, 0
        %v4967 = vsel %vm4531, %v4476, 0
        %v4970 = vsel %vm4531, %v4477, 0
        %v4973 = vsel %vm4531, %v4478, 0
        %4975 = vmatprep.subr.mxu0 0.0
        %4976 = vmatpush1.msra.mxu0 %v4940
        %4977 = vmatprep.subr.mxu0 0.0
        %4978 = vmatpush1.msra.mxu0 %v4942
        %4979 = vmatprep.subr.mxu0 0.0
        %4980 = vmatpush1.msra.mxu0 %v4944
        %4981 = vmatprep.subr.mxu0 0.0
        %4982 = vmatpush1.msra.mxu0 %v4946
        %4983 = vmatprep.subr.mxu0 0.0
        %4984 = vmatpush1.msra.mxu0 0.0
        %4985 = vmatprep.subr.mxu0 0.0
        %4986 = vmatpush1.msra.mxu0 0.0
        %4987 = vmatprep.subr.mxu0 0.0
        %4988 = vmatpush1.msra.mxu0 0.0
        %4989 = vmatprep.subr.mxu0 0.0
        %4990 = vmatpush1.msra.mxu0 0.0
        %4991 = vmatprep.subr.mxu0 0.0
        %4992 = vmatpush1.msra.mxu0 0.0
        %4993 = vmatprep.subr.mxu0 0.0
        %4994 = vmatpush1.msra.mxu0 0.0
        %4995 = vmatprep.subr.mxu0 0.0
        %4996 = vmatpush1.msra.mxu0 0.0
        %4997 = vmatprep.subr.mxu0 0.0
        %4998 = vmatpush1.msra.mxu0 0.0
        %4999 = vmatprep.subr.mxu0 0.0
        %5000 = vmatpush1.msra.mxu0 0.0
        %5001 = vmatprep.subr.mxu0 0.0
        %5002 = vmatpush1.msra.mxu0 0.0
        %5003 = vmatprep.subr.mxu0 0.0
        %5004 = vmatpush1.msra.mxu0 0.0
        %5005 = vmatprep.subr.mxu0 0.0
        %5006 = vmatpush1.msra.mxu0 0.0
        %5007 = vmatprep.subr.mxu0 0.0
        %5008 = vmatpush1.msra.mxu0 0.0
        %5009 = vmatprep.subr.mxu0 0.0
        %5010 = vmatpush1.msra.mxu0 0.0
        %5011 = vmatprep.subr.mxu0 0.0
        %5012 = vmatpush1.msra.mxu0 0.0
        %5013 = vmatprep.subr.mxu0 0.0
        %5014 = vmatpush1.msra.mxu0 0.0
        %5015 = vmatprep.subr.mxu0 0.0
        %5016 = vmatpush1.msra.mxu0 0.0
        %5017 = vmatprep.subr.mxu0 0.0
        %5018 = vmatpush1.msra.mxu0 0.0
        %5019 = vmatprep.subr.mxu0 0.0
        %5020 = vmatpush1.msra.mxu0 0.0
        %5021 = vmatprep.subr.mxu0 0.0
        %5022 = vmatpush1.msra.mxu0 0.0
        %5023 = vmatprep.subr.mxu0 0.0
        %5024 = vmatpush1.msra.mxu0 0.0
        %5025 = vmatprep.subr.mxu0 0.0
        %5026 = vmatpush1.msra.mxu0 0.0
        %5027 = vmatprep.subr.mxu0 0.0
        %5028 = vmatpush1.msra.mxu0 0.0
        %5029 = vmatprep.subr.mxu0 0.0
        %5030 = vmatpush1.msra.mxu0 0.0
        %5031 = vmatprep.subr.mxu0 0.0
        %5032 = vmatpush1.msra.mxu0 0.0
        %5033 = vmatprep.subr.mxu0 0.0
        %5034 = vmatpush1.msra.mxu0 0.0
        %5035 = vmatprep.subr.mxu0 0.0
        %5036 = vmatpush1.msra.mxu0 0.0
        %5037 = vmatprep.subr.mxu0 0.0
        %5038 = vmatpush1.msra.mxu0 0.0
        %5039 = vmatprep.mubr.f32.mxu0 0.0
        %5040 = vmatmul.mubr.f32.gmra.mrb[0].mxu0 %v4952
        %v5041 = vpop.f32.mrb[0].mxu0
        %v5042 = vadd.f32 0.0, %v5041
        %v5043 = vpop.f32.mrb[0].mxu0
        %5044 = vmatprep.mubr.f32.mxu0 0.0
        %5045 = vmatmul.mubr.f32.gmra.mrb[0].mxu0 %v4955
        %v5046 = vpop.f32.mrb[0].mxu0
        %v5047 = vadd.f32 0.0, %v5046
        %v5048 = vpop.f32.mrb[0].mxu0
        %5049 = vmatprep.mubr.f32.mxu0 0.0
        %5050 = vmatmul.mubr.f32.gmra.mrb[0].mxu0 %v4958
        %v5051 = vpop.f32.mrb[0].mxu0
        %v5052 = vadd.f32 0.0, %v5051
        %v5053 = vpop.f32.mrb[0].mxu0
        %5054 = vmatprep.mubr.f32.mxu0 0.0
        %5055 = vmatmul.mubr.f32.gmra.mrb[0].mxu0 %v4961
        %v5056 = vpop.f32.mrb[0].mxu0
        %v5057 = vadd.f32 0.0, %v5056
        %v5058 = vpop.f32.mrb[0].mxu0
        %5059 = vmatprep.mubr.f32.mxu0 0.0
        %5060 = vmatmul.mubr.f32.gmra.mrb[0].mxu0 %v4964
        %v5061 = vpop.f32.mrb[0].mxu0
        %v5062 = vadd.f32 0.0, %v5061
        %v5063 = vpop.f32.mrb[0].mxu0
        %5064 = vmatprep.mubr.f32.mxu0 0.0
        %5065 = vmatmul.mubr.f32.gmra.mrb[0].mxu0 %v4967
        %v5066 = vpop.f32.mrb[0].mxu0
        %v5067 = vadd.f32 0.0, %v5066
        %v5068 = vpop.f32.mrb[0].mxu0
        %5069 = vmatprep.mubr.f32.mxu0 0.0
        %5070 = vmatmul.mubr.f32.gmra.mrb[0].mxu0 %v4970
        %v5071 = vpop.f32.mrb[0].mxu0
        %v5072 = vadd.f32 0.0, %v5071
        %v5073 = vpop.f32.mrb[0].mxu0
        %5074 = vmatprep.mubr.f32.mxu0 0.0
        %5075 = vmatmul.mubr.f32.gmra.mrb[0].mxu0 %v4973
        %v5076 = vpop.f32.mrb[0].mxu0
        %v5077 = vadd.f32 0.0, %v5076
        %v5078 = vpop.f32.mrb[0].mxu0
        %5079 = vdwg.mxu0
        %v5080 = vadd.f32 %v4931, %v5042
        %v5081 = vadd.f32 %v4932, %v5047
        %v5082 = vadd.f32 %v4933, %v5052
        %v5083 = vadd.f32 %v4934, %v5057
        %v5084 = vadd.f32 %v4935, %v5062
        %v5085 = vadd.f32 %v4936, %v5067
        %v5086 = vadd.f32 %v4937, %v5072
        %v5087 = vadd.f32 %v4938, %v5077
        %5088 = vrot.lane.b32.xlu0 %v4511, 96
        %v5089 = vpop.permute.xlu0 %5088
        %5090 = vrot.lane.b32.xlu0 %v4512, 96
        %v5091 = vpop.permute.xlu0 %5090
        %5092 = vrot.lane.b32.xlu0 %v4513, 96
        %v5093 = vpop.permute.xlu0 %5092
        %5094 = vrot.lane.b32.xlu0 %v4514, 96
        %v5095 = vpop.permute.xlu0 %5094
        %v5101 = vsel %vm4531, %v4479, 0
        %v5104 = vsel %vm4531, %v4480, 0
        %v5107 = vsel %vm4531, %v4481, 0
        %v5110 = vsel %vm4531, %v4482, 0
        %v5113 = vsel %vm4531, %v4483, 0
        %v5116 = vsel %vm4531, %v4484, 0
        %v5119 = vsel %vm4531, %v4485, 0
        %v5122 = vsel %vm4531, %v4486, 0
        %5124 = vmatprep.subr.mxu0 0.0
        %5125 = vmatpush1.msra.mxu0 %v5089
        %5126 = vmatprep.subr.mxu0 0.0
        %5127 = vmatpush1.msra.mxu0 %v5091
        %5128 = vmatprep.subr.mxu0 0.0
        %5129 = vmatpush1.msra.mxu0 %v5093
        %5130 = vmatprep.subr.mxu0 0.0
        %5131 = vmatpush1.msra.mxu0 %v5095
        %5132 = vmatprep.subr.mxu0 0.0
        %5133 = vmatpush1.msra.mxu0 0.0
        %5134 = vmatprep.subr.mxu0 0.0
        %5135 = vmatpush1.msra.mxu0 0.0
        %5136 = vmatprep.subr.mxu0 0.0
        %5137 = vmatpush1.msra.mxu0 0.0
        %5138 = vmatprep.subr.mxu0 0.0
        %5139 = vmatpush1.msra.mxu0 0.0
        %5140 = vmatprep.subr.mxu0 0.0
        %5141 = vmatpush1.msra.mxu0 0.0
        %5142 = vmatprep.subr.mxu0 0.0
        %5143 = vmatpush1.msra.mxu0 0.0
        %5144 = vmatprep.subr.mxu0 0.0
        %5145 = vmatpush1.msra.mxu0 0.0
        %5146 = vmatprep.subr.mxu0 0.0
        %5147 = vmatpush1.msra.mxu0 0.0
        %5148 = vmatprep.subr.mxu0 0.0
        %5149 = vmatpush1.msra.mxu0 0.0
        %5150 = vmatprep.subr.mxu0 0.0
        %5151 = vmatpush1.msra.mxu0 0.0
        %5152 = vmatprep.subr.mxu0 0.0
        %5153 = vmatpush1.msra.mxu0 0.0
        %5154 = vmatprep.subr.mxu0 0.0
        %5155 = vmatpush1.msra.mxu0 0.0
        %5156 = vmatprep.subr.mxu0 0.0
        %5157 = vmatpush1.msra.mxu0 0.0
        %5158 = vmatprep.subr.mxu0 0.0
        %5159 = vmatpush1.msra.mxu0 0.0
        %5160 = vmatprep.subr.mxu0 0.0
        %5161 = vmatpush1.msra.mxu0 0.0
        %5162 = vmatprep.subr.mxu0 0.0
        %5163 = vmatpush1.msra.mxu0 0.0
        %5164 = vmatprep.subr.mxu0 0.0
        %5165 = vmatpush1.msra.mxu0 0.0
        %5166 = vmatprep.subr.mxu0 0.0
        %5167 = vmatpush1.msra.mxu0 0.0
        %5168 = vmatprep.subr.mxu0 0.0
        %5169 = vmatpush1.msra.mxu0 0.0
        %5170 = vmatprep.subr.mxu0 0.0
        %5171 = vmatpush1.msra.mxu0 0.0
        %5172 = vmatprep.subr.mxu0 0.0
        %5173 = vmatpush1.msra.mxu0 0.0
        %5174 = vmatprep.subr.mxu0 0.0
        %5175 = vmatpush1.msra.mxu0 0.0
        %5176 = vmatprep.subr.mxu0 0.0
        %5177 = vmatpush1.msra.mxu0 0.0
        %5178 = vmatprep.subr.mxu0 0.0
        %5179 = vmatpush1.msra.mxu0 0.0
        %5180 = vmatprep.subr.mxu0 0.0
        %5181 = vmatpush1.msra.mxu0 0.0
        %5182 = vmatprep.subr.mxu0 0.0
        %5183 = vmatpush1.msra.mxu0 0.0
        %5184 = vmatprep.subr.mxu0 0.0
        %5185 = vmatpush1.msra.mxu0 0.0
        %5186 = vmatprep.subr.mxu0 0.0
        %5187 = vmatpush1.msra.mxu0 0.0
        %5188 = vmatprep.mubr.f32.mxu0 0.0
        %5189 = vmatmul.mubr.f32.gmra.mrb[0].mxu0 %v5101
        %v5190 = vpop.f32.mrb[0].mxu0
        %v5191 = vadd.f32 0.0, %v5190
        %v5192 = vpop.f32.mrb[0].mxu0
        %5193 = vmatprep.mubr.f32.mxu0 0.0
        %5194 = vmatmul.mubr.f32.gmra.mrb[0].mxu0 %v5104
        %v5195 = vpop.f32.mrb[0].mxu0
        %v5196 = vadd.f32 0.0, %v5195
        %v5197 = vpop.f32.mrb[0].mxu0
        %5198 = vmatprep.mubr.f32.mxu0 0.0
        %5199 = vmatmul.mubr.f32.gmra.mrb[0].mxu0 %v5107
        %v5200 = vpop.f32.mrb[0].mxu0
        %v5201 = vadd.f32 0.0, %v5200
        %v5202 = vpop.f32.mrb[0].mxu0
        %5203 = vmatprep.mubr.f32.mxu0 0.0
        %5204 = vmatmul.mubr.f32.gmra.mrb[0].mxu0 %v5110
        %v5205 = vpop.f32.mrb[0].mxu0
        %v5206 = vadd.f32 0.0, %v5205
        %v5207 = vpop.f32.mrb[0].mxu0
        %5208 = vmatprep.mubr.f32.mxu0 0.0
        %5209 = vmatmul.mubr.f32.gmra.mrb[0].mxu0 %v5113
        %v5210 = vpop.f32.mrb[0].mxu0
        %v5211 = vadd.f32 0.0, %v5210
        %v5212 = vpop.f32.mrb[0].mxu0
        %5213 = vmatprep.mubr.f32.mxu0 0.0
        %5214 = vmatmul.mubr.f32.gmra.mrb[0].mxu0 %v5116
        %v5215 = vpop.f32.mrb[0].mxu0
        %v5216 = vadd.f32 0.0, %v5215
        %v5217 = vpop.f32.mrb[0].mxu0
        %5218 = vmatprep.mubr.f32.mxu0 0.0
        %5219 = vmatmul.mubr.f32.gmra.mrb[0].mxu0 %v5119
        %v5220 = vpop.f32.mrb[0].mxu0
        %v5221 = vadd.f32 0.0, %v5220
        %v5222 = vpop.f32.mrb[0].mxu0
        %5223 = vmatprep.mubr.f32.mxu0 0.0
        %5224 = vmatmul.mubr.f32.gmra.mrb[0].mxu0 %v5122
        %v5225 = vpop.f32.mrb[0].mxu0
        %v5226 = vadd.f32 0.0, %v5225
        %v5227 = vpop.f32.mrb[0].mxu0
        %5228 = vdwg.mxu0
        %v5229 = vadd.f32 %v5080, %v5191
        %v5230 = vadd.f32 %v5081, %v5196
        %v5231 = vadd.f32 %v5082, %v5201
        %v5232 = vadd.f32 %v5083, %v5206
        %v5233 = vadd.f32 %v5084, %v5211
        %v5234 = vadd.f32 %v5085, %v5216
        %v5235 = vadd.f32 %v5086, %v5221
        %v5236 = vadd.f32 %v5087, %v5226
        %5237 = vrot.lane.b32.xlu0 %v4511, 88
        %v5238 = vpop.permute.xlu0 %5237
        %5239 = vrot.lane.b32.xlu0 %v4512, 88
        %v5240 = vpop.permute.xlu0 %5239
        %5241 = vrot.lane.b32.xlu0 %v4513, 88
        %v5242 = vpop.permute.xlu0 %5241
        %5243 = vrot.lane.b32.xlu0 %v4514, 88
        %v5244 = vpop.permute.xlu0 %5243
        %v5250 = vsel %vm4531, %v4487, 0
        %v5253 = vsel %vm4531, %v4488, 0
        %v5256 = vsel %vm4531, %v4489, 0
        %v5259 = vsel %vm4531, %v4490, 0
        %v5262 = vsel %vm4531, %v4491, 0
        %v5265 = vsel %vm4531, %v4492, 0
        %v5268 = vsel %vm4531, %v4493, 0
        %v5271 = vsel %vm4531, %v4494, 0
        %5273 = vmatprep.subr.mxu0 0.0
        %5274 = vmatpush1.msra.mxu0 %v5238
        %5275 = vmatprep.subr.mxu0 0.0
        %5276 = vmatpush1.msra.mxu0 %v5240
        %5277 = vmatprep.subr.mxu0 0.0
        %5278 = vmatpush1.msra.mxu0 %v5242
        %5279 = vmatprep.subr.mxu0 0.0
        %5280 = vmatpush1.msra.mxu0 %v5244
        %5281 = vmatprep.subr.mxu0 0.0
        %5282 = vmatpush1.msra.mxu0 0.0
        %5283 = vmatprep.subr.mxu0 0.0
        %5284 = vmatpush1.msra.mxu0 0.0
        %5285 = vmatprep.subr.mxu0 0.0
        %5286 = vmatpush1.msra.mxu0 0.0
        %5287 = vmatprep.subr.mxu0 0.0
        %5288 = vmatpush1.msra.mxu0 0.0
        %5289 = vmatprep.subr.mxu0 0.0
        %5290 = vmatpush1.msra.mxu0 0.0
        %5291 = vmatprep.subr.mxu0 0.0
        %5292 = vmatpush1.msra.mxu0 0.0
        %5293 = vmatprep.subr.mxu0 0.0
        %5294 = vmatpush1.msra.mxu0 0.0
        %5295 = vmatprep.subr.mxu0 0.0
        %5296 = vmatpush1.msra.mxu0 0.0
        %5297 = vmatprep.subr.mxu0 0.0
        %5298 = vmatpush1.msra.mxu0 0.0
        %5299 = vmatprep.subr.mxu0 0.0
        %5300 = vmatpush1.msra.mxu0 0.0
        %5301 = vmatprep.subr.mxu0 0.0
        %5302 = vmatpush1.msra.mxu0 0.0
        %5303 = vmatprep.subr.mxu0 0.0
        %5304 = vmatpush1.msra.mxu0 0.0
        %5305 = vmatprep.subr.mxu0 0.0
        %5306 = vmatpush1.msra.mxu0 0.0
        %5307 = vmatprep.subr.mxu0 0.0
        %5308 = vmatpush1.msra.mxu0 0.0
        %5309 = vmatprep.subr.mxu0 0.0
        %5310 = vmatpush1.msra.mxu0 0.0
        %5311 = vmatprep.subr.mxu0 0.0
        %5312 = vmatpush1.msra.mxu0 0.0
        %5313 = vmatprep.subr.mxu0 0.0
        %5314 = vmatpush1.msra.mxu0 0.0
        %5315 = vmatprep.subr.mxu0 0.0
        %5316 = vmatpush1.msra.mxu0 0.0
        %5317 = vmatprep.subr.mxu0 0.0
        %5318 = vmatpush1.msra.mxu0 0.0
        %5319 = vmatprep.subr.mxu0 0.0
        %5320 = vmatpush1.msra.mxu0 0.0
        %5321 = vmatprep.subr.mxu0 0.0
        %5322 = vmatpush1.msra.mxu0 0.0
        %5323 = vmatprep.subr.mxu0 0.0
        %5324 = vmatpush1.msra.mxu0 0.0
        %5325 = vmatprep.subr.mxu0 0.0
        %5326 = vmatpush1.msra.mxu0 0.0
        %5327 = vmatprep.subr.mxu0 0.0
        %5328 = vmatpush1.msra.mxu0 0.0
        %5329 = vmatprep.subr.mxu0 0.0
        %5330 = vmatpush1.msra.mxu0 0.0
        %5331 = vmatprep.subr.mxu0 0.0
        %5332 = vmatpush1.msra.mxu0 0.0
        %5333 = vmatprep.subr.mxu0 0.0
        %5334 = vmatpush1.msra.mxu0 0.0
        %5335 = vmatprep.subr.mxu0 0.0
        %5336 = vmatpush1.msra.mxu0 0.0
        %5337 = vmatprep.mubr.f32.mxu0 0.0
        %5338 = vmatmul.mubr.f32.gmra.mrb[0].mxu0 %v5250
        %v5339 = vpop.f32.mrb[0].mxu0
        %v5340 = vadd.f32 0.0, %v5339
        %v5341 = vpop.f32.mrb[0].mxu0
        %5342 = vmatprep.mubr.f32.mxu0 0.0
        %5343 = vmatmul.mubr.f32.gmra.mrb[0].mxu0 %v5253
        %v5344 = vpop.f32.mrb[0].mxu0
        %v5345 = vadd.f32 0.0, %v5344
        %v5346 = vpop.f32.mrb[0].mxu0
        %5347 = vmatprep.mubr.f32.mxu0 0.0
        %5348 = vmatmul.mubr.f32.gmra.mrb[0].mxu0 %v5256
        %v5349 = vpop.f32.mrb[0].mxu0
        %v5350 = vadd.f32 0.0, %v5349
        %v5351 = vpop.f32.mrb[0].mxu0
        %5352 = vmatprep.mubr.f32.mxu0 0.0
        %5353 = vmatmul.mubr.f32.gmra.mrb[0].mxu0 %v5259
        %v5354 = vpop.f32.mrb[0].mxu0
        %v5355 = vadd.f32 0.0, %v5354
        %v5356 = vpop.f32.mrb[0].mxu0
        %5357 = vmatprep.mubr.f32.mxu0 0.0
        %5358 = vmatmul.mubr.f32.gmra.mrb[0].mxu0 %v5262
        %v5359 = vpop.f32.mrb[0].mxu0
        %v5360 = vadd.f32 0.0, %v5359
        %v5361 = vpop.f32.mrb[0].mxu0
        %5362 = vmatprep.mubr.f32.mxu0 0.0
        %5363 = vmatmul.mubr.f32.gmra.mrb[0].mxu0 %v5265
        %v5364 = vpop.f32.mrb[0].mxu0
        %v5365 = vadd.f32 0.0, %v5364
        %v5366 = vpop.f32.mrb[0].mxu0
        %5367 = vmatprep.mubr.f32.mxu0 0.0
        %5368 = vmatmul.mubr.f32.gmra.mrb[0].mxu0 %v5268
        %v5369 = vpop.f32.mrb[0].mxu0
        %v5370 = vadd.f32 0.0, %v5369
        %v5371 = vpop.f32.mrb[0].mxu0
        %5372 = vmatprep.mubr.f32.mxu0 0.0
        %5373 = vmatmul.mubr.f32.gmra.mrb[0].mxu0 %v5271
        %v5374 = vpop.f32.mrb[0].mxu0
        %v5375 = vadd.f32 0.0, %v5374
        %v5376 = vpop.f32.mrb[0].mxu0
        %5377 = vdwg.mxu0
        %v5378 = vadd.f32 %v5229, %v5340
        %v5379 = vadd.f32 %v5230, %v5345
        %v5380 = vadd.f32 %v5231, %v5350
        %v5381 = vadd.f32 %v5232, %v5355
        %v5382 = vadd.f32 %v5233, %v5360
        %v5383 = vadd.f32 %v5234, %v5365
        %v5384 = vadd.f32 %v5235, %v5370
        %v5385 = vadd.f32 %v5236, %v5375
        %5386 = vrot.lane.b32.xlu0 %v4511, 80
        %v5387 = vpop.permute.xlu0 %5386
        %5388 = vrot.lane.b32.xlu0 %v4512, 80
        %v5389 = vpop.permute.xlu0 %5388
        %5390 = vrot.lane.b32.xlu0 %v4513, 80
        %v5391 = vpop.permute.xlu0 %5390
        %5392 = vrot.lane.b32.xlu0 %v4514, 80
        %v5393 = vpop.permute.xlu0 %5392
        %v5399 = vsel %vm4531, %v4495, 0
        %v5402 = vsel %vm4531, %v4496, 0
        %v5405 = vsel %vm4531, %v4497, 0
        %v5408 = vsel %vm4531, %v4498, 0
        %v5411 = vsel %vm4531, %v4499, 0
        %v5414 = vsel %vm4531, %v4500, 0
        %v5417 = vsel %vm4531, %v4501, 0
        %v5420 = vsel %vm4531, %v4502, 0
        %5422 = vmatprep.subr.mxu0 0.0
        %5423 = vmatpush1.msra.mxu0 %v5387
        %5424 = vmatprep.subr.mxu0 0.0
        %5425 = vmatpush1.msra.mxu0 %v5389
        %5426 = vmatprep.subr.mxu0 0.0
        %5427 = vmatpush1.msra.mxu0 %v5391
        %5428 = vmatprep.subr.mxu0 0.0
        %5429 = vmatpush1.msra.mxu0 %v5393
        %5430 = vmatprep.subr.mxu0 0.0
        %5431 = vmatpush1.msra.mxu0 0.0
        %5432 = vmatprep.subr.mxu0 0.0
        %5433 = vmatpush1.msra.mxu0 0.0
        %5434 = vmatprep.subr.mxu0 0.0
        %5435 = vmatpush1.msra.mxu0 0.0
        %5436 = vmatprep.subr.mxu0 0.0
        %5437 = vmatpush1.msra.mxu0 0.0
        %5438 = vmatprep.subr.mxu0 0.0
        %5439 = vmatpush1.msra.mxu0 0.0
        %5440 = vmatprep.subr.mxu0 0.0
        %5441 = vmatpush1.msra.mxu0 0.0
        %5442 = vmatprep.subr.mxu0 0.0
        %5443 = vmatpush1.msra.mxu0 0.0
        %5444 = vmatprep.subr.mxu0 0.0
        %5445 = vmatpush1.msra.mxu0 0.0
        %5446 = vmatprep.subr.mxu0 0.0
        %5447 = vmatpush1.msra.mxu0 0.0
        %5448 = vmatprep.subr.mxu0 0.0
        %5449 = vmatpush1.msra.mxu0 0.0
        %5450 = vmatprep.subr.mxu0 0.0
        %5451 = vmatpush1.msra.mxu0 0.0
        %5452 = vmatprep.subr.mxu0 0.0
        %5453 = vmatpush1.msra.mxu0 0.0
        %5454 = vmatprep.subr.mxu0 0.0
        %5455 = vmatpush1.msra.mxu0 0.0
        %5456 = vmatprep.subr.mxu0 0.0
        %5457 = vmatpush1.msra.mxu0 0.0
        %5458 = vmatprep.subr.mxu0 0.0
        %5459 = vmatpush1.msra.mxu0 0.0
        %5460 = vmatprep.subr.mxu0 0.0
        %5461 = vmatpush1.msra.mxu0 0.0
        %5462 = vmatprep.subr.mxu0 0.0
        %5463 = vmatpush1.msra.mxu0 0.0
        %5464 = vmatprep.subr.mxu0 0.0
        %5465 = vmatpush1.msra.mxu0 0.0
        %5466 = vmatprep.subr.mxu0 0.0
        %5467 = vmatpush1.msra.mxu0 0.0
        %5468 = vmatprep.subr.mxu0 0.0
        %5469 = vmatpush1.msra.mxu0 0.0
        %5470 = vmatprep.subr.mxu0 0.0
        %5471 = vmatpush1.msra.mxu0 0.0
        %5472 = vmatprep.subr.mxu0 0.0
        %5473 = vmatpush1.msra.mxu0 0.0
        %5474 = vmatprep.subr.mxu0 0.0
        %5475 = vmatpush1.msra.mxu0 0.0
        %5476 = vmatprep.subr.mxu0 0.0
        %5477 = vmatpush1.msra.mxu0 0.0
        %5478 = vmatprep.subr.mxu0 0.0
        %5479 = vmatpush1.msra.mxu0 0.0
        %5480 = vmatprep.subr.mxu0 0.0
        %5481 = vmatpush1.msra.mxu0 0.0
        %5482 = vmatprep.subr.mxu0 0.0
        %5483 = vmatpush1.msra.mxu0 0.0
        %5484 = vmatprep.subr.mxu0 0.0
        %5485 = vmatpush1.msra.mxu0 0.0
        %5486 = vmatprep.mubr.f32.mxu0 0.0
        %5487 = vmatmul.mubr.f32.gmra.mrb[0].mxu0 %v5399
        %v5488 = vpop.f32.mrb[0].mxu0
        %v5489 = vadd.f32 0.0, %v5488
        %v5490 = vpop.f32.mrb[0].mxu0
        %5491 = vmatprep.mubr.f32.mxu0 0.0
        %5492 = vmatmul.mubr.f32.gmra.mrb[0].mxu0 %v5402
        %v5493 = vpop.f32.mrb[0].mxu0
        %v5494 = vadd.f32 0.0, %v5493
        %v5495 = vpop.f32.mrb[0].mxu0
        %5496 = vmatprep.mubr.f32.mxu0 0.0
        %5497 = vmatmul.mubr.f32.gmra.mrb[0].mxu0 %v5405
        %v5498 = vpop.f32.mrb[0].mxu0
        %v5499 = vadd.f32 0.0, %v5498
        %v5500 = vpop.f32.mrb[0].mxu0
        %5501 = vmatprep.mubr.f32.mxu0 0.0
        %5502 = vmatmul.mubr.f32.gmra.mrb[0].mxu0 %v5408
        %v5503 = vpop.f32.mrb[0].mxu0
        %v5504 = vadd.f32 0.0, %v5503
        %v5505 = vpop.f32.mrb[0].mxu0
        %5506 = vmatprep.mubr.f32.mxu0 0.0
        %5507 = vmatmul.mubr.f32.gmra.mrb[0].mxu0 %v5411
        %v5508 = vpop.f32.mrb[0].mxu0
        %v5509 = vadd.f32 0.0, %v5508
        %v5510 = vpop.f32.mrb[0].mxu0
        %5511 = vmatprep.mubr.f32.mxu0 0.0
        %5512 = vmatmul.mubr.f32.gmra.mrb[0].mxu0 %v5414
        %v5513 = vpop.f32.mrb[0].mxu0
        %v5514 = vadd.f32 0.0, %v5513
        %v5515 = vpop.f32.mrb[0].mxu0
        %5516 = vmatprep.mubr.f32.mxu0 0.0
        %5517 = vmatmul.mubr.f32.gmra.mrb[0].mxu0 %v5417
        %v5518 = vpop.f32.mrb[0].mxu0
        %v5519 = vadd.f32 0.0, %v5518
        %v5520 = vpop.f32.mrb[0].mxu0
        %5521 = vmatprep.mubr.f32.mxu0 0.0
        %5522 = vmatmul.mubr.f32.gmra.mrb[0].mxu0 %v5420
        %v5523 = vpop.f32.mrb[0].mxu0
        %v5524 = vadd.f32 0.0, %v5523
        %v5525 = vpop.f32.mrb[0].mxu0
        %5526 = vdwg.mxu0
        %v5527 = vadd.f32 %v5378, %v5489
        %v5528 = vadd.f32 %v5379, %v5494
        %v5529 = vadd.f32 %v5380, %v5499
        %v5530 = vadd.f32 %v5381, %v5504
        %v5531 = vadd.f32 %v5382, %v5509
        %v5532 = vadd.f32 %v5383, %v5514
        %v5533 = vadd.f32 %v5384, %v5519
        %v5534 = vadd.f32 %v5385, %v5524
        %5535 = vrot.lane.b32.xlu0 %v4511, 72
        %v5536 = vpop.permute.xlu0 %5535
        %5537 = vrot.lane.b32.xlu0 %v4512, 72
        %v5538 = vpop.permute.xlu0 %5537
        %5539 = vrot.lane.b32.xlu0 %v4513, 72
        %v5540 = vpop.permute.xlu0 %5539
        %5541 = vrot.lane.b32.xlu0 %v4514, 72
        %v5542 = vpop.permute.xlu0 %5541
        %v5548 = vsel %vm4531, %v4503, 0
        %v5551 = vsel %vm4531, %v4504, 0
        %v5554 = vsel %vm4531, %v4505, 0
        %v5557 = vsel %vm4531, %v4506, 0
        %v5560 = vsel %vm4531, %v4507, 0
        %v5563 = vsel %vm4531, %v4508, 0
        %v5566 = vsel %vm4531, %v4509, 0
        %v5569 = vsel %vm4531, %v4510, 0
        %5571 = vmatprep.subr.mxu0 0.0
        %5572 = vmatpush1.msra.mxu0 %v5536
        %5573 = vmatprep.subr.mxu0 0.0
        %5574 = vmatpush1.msra.mxu0 %v5538
        %5575 = vmatprep.subr.mxu0 0.0
        %5576 = vmatpush1.msra.mxu0 %v5540
        %5577 = vmatprep.subr.mxu0 0.0
        %5578 = vmatpush1.msra.mxu0 %v5542
        %5579 = vmatprep.subr.mxu0 0.0
        %5580 = vmatpush1.msra.mxu0 0.0
        %5581 = vmatprep.subr.mxu0 0.0
        %5582 = vmatpush1.msra.mxu0 0.0
        %5583 = vmatprep.subr.mxu0 0.0
        %5584 = vmatpush1.msra.mxu0 0.0
        %5585 = vmatprep.subr.mxu0 0.0
        %5586 = vmatpush1.msra.mxu0 0.0
        %5587 = vmatprep.subr.mxu0 0.0
        %5588 = vmatpush1.msra.mxu0 0.0
        %5589 = vmatprep.subr.mxu0 0.0
        %5590 = vmatpush1.msra.mxu0 0.0
        %5591 = vmatprep.subr.mxu0 0.0
        %5592 = vmatpush1.msra.mxu0 0.0
        %5593 = vmatprep.subr.mxu0 0.0
        %5594 = vmatpush1.msra.mxu0 0.0
        %5595 = vmatprep.subr.mxu0 0.0
        %5596 = vmatpush1.msra.mxu0 0.0
        %5597 = vmatprep.subr.mxu0 0.0
        %5598 = vmatpush1.msra.mxu0 0.0
        %5599 = vmatprep.subr.mxu0 0.0
        %5600 = vmatpush1.msra.mxu0 0.0
        %5601 = vmatprep.subr.mxu0 0.0
        %5602 = vmatpush1.msra.mxu0 0.0
        %5603 = vmatprep.subr.mxu0 0.0
        %5604 = vmatpush1.msra.mxu0 0.0
        %5605 = vmatprep.subr.mxu0 0.0
        %5606 = vmatpush1.msra.mxu0 0.0
        %5607 = vmatprep.subr.mxu0 0.0
        %5608 = vmatpush1.msra.mxu0 0.0
        %5609 = vmatprep.subr.mxu0 0.0
        %5610 = vmatpush1.msra.mxu0 0.0
        %5611 = vmatprep.subr.mxu0 0.0
        %5612 = vmatpush1.msra.mxu0 0.0
        %5613 = vmatprep.subr.mxu0 0.0
        %5614 = vmatpush1.msra.mxu0 0.0
        %5615 = vmatprep.subr.mxu0 0.0
        %5616 = vmatpush1.msra.mxu0 0.0
        %5617 = vmatprep.subr.mxu0 0.0
        %5618 = vmatpush1.msra.mxu0 0.0
        %5619 = vmatprep.subr.mxu0 0.0
        %5620 = vmatpush1.msra.mxu0 0.0
        %5621 = vmatprep.subr.mxu0 0.0
        %5622 = vmatpush1.msra.mxu0 0.0
        %5623 = vmatprep.subr.mxu0 0.0
        %5624 = vmatpush1.msra.mxu0 0.0
        %5625 = vmatprep.subr.mxu0 0.0
        %5626 = vmatpush1.msra.mxu0 0.0
        %5627 = vmatprep.subr.mxu0 0.0
        %5628 = vmatpush1.msra.mxu0 0.0
        %5629 = vmatprep.subr.mxu0 0.0
        %5630 = vmatpush1.msra.mxu0 0.0
        %5631 = vmatprep.subr.mxu0 0.0
        %5632 = vmatpush1.msra.mxu0 0.0
        %5633 = vmatprep.subr.mxu0 0.0
        %5634 = vmatpush1.msra.mxu0 0.0
        %5635 = vmatprep.mubr.f32.mxu0 0.0
        %5636 = vmatmul.mubr.f32.gmra.mrb[0].mxu0 %v5548
        %v5637 = vpop.f32.mrb[0].mxu0
        %v5638 = vadd.f32 0.0, %v5637
        %v5639 = vpop.f32.mrb[0].mxu0
        %5640 = vmatprep.mubr.f32.mxu0 0.0
        %5641 = vmatmul.mubr.f32.gmra.mrb[0].mxu0 %v5551
        %v5642 = vpop.f32.mrb[0].mxu0
        %v5643 = vadd.f32 0.0, %v5642
        %v5644 = vpop.f32.mrb[0].mxu0
        %5645 = vmatprep.mubr.f32.mxu0 0.0
        %5646 = vmatmul.mubr.f32.gmra.mrb[0].mxu0 %v5554
        %v5647 = vpop.f32.mrb[0].mxu0
        %v5648 = vadd.f32 0.0, %v5647
        %v5649 = vpop.f32.mrb[0].mxu0
        %5650 = vmatprep.mubr.f32.mxu0 0.0
        %5651 = vmatmul.mubr.f32.gmra.mrb[0].mxu0 %v5557
        %v5652 = vpop.f32.mrb[0].mxu0
        %v5653 = vadd.f32 0.0, %v5652
        %v5654 = vpop.f32.mrb[0].mxu0
        %5655 = vmatprep.mubr.f32.mxu0 0.0
        %5656 = vmatmul.mubr.f32.gmra.mrb[0].mxu0 %v5560
        %v5657 = vpop.f32.mrb[0].mxu0
        %v5658 = vadd.f32 0.0, %v5657
        %v5659 = vpop.f32.mrb[0].mxu0
        %5660 = vmatprep.mubr.f32.mxu0 0.0
        %5661 = vmatmul.mubr.f32.gmra.mrb[0].mxu0 %v5563
        %v5662 = vpop.f32.mrb[0].mxu0
        %v5663 = vadd.f32 0.0, %v5662
        %v5664 = vpop.f32.mrb[0].mxu0
        %5665 = vmatprep.mubr.f32.mxu0 0.0
        %5666 = vmatmul.mubr.f32.gmra.mrb[0].mxu0 %v5566
        %v5667 = vpop.f32.mrb[0].mxu0
        %v5668 = vadd.f32 0.0, %v5667
        %v5669 = vpop.f32.mrb[0].mxu0
        %5670 = vmatprep.mubr.f32.mxu0 0.0
        %5671 = vmatmul.mubr.f32.gmra.mrb[0].mxu0 %v5569
        %v5672 = vpop.f32.mrb[0].mxu0
        %v5673 = vadd.f32 0.0, %v5672
        %v5674 = vpop.f32.mrb[0].mxu0
        %5675 = vdwg.mxu0
        %v5676 = vadd.f32 %v5527, %v5638
        %v5677 = vadd.f32 %v5528, %v5643
        %v5678 = vadd.f32 %v5529, %v5648
        %v5679 = vadd.f32 %v5530, %v5653
        %v5680 = vadd.f32 %v5531, %v5658
        %v5681 = vadd.f32 %v5532, %v5663
        %v5682 = vadd.f32 %v5533, %v5668
        %v5683 = vadd.f32 %v5534, %v5673
        %v5684 = vld [vmem:[%s13] sm:$0xff]
        %v5685 = vld [vmem:[%s13 + $0x8] sm:$0xff]
        %v5686 = vld [vmem:[%s13 + $0x10] sm:$0xff]
        %v5687 = vld [vmem:[%s13 + $0x18] sm:$0xff]
        %v5688 = vld [vmem:[%s13 + $0x20] sm:$0xff]
        %v5689 = vld [vmem:[%s13 + $0x28] sm:$0xff]
        %v5690 = vld [vmem:[%s13 + $0x30] sm:$0xff]
        %v5691 = vld [vmem:[%s13 + $0x38] sm:$0xff]
        %5693 = vset.pattern.permute.xlu0 0
        %5694 = vperm.xlu0 %5693, %v5684
        %v5695 = vpop.permute.xlu0 %5694
        %5698 = vset.pattern.permute.xlu0 0
        %5699 = vperm.xlu0 %5698, %v5685
        %v5700 = vpop.permute.xlu0 %5699
        %5703 = vset.pattern.permute.xlu0 0
        %5704 = vperm.xlu0 %5703, %v5686
        %v5705 = vpop.permute.xlu0 %5704
        %5708 = vset.pattern.permute.xlu0 0
        %5709 = vperm.xlu0 %5708, %v5687
        %v5710 = vpop.permute.xlu0 %5709
        %5713 = vset.pattern.permute.xlu0 0
        %5714 = vperm.xlu0 %5713, %v5688
        %v5715 = vpop.permute.xlu0 %5714
        %5718 = vset.pattern.permute.xlu0 0
        %5719 = vperm.xlu0 %5718, %v5689
        %v5720 = vpop.permute.xlu0 %5719
        %5723 = vset.pattern.permute.xlu0 0
        %5724 = vperm.xlu0 %5723, %v5690
        %v5725 = vpop.permute.xlu0 %5724
        %5728 = vset.pattern.permute.xlu0 0
        %5729 = vperm.xlu0 %5728, %v5691
        %v5730 = vpop.permute.xlu0 %5729
        %v5732 = vadd.f32 %v5676, %v5695
        %v5733 = vadd.f32 %v5677, %v5700
        %v5734 = vadd.f32 %v5678, %v5705
        %v5735 = vadd.f32 %v5679, %v5710
        %v5736 = vadd.f32 %v5680, %v5715
        %v5737 = vadd.f32 %v5681, %v5720
        %v5738 = vadd.f32 %v5682, %v5725
        %v5739 = vadd.f32 %v5683, %v5730
        %v5740 = vmax.f32 %v5732, 0.0
        %v5741 = vmax.f32 %v5733, 0.0
        %v5742 = vmax.f32 %v5734, 0.0
        %v5743 = vmax.f32 %v5735, 0.0
        %v5744 = vmax.f32 %v5736, 0.0
        %v5745 = vmax.f32 %v5737, 0.0
        %v5746 = vmax.f32 %v5738, 0.0
        %v5747 = vmax.f32 %v5739, 0.0
        %v5748 = vld [vmem:[%s14] sm:$0xf]
        %v5749 = vld [vmem:[%s15] sm:$0xf]
        %5751 = vset.pattern.permute.xlu0 0
        %5752 = vperm.xlu0 %5751, %v5749
        %v5753 = vpop.permute.xlu0 %5752
        %v5756 = vsel %vm4378, %v5748, 0
        %5758 = vmatprep.subr.mxu0 0.0
        %5759 = vmatpush1.msra.mxu0 %v5740
        %5760 = vmatprep.subr.mxu0 0.0
        %5761 = vmatpush1.msra.mxu0 %v5741
        %5762 = vmatprep.subr.mxu0 0.0
        %5763 = vmatpush1.msra.mxu0 %v5742
        %5764 = vmatprep.subr.mxu0 0.0
        %5765 = vmatpush1.msra.mxu0 %v5743
        %5766 = vmatprep.subr.mxu0 0.0
        %5767 = vmatpush1.msra.mxu0 %v5744
        %5768 = vmatprep.subr.mxu0 0.0
        %5769 = vmatpush1.msra.mxu0 %v5745
        %5770 = vmatprep.subr.mxu0 0.0
        %5771 = vmatpush1.msra.mxu0 %v5746
        %5772 = vmatprep.subr.mxu0 0.0
        %5773 = vmatpush1.msra.mxu0 %v5747
        %5774 = vmatprep.subr.mxu0 0.0
        %5775 = vmatpush1.msra.mxu0 0.0
        %5776 = vmatprep.subr.mxu0 0.0
        %5777 = vmatpush1.msra.mxu0 0.0
        %5778 = vmatprep.subr.mxu0 0.0
        %5779 = vmatpush1.msra.mxu0 0.0
        %5780 = vmatprep.subr.mxu0 0.0
        %5781 = vmatpush1.msra.mxu0 0.0
        %5782 = vmatprep.subr.mxu0 0.0
        %5783 = vmatpush1.msra.mxu0 0.0
        %5784 = vmatprep.subr.mxu0 0.0
        %5785 = vmatpush1.msra.mxu0 0.0
        %5786 = vmatprep.subr.mxu0 0.0
        %5787 = vmatpush1.msra.mxu0 0.0
        %5788 = vmatprep.subr.mxu0 0.0
        %5789 = vmatpush1.msra.mxu0 0.0
        %5790 = vmatprep.subr.mxu0 0.0
        %5791 = vmatpush1.msra.mxu0 0.0
        %5792 = vmatprep.subr.mxu0 0.0
        %5793 = vmatpush1.msra.mxu0 0.0
        %5794 = vmatprep.subr.mxu0 0.0
        %5795 = vmatpush1.msra.mxu0 0.0
        %5796 = vmatprep.subr.mxu0 0.0
        %5797 = vmatpush1.msra.mxu0 0.0
        %5798 = vmatprep.subr.mxu0 0.0
        %5799 = vmatpush1.msra.mxu0 0.0
        %5800 = vmatprep.subr.mxu0 0.0
        %5801 = vmatpush1.msra.mxu0 0.0
        %5802 = vmatprep.subr.mxu0 0.0
        %5803 = vmatpush1.msra.mxu0 0.0
        %5804 = vmatprep.subr.mxu0 0.0
        %5805 = vmatpush1.msra.mxu0 0.0
        %5806 = vmatprep.subr.mxu0 0.0
        %5807 = vmatpush1.msra.mxu0 0.0
        %5808 = vmatprep.subr.mxu0 0.0
        %5809 = vmatpush1.msra.mxu0 0.0
        %5810 = vmatprep.subr.mxu0 0.0
        %5811 = vmatpush1.msra.mxu0 0.0
        %5812 = vmatprep.subr.mxu0 0.0
        %5813 = vmatpush1.msra.mxu0 0.0
        %5814 = vmatprep.subr.mxu0 0.0
        %5815 = vmatpush1.msra.mxu0 0.0
        %5816 = vmatprep.subr.mxu0 0.0
        %5817 = vmatpush1.msra.mxu0 0.0
        %5818 = vmatprep.subr.mxu0 0.0
        %5819 = vmatpush1.msra.mxu0 0.0
        %5820 = vmatprep.subr.mxu0 0.0
        %5821 = vmatpush1.msra.mxu0 0.0
        %5822 = vmatprep.mubr.f32.mxu0 0.0
        %5823 = vmatmul.mubr.f32.gmra.mrb[0].mxu0 %v5756
        %v5824 = vpop.f32.mrb[0].mxu0
        %v5825 = vadd.f32 %v5753, %v5824
        %v5826 = vpop.f32.mrb[0].mxu0
        %5827 = vdwg.mxu0
        %vm5828 = vcmask 60416
        %5829 = vst.msk [vmem:[%s513] sm:$0xf] %vm5828, %v5825
        %s5830 = sand.u32 %s379, 1
        %s5831 = scalar_lea.sflag [#allocation4], %s5830
        %s5832 = sand.u32 %s379, 1
        %s5833 = smul.addr %s5832, 4
        %s5834 = scalar_lea.vmem [#allocation3], %s5833
        // Predicated region
        $region85: #{tpu_custom_call.1} parent=83 // pred_check
          %p5835 = pneg %p389
        $region86: #{tpu_custom_call.1} parent=83 // pred_check_branch
          %5837 = sbr.rel (%p5835) target = $region88
        $region87: #{tpu_custom_call.1} parent=83 // pred_region
          %s5839 = ssub.s32 64, 64
          %5840 = vsyncadd %s5831, %s5839
          %s5841 = smul.addr %s30, 64
          %s5842 = scalar_lea.hbm %s16, %s5841
          %s5844 = sshll.u32 %s5834, 4
          %s5845 = int_to_ptr.vmem [resolvable:$true] %s5844
          %5847 = dma.vmem_to_hbm [thread:$0]  %s5845, 64, %s5842, %s5831
        $region88: #{tpu_custom_call.1} parent=83 // pred_fallthru
          _
      $region84: #{tpu_custom_call.1} parent=5 // pred_fallthru
        _
      %p5848 = scmp.le.s32.totalorder 2, %s25
      // Predicated region
      $region89: #{tpu_custom_call.1} parent=5 // pred_check
        %p5849 = pneg %p5848
      $region90: #{tpu_custom_call.1} parent=5 // pred_check_branch
        %5851 = sbr.rel (%p5849) target = $region92
      $region91: #{tpu_custom_call.1} parent=5 // pred_region
        %s5852 = ssub.s32 %s25, 2
        // Predicated region
        $region93: #{tpu_custom_call.1} parent=91 // pred_check
          %p5853 = pneg %p395
        $region94: #{tpu_custom_call.1} parent=91 // pred_check_branch
          %5855 = sbr.rel (%p5853) target = $region96
        $region95: #{tpu_custom_call.1} parent=91 // pred_region
          %s5856 = sand.u32 %s380, 1
          %s5857 = scalar_lea.sflag [#allocation4], %s5856
          %s5858 = sand.u32 %s380, 1
          %s5859 = smul.addr %s5858, 4
          %s5860 = scalar_lea.vmem [#allocation3], %s5859
          %5861 = dma.done %s5857, 64
        $region96: #{tpu_custom_call.1} parent=91 // pred_fallthru
          _
      $region92: #{tpu_custom_call.1} parent=5 // pred_fallthru
        _
    $region6: #{tpu_custom_call.1} parent=1 // loop_footer
      %s29 = sadd.s32 1, %s25
    $region7: #{tpu_custom_call.1} parent=1 // loop_footer_branch
      %24 = sbr.rel target = $region3
    $region8: #{tpu_custom_call.1} parent=1 // loop_exit
      _
    %5862 = vsyncpa [#allocation4], 1
    %s5863 = scalar_lea.sflag [#allocation4], 1
    %5864 = vsyncpa %s5863, 1

</llo_original>
